<compile_context>
chip_gen: v7x
topology: tpu7x:2x2x1
jax: 0.10.0
libtpu: 0.0.40
codegen_flags: <defaults>
</compile_context>

<pallas_src>
import functools
import math

import numpy as np
import jax
import jax.numpy as jnp
from jax.experimental import pallas as pl
from jax.experimental.pallas import tpu as pltpu

_INV_SQRT2 = 0.7071067811865476


def _round_up(x, m):
    return (x + m - 1) // m * m


# ---------------------------------------------------------------------------
# In-kernel math helpers
# ---------------------------------------------------------------------------
def _gelu_exact(x):
    # exact (erf) GELU, erf via Abramowitz & Stegun 7.1.26 rational polynomial.
    # divide -> EUP approx reciprocal, exp -> EUP; everything else VPU mul/add.
    u = x * _INV_SQRT2
    au = jnp.abs(u)
    t = pl.reciprocal(1.0 + 0.3275911 * au, approx=True)
    poly = ((((1.061405429 * t - 1.453152027) * t + 1.421413741) * t
             - 0.284496736) * t + 0.254829592) * t
    erf_abs = 1.0 - poly * jnp.exp(-au * au)
    erf_u = jnp.where(u >= 0.0, erf_abs, -erf_abs)
    return 0.5 * x * (1.0 + erf_u)


# ---------------------------------------------------------------------------
# Pallas kernels
# ---------------------------------------------------------------------------
def _conv_gelu_pool_kernel(p_ref, w_ref, b_ref, o_ref):
    # p_ref: [1, Kp, 4*M]  bf16  transposed im2col patches, columns ordered
    #                            (pool_pos q, image-in-block, out_row, out_col)
    # w_ref: [Cout, Kp]    bf16  conv weight, rows = out channel
    # b_ref: [Cout, 1]     f32   bias (broadcast along lanes)
    # o_ref: [1, Cout, M]  bf16  pooled output block (lane-dense, M % 128 == 0)
    m = o_ref.shape[2]
    # single fused MXU call for all 4 pool positions, f32 accumulation
    y = jnp.dot(w_ref[...], p_ref[0], preferred_element_type=jnp.float32)
    y = _gelu_exact(y + b_ref[...])                      # lane-dense GELU
    # 2x2 max-pool: max over the 4 vreg-aligned lane chunks (GELU already applied)
    y = jnp.maximum(jnp.maximum(y[:, 0 * m:1 * m], y[:, 1 * m:2 * m]),
                    jnp.maximum(y[:, 2 * m:3 * m], y[:, 3 * m:4 * m]))
    o_ref[0] = y.astype(o_ref.dtype)


def _fc_softmax_kernel(x_ref, w_ref, b_ref, o_ref):
    # x_ref: [TB, F] bf16, w_ref: [F, 128] bf16 (zero-padded classes),
    # b_ref: [1, 128] f32 (-1e30 on padded classes), o_ref: [TB, 128] f32
    logits = jnp.dot(x_ref[...], w_ref[...],
                     preferred_element_type=jnp.float32) + b_ref[...]
    mx = jnp.max(logits, axis=-1, keepdims=True)
    e = jnp.exp(logits - mx)                 # padded classes -> exp(-huge) = 0
    s = jnp.sum(e, axis=-1, keepdims=True)
    o_ref[...] = e * pl.reciprocal(s, approx=True)


# ---------------------------------------------------------------------------
# Wrappers (XLA glue: patch extraction, layout, pallas_call plumbing)
# ---------------------------------------------------------------------------
def _pool_patches_T(x_nchw, k, pad, kp, img_pb):
    """Transposed im2col grouped by 2x2-pool position.

    Returns [G, Kp, 4*img_pb*Ho*Wo] bf16 with row = (cin, kh, kw) zero-padded
    to Kp and columns ordered (pool_pos, image-in-block, out_row, out_col).
    """
    b, c, h, w = x_nchw.shape
    ho, wo = h // 2, w // 2
    g = b // img_pb
    f = c * k * k
    xp = jnp.pad(x_nchw, ((0, 0), (0, 0), (pad, pad), (pad, pad)))
    per_q = []
    for di in range(2):
        for dj in range(2):
            feats = []
            for kh in range(k):
                for kw in range(k):
                    feats.append(xp[:, :, di + kh: di + kh + 2 * ho: 2,
                                          dj + kw: dj + kw + 2 * wo: 2])
            pq = jnp.stack(feats, axis=2)                # [B, C, k*k, Ho, Wo]
            per_q.append(pq.reshape(b, f, ho, wo))
    p = jnp.stack(per_q, axis=0)                         # [4, B, F, Ho, Wo]
    p = p.reshape(4, g, img_pb, f, ho, wo)
    p = jnp.transpose(p, (1, 3, 0, 2, 4, 5))             # [G, F, 4, imgpb, Ho, Wo]
    p = p.reshape(g, f, 4 * img_pb * ho * wo)
    if kp > f:
        p = jnp.pad(p, ((0, 0), (0, kp - f), (0, 0)))
    return p.astype(jnp.bfloat16)


def conv_gelu_pool(x_nchw, w_t, b_col, k=5, pad=2):
    """conv5x5(SAME) -> GELU -> maxpool2, NCHW in / NCHW out (bf16)."""
    b, cin, h, w = x_nchw.shape
    cout, kp = w_t.shape
    ho, wo = h // 2, w // 2
    assert kp >= cin * k * k and kp % 128 == 0

    # images per grid step: keep the pooled-pixel lane block a multiple of 128
    img_pb = max(1, 128 // (ho * wo))
    while b % img_pb:
        img_pb -= 1
    g = b // img_pb
    m_blk = img_pb * ho * wo

    patches = _pool_patches_T(x_nchw, k, pad, kp, img_pb)   # [G, Kp, 4*m_blk]

    out = pl.pallas_call(
        _conv_gelu_pool_kernel,
        out_shape=jax.ShapeDtypeStruct((g, cout, m_blk), jnp.bfloat16),
        grid=(g,),
        in_specs=[
            pl.BlockSpec((1, kp, 4 * m_blk), lambda i: (i, 0, 0)),
            pl.BlockSpec((cout, kp), lambda i: (0, 0)),
            pl.BlockSpec((cout, 1), lambda i: (0, 0)),
        ],
        out_specs=pl.BlockSpec((1, cout, m_blk), lambda i: (i, 0, 0)),
        compiler_params=pltpu.CompilerParams(
            dimension_semantics=("parallel",)),
    )(patches, w_t, b_col)

    # [G, Cout, img_pb*Ho*Wo] -> NCHW [B, Cout, Ho, Wo]
    out = out.reshape(g, cout, img_pb, ho, wo)
    out = jnp.transpose(out, (0, 2, 1, 3, 4)).reshape(b, cout, ho, wo)
    return out


def fc_softmax_padded(x_flat, w_p, b_p):
    """x_flat [B, F] -> softmax probs over padded class dim [B, NCP] f32."""
    b, f = x_flat.shape
    ncp = w_p.shape[1]
    x16 = x_flat if x_flat.dtype == jnp.bfloat16 else x_flat.astype(jnp.bfloat16)

    tb = b
    for cand in (512, 256, 128, 64, 32, 16, 8):
        if b % cand == 0:
            tb = cand
            break

    return pl.pallas_call(
        _fc_softmax_kernel,
        out_shape=jax.ShapeDtypeStruct((b, ncp), jnp.float32),
        grid=(b // tb,),
        in_specs=[
            pl.BlockSpec((tb, f), lambda i: (i, 0)),
            pl.BlockSpec((f, ncp), lambda i: (0, 0)),
            pl.BlockSpec((1, ncp), lambda i: (0, 0)),
        ],
        out_specs=pl.BlockSpec((tb, ncp), lambda i: (i, 0)),
        compiler_params=pltpu.CompilerParams(
            dimension_semantics=("parallel",)),
    )(x16, w_p, b_p)


def prepare_params(params):
    """One-time (outside-jit) layout prep: reshape/transpose/pad/bf16-cast."""
    def prep_conv(w_oihw, bias):
        cout, cin, kh, kw = w_oihw.shape
        f = cin * kh * kw
        kp = _round_up(f, 128)
        w_t = w_oihw.reshape(cout, f).astype(jnp.bfloat16)
        w_t = jnp.pad(w_t, ((0, 0), (0, kp - f)))
        return w_t, bias.reshape(cout, 1).astype(jnp.float32)

    w1t, b1c = prep_conv(params["w1"], params["b1"])
    w2t, b2c = prep_conv(params["w2"], params["b2"])

    w_fc, b_fc = params["w_fc"], params["b_fc"]
    nc, f = w_fc.shape
    ncp = _round_up(max(nc, 128), 128)
    wfc_p = jnp.zeros((f, ncp), jnp.bfloat16).at[:, :nc].set(
        w_fc.T.astype(jnp.bfloat16))
    bfc_p = jnp.full((1, ncp), -1e30, jnp.float32).at[0, :nc].set(
        b_fc.astype(jnp.float32))
    return {"w1t": w1t, "b1c": b1c, "w2t": w2t, "b2c": b2c,
            "wfc_p": wfc_p, "bfc_p": bfc_p}


def cnn_forward(x_nchw, prepared, num_classes):
    x = conv_gelu_pool(x_nchw, prepared["w1t"], prepared["b1c"])   # [B, 8, 16, 16] bf16
    x = conv_gelu_pool(x, prepared["w2t"], prepared["b2c"])        # [B, 64, 8, 8]  bf16
    x = x.reshape(x.shape[0], -1)                                  # NCHW flatten = torch .view
    probs = fc_softmax_padded(x, prepared["wfc_p"], prepared["bfc_p"])
    return probs[:, :num_classes]


# ---------------------------------------------------------------------------
# Pure-JAX reference (f32, HIGHEST) for correctness check
# ---------------------------------------------------------------------------
def cnn_reference(x_nchw, params):
    def conv_block(x, w, b):
        y = jax.lax.conv_general_dilated(
            x, w, (1, 1), "SAME",
            dimension_numbers=("NCHW", "OIHW", "NCHW"),
            precision=jax.lax.Precision.HIGHEST)
        y = y + b.reshape(1, -1, 1, 1)
        y = 0.5 * y * (1.0 + jax.lax.erf(y * _INV_SQRT2))
        return jax.lax.reduce_window(y, -jnp.inf, jax.lax.max,
                                     (1, 1, 2, 2), (1, 1, 2, 2), "VALID")

    x = conv_block(x_nchw, params["w1"], params["b1"])
    x = conv_block(x, params["w2"], params["b2"])
    x = x.reshape(x.shape[0], -1)
    logits = jnp.dot(x, params["w_fc"].T,
                     precision=jax.lax.Precision.HIGHEST) + params["b_fc"]
    return jax.nn.softmax(logits, axis=1)


if __name__ == "__main__":
    num_classes = 10
    key = jax.random.PRNGKey(0)
    kx, k1, k2, k3, k4, k5, k6 = jax.random.split(key, 7)

    # 32x32 input so flattened features = 64*8*8 = 4096 (matches nn.Linear).
    x = jax.random.normal(kx, (2, 3, 32, 32), jnp.float32)

    # PyTorch-layout synthetic parameters (conv: OIHW, fc: [num_classes, F]).
    params = {
        "w1": jax.random.normal(k1, (8, 3, 5, 5), jnp.float32) / math.sqrt(75.0),
        "b1": 0.01 * jax.random.normal(k2, (8,), jnp.float32),
        "w2": jax.random.normal(k3, (64, 8, 5, 5), jnp.float32) / math.sqrt(200.0),
        "b2": 0.01 * jax.random.normal(k4, (64,), jnp.float32),
        "w_fc": jax.random.normal(k5, (num_classes, 4096), jnp.float32) / math.sqrt(4096.0),
        "b_fc": 0.01 * jax.random.normal(k6, (num_classes,), jnp.float32),
    }

    prepared = prepare_params(params)           # one-time layout prep, outside jit
    fwd = jax.jit(functools.partial(cnn_forward, num_classes=num_classes))

    out = jax.block_until_ready(fwd(x, prepared))
    ref = jax.block_until_ready(jax.jit(cnn_reference)(x, params))

    assert out.shape == (2, num_classes)
    np.testing.assert_allclose(np.asarray(out), np.asarray(ref), atol=2e-3, rtol=1e-2)
    print("KERNEL_OK")
</pallas_src>

<mosaic_0001>
module attributes {stable_mosaic.version = 11 : i64} {
  func.func @_conv_gelu_pool_kernel(%arg0: i32, %arg1: memref<1x128x1024xbf16, #tpu.memory_space<vmem>>, %arg2: memref<8x128xbf16, #tpu.memory_space<vmem>>, %arg3: memref<8x1xf32, #tpu.memory_space<vmem>>, %arg4: memref<1x8x256xbf16, #tpu.memory_space<vmem>>) attributes {dimension_semantics = [#tpu.dimension_semantics<parallel>], iteration_bounds = array<i64: 2>, scalar_prefetch = 0 : i64, scratch_operands = 0 : i64, tpu.core_type = #tpu.core_type<tc>, window_params = [{transform_indices = @transform_0, window_bounds = array<i64: 1, 128, 1024>}, {pipeline_mode = #tpu.pipeline_mode<synchronous>, transform_indices = @transform_1, window_bounds = array<i64: 8, 128>}, {pipeline_mode = #tpu.pipeline_mode<synchronous>, transform_indices = @transform_2, window_bounds = array<i64: 8, 1>}, {transform_indices = @transform_3, window_bounds = array<i64: 1, 8, 256>}]} {
    %c0 = arith.constant 0 : index
    %c0_0 = arith.constant 0 : index
    %0 = vector.load %arg2[%c0, %c0_0] : memref<8x128xbf16, #tpu.memory_space<vmem>>, vector<8x128xbf16>
    %c0_1 = arith.constant 0 : index
    %c0_2 = arith.constant 0 : index
    %c0_3 = arith.constant 0 : index
    %1 = vector.load %arg1[%c0_1, %c0_2, %c0_3] : memref<1x128x1024xbf16, #tpu.memory_space<vmem>>, vector<1x128x1024xbf16>
    %2 = vector.shape_cast %1 : vector<1x128x1024xbf16> to vector<128x1024xbf16>
    %cst = arith.constant dense<0.000000e+00> : vector<8x1024xf32>
    %3 = tpu.matmul %0, %2, %cst {dimension_numbers = #tpu.dot_dimension_numbers<[1], [0], [0], [1], [0, 0, 1, 1], [], []>} : vector<8x128xbf16>, vector<128x1024xbf16>, vector<8x1024xf32> -> vector<8x1024xf32>
    %c0_4 = arith.constant 0 : index
    %c0_5 = arith.constant 0 : index
    %4 = vector.load %arg3[%c0_4, %c0_5] : memref<8x1xf32, #tpu.memory_space<vmem>>, vector<8x1xf32>
    %5 = vector.broadcast %4 : vector<8x1xf32> to vector<8x1024xf32>
    %6 = arith.addf %3, %5 : vector<8x1024xf32>
    %cst_6 = arith.constant 0.707106769 : f32
    %7 = vector.broadcast %cst_6 : f32 to vector<8x1024xf32>
    %8 = arith.mulf %6, %7 : vector<8x1024xf32>
    %9 = math.absf %8 : vector<8x1024xf32>
    %cst_7 = arith.constant 0.327591091 : f32
    %10 = vector.broadcast %cst_7 : f32 to vector<8x1024xf32>
    %11 = arith.mulf %10, %9 : vector<8x1024xf32>
    %cst_8 = arith.constant 1.000000e+00 : f32
    %12 = vector.broadcast %cst_8 : f32 to vector<8x1024xf32>
    %13 = arith.addf %12, %11 : vector<8x1024xf32>
    %14 = tpu.reciprocal %13 {approx = true} : vector<8x1024xf32> -> vector<8x1024xf32>
    %cst_9 = arith.constant 1.06140542 : f32
    %15 = vector.broadcast %cst_9 : f32 to vector<8x1024xf32>
    %16 = arith.mulf %15, %14 : vector<8x1024xf32>
    %cst_10 = arith.constant 1.45315206 : f32
    %17 = vector.broadcast %cst_10 : f32 to vector<8x1024xf32>
    %18 = arith.subf %16, %17 : vector<8x1024xf32>
    %19 = arith.mulf %18, %14 : vector<8x1024xf32>
    %cst_11 = arith.constant 1.42141378 : f32
    %20 = vector.broadcast %cst_11 : f32 to vector<8x1024xf32>
    %21 = arith.addf %19, %20 : vector<8x1024xf32>
    %22 = arith.mulf %21, %14 : vector<8x1024xf32>
    %cst_12 = arith.constant 0.284496725 : f32
    %23 = vector.broadcast %cst_12 : f32 to vector<8x1024xf32>
    %24 = arith.subf %22, %23 : vector<8x1024xf32>
    %25 = arith.mulf %24, %14 : vector<8x1024xf32>
    %cst_13 = arith.constant 0.254829586 : f32
    %26 = vector.broadcast %cst_13 : f32 to vector<8x1024xf32>
    %27 = arith.addf %25, %26 : vector<8x1024xf32>
    %28 = arith.mulf %27, %14 : vector<8x1024xf32>
    %cst_14 = arith.constant 0.000000e+00 : f32
    %29 = vector.broadcast %cst_14 : f32 to vector<8x1024xf32>
    %30 = arith.subf %29, %9 : vector<8x1024xf32>
    %31 = arith.mulf %30, %9 : vector<8x1024xf32>
    %32 = math.exp %31 : vector<8x1024xf32>
    %33 = arith.mulf %28, %32 : vector<8x1024xf32>
    %cst_15 = arith.constant 1.000000e+00 : f32
    %34 = vector.broadcast %cst_15 : f32 to vector<8x1024xf32>
    %35 = arith.subf %34, %33 : vector<8x1024xf32>
    %cst_16 = arith.constant 0.000000e+00 : f32
    %36 = vector.broadcast %cst_16 : f32 to vector<8x1024xf32>
    %37 = arith.cmpf oge, %8, %36 : vector<8x1024xf32>
    %cst_17 = arith.constant 0.000000e+00 : f32
    %38 = vector.broadcast %cst_17 : f32 to vector<8x1024xf32>
    %39 = arith.subf %38, %35 : vector<8x1024xf32>
    %40 = arith.select %37, %35, %39 : vector<8x1024xi1>, vector<8x1024xf32>
    %cst_18 = arith.constant 5.000000e-01 : f32
    %41 = vector.broadcast %cst_18 : f32 to vector<8x1024xf32>
    %42 = arith.mulf %41, %6 : vector<8x1024xf32>
    %cst_19 = arith.constant 1.000000e+00 : f32
    %43 = vector.broadcast %cst_19 : f32 to vector<8x1024xf32>
    %44 = arith.addf %43, %40 : vector<8x1024xf32>
    %45 = arith.mulf %42, %44 : vector<8x1024xf32>
    %46 = vector.extract_strided_slice %45 {offsets = [0, 0], sizes = [8, 256], strides = [1, 1]} : vector<8x1024xf32> to vector<8x256xf32>
    %47 = vector.extract_strided_slice %45 {offsets = [0, 256], sizes = [8, 256], strides = [1, 1]} : vector<8x1024xf32> to vector<8x256xf32>
    %48 = arith.maximumf %46, %47 : vector<8x256xf32>
    %49 = vector.extract_strided_slice %45 {offsets = [0, 512], sizes = [8, 256], strides = [1, 1]} : vector<8x1024xf32> to vector<8x256xf32>
    %50 = vector.extract_strided_slice %45 {offsets = [0, 768], sizes = [8, 256], strides = [1, 1]} : vector<8x1024xf32> to vector<8x256xf32>
    %51 = arith.maximumf %49, %50 : vector<8x256xf32>
    %52 = arith.maximumf %48, %51 : vector<8x256xf32>
    %53 = arith.truncf %52 : vector<8x256xf32> to vector<8x256xbf16>
    %c0_20 = arith.constant 0 : index
    %c0_21 = arith.constant 0 : index
    %c0_22 = arith.constant 0 : index
    %54 = vector.load %arg4[%c0_20, %c0_21, %c0_22] : memref<1x8x256xbf16, #tpu.memory_space<vmem>>, vector<1x8x256xbf16>
    %55 = vector.shape_cast %54 : vector<1x8x256xbf16> to vector<8x256xbf16>
    %56 = vector.shape_cast %53 : vector<8x256xbf16> to vector<1x8x256xbf16>
    tpu.vector_store %arg4[%c0_20, %c0_21, %c0_22], %56 {strides = array<i32>} : memref<1x8x256xbf16, #tpu.memory_space<vmem>>, vector<1x8x256xbf16>,
    return
  }
  func.func @transform_0(%arg0: i32) -> (i32, i32, i32) {
    %c0_i32 = arith.constant 0 : i32
    %c0_i32_0 = arith.constant 0 : i32
    %c0_i32_1 = arith.constant 0 : i32
    return %arg0, %c0_i32, %c0_i32_0 : i32, i32, i32
  }
  func.func @transform_1(%arg0: i32) -> (i32, i32) {
    %c0_i32 = arith.constant 0 : i32
    %c0_i32_0 = arith.constant 0 : i32
    %c0_i32_1 = arith.constant 0 : i32
    return %c0_i32, %c0_i32_0 : i32, i32
  }
  func.func @transform_2(%arg0: i32) -> (i32, i32) {
    %c0_i32 = arith.constant 0 : i32
    %c0_i32_0 = arith.constant 0 : i32
    %c0_i32_1 = arith.constant 0 : i32
    return %c0_i32, %c0_i32_0 : i32, i32
  }
  func.func @transform_3(%arg0: i32) -> (i32, i32, i32) {
    %c0_i32 = arith.constant 0 : i32
    %c0_i32_0 = arith.constant 0 : i32
    %c0_i32_1 = arith.constant 0 : i32
    return %arg0, %c0_i32, %c0_i32_0 : i32, i32, i32
  }
}

module attributes {stable_mosaic.version = 11 : i64} {
  func.func @_conv_gelu_pool_kernel(%arg0: i32, %arg1: memref<1x256x512xbf16, #tpu.memory_space<vmem>>, %arg2: memref<64x256xbf16, #tpu.memory_space<vmem>>, %arg3: memref<64x1xf32, #tpu.memory_space<vmem>>, %arg4: memref<1x64x128xbf16, #tpu.memory_space<vmem>>) attributes {dimension_semantics = [#tpu.dimension_semantics<parallel>], iteration_bounds = array<i64: 1>, scalar_prefetch = 0 : i64, scratch_operands = 0 : i64, tpu.core_type = #tpu.core_type<tc>, window_params = [{transform_indices = @transform_0, window_bounds = array<i64: 1, 256, 512>}, {pipeline_mode = #tpu.pipeline_mode<synchronous>, transform_indices = @transform_1, window_bounds = array<i64: 64, 256>}, {pipeline_mode = #tpu.pipeline_mode<synchronous>, transform_indices = @transform_2, window_bounds = array<i64: 64, 1>}, {transform_indices = @transform_3, window_bounds = array<i64: 1, 64, 128>}]} {
    %c0 = arith.constant 0 : index
    %c0_0 = arith.constant 0 : index
    %0 = vector.load %arg2[%c0, %c0_0] : memref<64x256xbf16, #tpu.memory_space<vmem>>, vector<64x256xbf16>
    %c0_1 = arith.constant 0 : index
    %c0_2 = arith.constant 0 : index
    %c0_3 = arith.constant 0 : index
    %1 = vector.load %arg1[%c0_1, %c0_2, %c0_3] : memref<1x256x512xbf16, #tpu.memory_space<vmem>>, vector<1x256x512xbf16>
    %2 = vector.shape_cast %1 : vector<1x256x512xbf16> to vector<256x512xbf16>
    %cst = arith.constant dense<0.000000e+00> : vector<64x512xf32>
    %3 = tpu.matmul %0, %2, %cst {dimension_numbers = #tpu.dot_dimension_numbers<[1], [0], [0], [1], [0, 0, 1, 1], [], []>} : vector<64x256xbf16>, vector<256x512xbf16>, vector<64x512xf32> -> vector<64x512xf32>
    %c0_4 = arith.constant 0 : index
    %c0_5 = arith.constant 0 : index
    %4 = vector.load %arg3[%c0_4, %c0_5] : memref<64x1xf32, #tpu.memory_space<vmem>>, vector<64x1xf32>
    %5 = vector.broadcast %4 : vector<64x1xf32> to vector<64x512xf32>
    %6 = arith.addf %3, %5 : vector<64x512xf32>
    %cst_6 = arith.constant 0.707106769 : f32
    %7 = vector.broadcast %cst_6 : f32 to vector<64x512xf32>
    %8 = arith.mulf %6, %7 : vector<64x512xf32>
    %9 = math.absf %8 : vector<64x512xf32>
    %cst_7 = arith.constant 0.327591091 : f32
    %10 = vector.broadcast %cst_7 : f32 to vector<64x512xf32>
    %11 = arith.mulf %10, %9 : vector<64x512xf32>
    %cst_8 = arith.constant 1.000000e+00 : f32
    %12 = vector.broadcast %cst_8 : f32 to vector<64x512xf32>
    %13 = arith.addf %12, %11 : vector<64x512xf32>
    %14 = tpu.reciprocal %13 {approx = true} : vector<64x512xf32> -> vector<64x512xf32>
    %cst_9 = arith.constant 1.06140542 : f32
    %15 = vector.broadcast %cst_9 : f32 to vector<64x512xf32>
    %16 = arith.mulf %15, %14 : vector<64x512xf32>
    %cst_10 = arith.constant 1.45315206 : f32
    %17 = vector.broadcast %cst_10 : f32 to vector<64x512xf32>
    %18 = arith.subf %16, %17 : vector<64x512xf32>
    %19 = arith.mulf %18, %14 : vector<64x512xf32>
    %cst_11 = arith.constant 1.42141378 : f32
    %20 = vector.broadcast %cst_11 : f32 to vector<64x512xf32>
    %21 = arith.addf %19, %20 : vector<64x512xf32>
    %22 = arith.mulf %21, %14 : vector<64x512xf32>
    %cst_12 = arith.constant 0.284496725 : f32
    %23 = vector.broadcast %cst_12 : f32 to vector<64x512xf32>
    %24 = arith.subf %22, %23 : vector<64x512xf32>
    %25 = arith.mulf %24, %14 : vector<64x512xf32>
    %cst_13 = arith.constant 0.254829586 : f32
    %26 = vector.broadcast %cst_13 : f32 to vector<64x512xf32>
    %27 = arith.addf %25, %26 : vector<64x512xf32>
    %28 = arith.mulf %27, %14 : vector<64x512xf32>
    %cst_14 = arith.constant 0.000000e+00 : f32
    %29 = vector.broadcast %cst_14 : f32 to vector<64x512xf32>
    %30 = arith.subf %29, %9 : vector<64x512xf32>
    %31 = arith.mulf %30, %9 : vector<64x512xf32>
    %32 = math.exp %31 : vector<64x512xf32>
    %33 = arith.mulf %28, %32 : vector<64x512xf32>
    %cst_15 = arith.constant 1.000000e+00 : f32
    %34 = vector.broadcast %cst_15 : f32 to vector<64x512xf32>
    %35 = arith.subf %34, %33 : vector<64x512xf32>
    %cst_16 = arith.constant 0.000000e+00 : f32
    %36 = vector.broadcast %cst_16 : f32 to vector<64x512xf32>
    %37 = arith.cmpf oge, %8, %36 : vector<64x512xf32>
    %cst_17 = arith.constant 0.000000e+00 : f32
    %38 = vector.broadcast %cst_17 : f32 to vector<64x512xf32>
    %39 = arith.subf %38, %35 : vector<64x512xf32>
    %40 = arith.select %37, %35, %39 : vector<64x512xi1>, vector<64x512xf32>
    %cst_18 = arith.constant 5.000000e-01 : f32
    %41 = vector.broadcast %cst_18 : f32 to vector<64x512xf32>
    %42 = arith.mulf %41, %6 : vector<64x512xf32>
    %cst_19 = arith.constant 1.000000e+00 : f32
    %43 = vector.broadcast %cst_19 : f32 to vector<64x512xf32>
    %44 = arith.addf %43, %40 : vector<64x512xf32>
    %45 = arith.mulf %42, %44 : vector<64x512xf32>
    %46 = vector.extract_strided_slice %45 {offsets = [0, 0], sizes = [64, 128], strides = [1, 1]} : vector<64x512xf32> to vector<64x128xf32>
    %47 = vector.extract_strided_slice %45 {offsets = [0, 128], sizes = [64, 128], strides = [1, 1]} : vector<64x512xf32> to vector<64x128xf32>
    %48 = arith.maximumf %46, %47 : vector<64x128xf32>
    %49 = vector.extract_strided_slice %45 {offsets = [0, 256], sizes = [64, 128], strides = [1, 1]} : vector<64x512xf32> to vector<64x128xf32>
    %50 = vector.extract_strided_slice %45 {offsets = [0, 384], sizes = [64, 128], strides = [1, 1]} : vector<64x512xf32> to vector<64x128xf32>
    %51 = arith.maximumf %49, %50 : vector<64x128xf32>
    %52 = arith.maximumf %48, %51 : vector<64x128xf32>
    %53 = arith.truncf %52 : vector<64x128xf32> to vector<64x128xbf16>
    %c0_20 = arith.constant 0 : index
    %c0_21 = arith.constant 0 : index
    %c0_22 = arith.constant 0 : index
    %54 = vector.load %arg4[%c0_20, %c0_21, %c0_22] : memref<1x64x128xbf16, #tpu.memory_space<vmem>>, vector<1x64x128xbf16>
    %55 = vector.shape_cast %54 : vector<1x64x128xbf16> to vector<64x128xbf16>
    %56 = vector.shape_cast %53 : vector<64x128xbf16> to vector<1x64x128xbf16>
    tpu.vector_store %arg4[%c0_20, %c0_21, %c0_22], %56 {strides = array<i32>} : memref<1x64x128xbf16, #tpu.memory_space<vmem>>, vector<1x64x128xbf16>,
    return
  }
  func.func @transform_0(%arg0: i32) -> (i32, i32, i32) {
    %c0_i32 = arith.constant 0 : i32
    %c0_i32_0 = arith.constant 0 : i32
    %c0_i32_1 = arith.constant 0 : i32
    return %arg0, %c0_i32, %c0_i32_0 : i32, i32, i32
  }
  func.func @transform_1(%arg0: i32) -> (i32, i32) {
    %c0_i32 = arith.constant 0 : i32
    %c0_i32_0 = arith.constant 0 : i32
    %c0_i32_1 = arith.constant 0 : i32
    return %c0_i32, %c0_i32_0 : i32, i32
  }
  func.func @transform_2(%arg0: i32) -> (i32, i32) {
    %c0_i32 = arith.constant 0 : i32
    %c0_i32_0 = arith.constant 0 : i32
    %c0_i32_1 = arith.constant 0 : i32
    return %c0_i32, %c0_i32_0 : i32, i32
  }
  func.func @transform_3(%arg0: i32) -> (i32, i32, i32) {
    %c0_i32 = arith.constant 0 : i32
    %c0_i32_0 = arith.constant 0 : i32
    %c0_i32_1 = arith.constant 0 : i32
    return %arg0, %c0_i32, %c0_i32_0 : i32, i32, i32
  }
}

module attributes {stable_mosaic.version = 11 : i64} {
  func.func @_fc_softmax_kernel(%arg0: i32, %arg1: memref<2x4096xbf16, #tpu.memory_space<vmem>>, %arg2: memref<4096x128xbf16, #tpu.memory_space<vmem>>, %arg3: memref<1x128xf32, #tpu.memory_space<vmem>>, %arg4: memref<2x128xf32, #tpu.memory_space<vmem>>) attributes {dimension_semantics = [#tpu.dimension_semantics<parallel>], iteration_bounds = array<i64: 1>, scalar_prefetch = 0 : i64, scratch_operands = 0 : i64, tpu.core_type = #tpu.core_type<tc>, window_params = [{transform_indices = @transform_0, window_bounds = array<i64: 2, 4096>}, {pipeline_mode = #tpu.pipeline_mode<synchronous>, transform_indices = @transform_1, window_bounds = array<i64: 4096, 128>}, {pipeline_mode = #tpu.pipeline_mode<synchronous>, transform_indices = @transform_2, window_bounds = array<i64: 1, 128>}, {transform_indices = @transform_3, window_bounds = array<i64: 2, 128>}]} {
    %c0 = arith.constant 0 : index
    %c0_0 = arith.constant 0 : index
    %0 = vector.load %arg1[%c0, %c0_0] : memref<2x4096xbf16, #tpu.memory_space<vmem>>, vector<2x4096xbf16>
    %c0_1 = arith.constant 0 : index
    %c0_2 = arith.constant 0 : index
    %1 = vector.load %arg2[%c0_1, %c0_2] : memref<4096x128xbf16, #tpu.memory_space<vmem>>, vector<4096x128xbf16>
    %cst = arith.constant dense<0.000000e+00> : vector<2x128xf32>
    %2 = tpu.matmul %0, %1, %cst {dimension_numbers = #tpu.dot_dimension_numbers<[1], [0], [0], [1], [0, 0, 1, 1], [], []>} : vector<2x4096xbf16>, vector<4096x128xbf16>, vector<2x128xf32> -> vector<2x128xf32>
    %c0_3 = arith.constant 0 : index
    %c0_4 = arith.constant 0 : index
    %3 = vector.load %arg3[%c0_3, %c0_4] : memref<1x128xf32, #tpu.memory_space<vmem>>, vector<1x128xf32>
    %4 = vector.broadcast %3 : vector<1x128xf32> to vector<2x128xf32>
    %5 = arith.addf %2, %4 : vector<2x128xf32>
    %cst_5 = arith.constant dense<0xFF800000> : vector<2xf32>
    %6 = vector.multi_reduction <maximumf>, %5, %cst_5 [1] : vector<2x128xf32> to vector<2xf32>
    %7 = vector.shape_cast %6 : vector<2xf32> to vector<2x1xf32>
    %8 = vector.broadcast %7 : vector<2x1xf32> to vector<2x128xf32>
    %9 = arith.subf %5, %8 : vector<2x128xf32>
    %10 = math.exp %9 : vector<2x128xf32>
    %cst_6 = arith.constant dense<0.000000e+00> : vector<2xf32>
    %11 = vector.multi_reduction <add>, %10, %cst_6 [1] : vector<2x128xf32> to vector<2xf32>
    %12 = vector.shape_cast %11 : vector<2xf32> to vector<2x1xf32>
    %13 = tpu.reciprocal %12 {approx = true} : vector<2x1xf32> -> vector<2x1xf32>
    %14 = vector.broadcast %13 : vector<2x1xf32> to vector<2x128xf32>
    %15 = arith.mulf %10, %14 : vector<2x128xf32>
    %c0_7 = arith.constant 0 : index
    %c0_8 = arith.constant 0 : index
    %16 = vector.load %arg4[%c0_7, %c0_8] : memref<2x128xf32, #tpu.memory_space<vmem>>, vector<2x128xf32>
    tpu.vector_store %arg4[%c0_7, %c0_8], %15 {strides = array<i32>} : memref<2x128xf32, #tpu.memory_space<vmem>>, vector<2x128xf32>,
    return
  }
  func.func @transform_0(%arg0: i32) -> (i32, i32) {
    %c0_i32 = arith.constant 0 : i32
    %c0_i32_0 = arith.constant 0 : i32
    return %arg0, %c0_i32 : i32, i32
  }
  func.func @transform_1(%arg0: i32) -> (i32, i32) {
    %c0_i32 = arith.constant 0 : i32
    %c0_i32_0 = arith.constant 0 : i32
    %c0_i32_1 = arith.constant 0 : i32
    return %c0_i32, %c0_i32_0 : i32, i32
  }
  func.func @transform_2(%arg0: i32) -> (i32, i32) {
    %c0_i32 = arith.constant 0 : i32
    %c0_i32_0 = arith.constant 0 : i32
    %c0_i32_1 = arith.constant 0 : i32
    return %c0_i32, %c0_i32_0 : i32, i32
  }
  func.func @transform_3(%arg0: i32) -> (i32, i32) {
    %c0_i32 = arith.constant 0 : i32
    %c0_i32_0 = arith.constant 0 : i32
    return %arg0, %c0_i32 : i32, i32
  }
}

</mosaic_0001>

<llo_original>
// kernel: cnn_forward.3
$region0: #{cnn_forward.3}
  #allocation0 [shape = 'u32[]', space=smem, size = 0x4, offset = 0x4, fixed_abs, tag = 'smem constant byte address 0x4 - core index']
  #allocation1 [shape = 'u32[144,128]{1,0:T(1,128)}', space=vmem, size = 0x12000, scoped, tag = 'internal scratch']
  %s0 = inlined_call_operand.vmem [shape: bf16[2,128,1024], index: 0, kind: input, shape index: {}]
  %s1 = inlined_call_operand.vmem [shape: bf16[8,128], index: 1, kind: input, shape index: {}]
  %s2 = inlined_call_operand.vmem [shape: f32[8,1], index: 2, kind: input, shape index: {}]
  %s3 = inlined_call_operand.vmem [shape: bf16[2,8,256], index: 3, kind: output, shape index: {}]
  %s4 = sld [smem:[#allocation0]]
  $region45: #{cnn_forward.3} parent=0
    _
  %s6 = ssub.s32 1, %s4
  %s7 = scalar_select 0, %s6, %s4
  loop: start=0, step=1, limit=4
  $region2: #{cnn_forward.3} parent=0 // loop_pre_header
    _
  $region3: #{cnn_forward.3} parent=0 // loop_header
    %s9 = sphi 0, %s13
    %p10 = scmp.ge.s32.totalorder %s9, 4
    %s19 = sphi 0, %s21
    %s22 = sphi 0, %s19
    %s23 = sphi 0, %s22
    %s39 = sphi 0, %s23
    %s43 = sphi 0, %s43
    %s45 = sphi 0, %s43
    %s46 = sphi 0, %s45
    %s60 = sphi 0, %s46
    %s64 = sphi 0, %s64
    %s66 = sphi 0, %s64
    %s67 = sphi 0, %s66
    %s81 = sphi 0, %s67
    %s87 = sphi 0, %s89
    %s90 = sphi 0, %s87
    %s91 = sphi 0, %s90
    %s107 = sphi 0, %s91
  $region4: #{cnn_forward.3} parent=0 // loop_header_branch
    %12 = sbr.rel (%p10) target = $region8
  $region5: #{cnn_forward.3} parent=0 // loop_body
    %s14 = ssub.s32 %s9, 1
    %s15 = ssub.s32 %s9, 2
    %s16 = sadd.s32 %s9, 1
    %s17 = ssub.s32 %s9, %s16
    %p18 = scmp.eq.s32.totalorder %s17, 0
    %s20 = sadd.s32 %s19, 1
    %s21 = scalar_select %p18, %s19, %s20
    %p24 = pneg %p18
    %p25 = scmp.eq.s32.totalorder %s9, 1
    %p26 = por %p24, %p25
    %p27 = scmp.ne.s32.totalorder %s19, %s22
    %p28 = scmp.eq.s32.totalorder %s9, 0
    %p29 = por %p27, %p28
    %p30 = scmp.ne.s32.totalorder %s19, %s22
    %p31 = scmp.eq.s32.totalorder %s14, 1
    %p32 = por %p30, %p31
    %p33 = scmp.ne.s32.totalorder %s22, %s23
    %p34 = scmp.eq.s32.totalorder %s14, 0
    %p35 = por %p33, %p34
    %p36 = scmp.ne.s32.totalorder %s22, %s23
    %p37 = scmp.eq.s32.totalorder %s15, 1
    %p38 = por %p36, %p37
    %p40 = scmp.ne.s32.totalorder %s23, %s39
    %p41 = scmp.eq.s32.totalorder %s15, 0
    %p42 = por %p40, %p41
    %s44 = sadd.s32 %s43, 1
    %p47 = scmp.eq.s32.totalorder %s9, 1
    %p48 = scmp.ne.s32.totalorder %s43, %s45
    %p49 = scmp.eq.s32.totalorder %s9, 0
    %p50 = por %p48, %p49
    %p51 = scmp.ne.s32.totalorder %s43, %s45
    %p52 = scmp.eq.s32.totalorder %s14, 1
    %p53 = por %p51, %p52
    %p54 = scmp.ne.s32.totalorder %s45, %s46
    %p55 = scmp.eq.s32.totalorder %s14, 0
    %p56 = por %p54, %p55
    %p57 = scmp.ne.s32.totalorder %s45, %s46
    %p58 = scmp.eq.s32.totalorder %s15, 1
    %p59 = por %p57, %p58
    %p61 = scmp.ne.s32.totalorder %s46, %s60
    %p62 = scmp.eq.s32.totalorder %s15, 0
    %p63 = por %p61, %p62
    %s65 = sadd.s32 %s64, 1
    %p68 = scmp.eq.s32.totalorder %s9, 1
    %p69 = scmp.ne.s32.totalorder %s64, %s66
    %p70 = scmp.eq.s32.totalorder %s9, 0
    %p71 = por %p69, %p70
    %p72 = scmp.ne.s32.totalorder %s64, %s66
    %p73 = scmp.eq.s32.totalorder %s14, 1
    %p74 = por %p72, %p73
    %p75 = scmp.ne.s32.totalorder %s66, %s67
    %p76 = scmp.eq.s32.totalorder %s14, 0
    %p77 = por %p75, %p76
    %p78 = scmp.ne.s32.totalorder %s66, %s67
    %p79 = scmp.eq.s32.totalorder %s15, 1
    %p80 = por %p78, %p79
    %p82 = scmp.ne.s32.totalorder %s67, %s81
    %p83 = scmp.eq.s32.totalorder %s15, 0
    %p84 = por %p82, %p83
    %s85 = ssub.s32 %s9, %s16
    %p86 = scmp.eq.s32.totalorder %s85, 0
    %s88 = sadd.s32 %s87, 1
    %s89 = scalar_select %p86, %s87, %s88
    %p92 = pneg %p86
    %p93 = scmp.eq.s32.totalorder %s9, 1
    %p94 = por %p92, %p93
    %p95 = scmp.ne.s32.totalorder %s87, %s90
    %p96 = scmp.eq.s32.totalorder %s9, 0
    %p97 = por %p95, %p96
    %p98 = scmp.ne.s32.totalorder %s87, %s90
    %p99 = scmp.eq.s32.totalorder %s14, 1
    %p100 = por %p98, %p99
    %p101 = scmp.ne.s32.totalorder %s90, %s91
    %p102 = scmp.eq.s32.totalorder %s14, 0
    %p103 = por %p101, %p102
    %p104 = scmp.ne.s32.totalorder %s90, %s91
    %p105 = scmp.eq.s32.totalorder %s15, 1
    %p106 = por %p104, %p105
    %p108 = scmp.ne.s32.totalorder %s91, %s107
    %p109 = scmp.eq.s32.totalorder %s15, 0
    %p110 = por %p108, %p109
    %p111 = scmp.le.s32.totalorder 1, %s9
    %p112 = scmp.lt.s32.totalorder %s9, 3
    %p113 = pnand %p111, %p112
    %p114 = pneg %p113
    // Predicated region
    $region9: #{cnn_forward.3} parent=5 // pred_check
      _
    $region10: #{cnn_forward.3} parent=5 // pred_check_branch
      %116 = sbr.rel (%p113) target = $region12
    $region11: #{cnn_forward.3} parent=5 // pred_region
      %s117 = ssub.s32 %s9, 1
      // Predicated region
      $region13: #{cnn_forward.3} parent=11 // pred_check
        %p118 = pneg %p56
      $region14: #{cnn_forward.3} parent=11 // pred_check_branch
        %120 = sbr.rel (%p118) target = $region16
      $region15: #{cnn_forward.3} parent=11 // pred_region
        _
      $region16: #{cnn_forward.3} parent=11 // pred_fallthru
        _
      // Predicated region
      $region17: #{cnn_forward.3} parent=11 // pred_check
        %p121 = pneg %p77
      $region18: #{cnn_forward.3} parent=11 // pred_check_branch
        %123 = sbr.rel (%p121) target = $region20
      $region19: #{cnn_forward.3} parent=11 // pred_region
        _
      $region20: #{cnn_forward.3} parent=11 // pred_fallthru
        _
    $region12: #{cnn_forward.3} parent=5 // pred_fallthru
      _
    %p124 = scmp.lt.s32.totalorder %s9, 2
    // Predicated region
    $region21: #{cnn_forward.3} parent=5 // pred_check
      %p125 = pneg %p124
    $region22: #{cnn_forward.3} parent=5 // pred_check_branch
      %127 = sbr.rel (%p125) target = $region24
    $region23: #{cnn_forward.3} parent=5 // pred_region
      // Predicated region
      $region25: #{cnn_forward.3} parent=23 // pred_check
        %p128 = pneg %p29
      $region26: #{cnn_forward.3} parent=23 // pred_check_branch
        %130 = sbr.rel (%p128) target = $region28
      $region27: #{cnn_forward.3} parent=23 // pred_region
        %p131 = scmp.lt.s32.totalorder %s9, 1
        %s132 = scalar_select %p131, %s9, 1
        %s133 = smul.addr %s132, 128
        %s134 = smul.addr %s133, 4
        %s135 = scalar_lea.vmem %s0, %s134
      $region28: #{cnn_forward.3} parent=23 // pred_fallthru
        _
    $region24: #{cnn_forward.3} parent=5 // pred_fallthru
      _
    %p136 = scmp.le.s32.totalorder 1, %s9
    %p137 = scmp.lt.s32.totalorder %s9, 3
    %p138 = pnand %p136, %p137
    %p139 = pneg %p138
    // Predicated region
    $region29: #{cnn_forward.3} parent=5 // pred_check
      _
    $region30: #{cnn_forward.3} parent=5 // pred_check_branch
      %141 = sbr.rel (%p138) target = $region32
    $region31: #{cnn_forward.3} parent=5 // pred_region
      %s142 = ssub.s32 %s9, 1
      %p143 = scmp.lt.s32.totalorder %s14, 1
      %s144 = scalar_select %p143, %s14, 1
      %s145 = smul.addr %s144, 128
      %s146 = smul.addr %s145, 4
      %s147 = scalar_lea.vmem %s0, %s146
      %p148 = pneg %p35
      %p149 = pneg %p32
      %p150 = pneg %p56
      %p151 = pneg %p53
      %p152 = pneg %p77
      %p153 = pneg %p74
      %p154 = pneg %p103
      %p155 = pneg %p100
      %p156 = scmp.lt.s32.totalorder %s14, 1
      %s157 = scalar_select %p156, %s14, 1
      %s158 = smul.addr %s157, 2
      %s159 = smul.addr %s158, 4
      %s160 = scalar_lea.vmem %s3, %s159
      %p161 = scmp.lt.s32.totalorder %s14, 1
      %s162 = scalar_select %p161, %s14, 1
      %s163 = smul.addr %s162, 128
      %s164 = smul.addr %s163, 4
      %s165 = scalar_lea.vmem %s0, %s164
      %p166 = scmp.lt.s32.totalorder %s14, 1
      %s167 = scalar_select %p166, %s14, 1
      %s168 = smul.addr %s167, 2
      %s169 = smul.addr %s168, 4
      %s170 = scalar_lea.vmem %s3, %s169
      %v172 = vld [vmem:[%s1] sm:$0xf]
      %v173 = vld [vmem:[%s165] sm:$0xff]
      %v174 = vld [vmem:[%s165 + $0x8] sm:$0xff]
      %v175 = vld [vmem:[%s165 + $0x10] sm:$0xff]
      %v176 = vld [vmem:[%s165 + $0x18] sm:$0xff]
      %v177 = vld [vmem:[%s165 + $0x20] sm:$0xff]
      %v178 = vld [vmem:[%s165 + $0x28] sm:$0xff]
      %v179 = vld [vmem:[%s165 + $0x30] sm:$0xff]
      %v180 = vld [vmem:[%s165 + $0x38] sm:$0xff]
      %v181 = vld [vmem:[%s165 + $0x40] sm:$0xff]
      %v182 = vld [vmem:[%s165 + $0x48] sm:$0xff]
      %v183 = vld [vmem:[%s165 + $0x50] sm:$0xff]
      %v184 = vld [vmem:[%s165 + $0x58] sm:$0xff]
      %v185 = vld [vmem:[%s165 + $0x60] sm:$0xff]
      %v186 = vld [vmem:[%s165 + $0x68] sm:$0xff]
      %v187 = vld [vmem:[%s165 + $0x70] sm:$0xff]
      %v188 = vld [vmem:[%s165 + $0x78] sm:$0xff]
      %v189 = vld [vmem:[%s165 + $0x80] sm:$0xff]
      %v190 = vld [vmem:[%s165 + $0x88] sm:$0xff]
      %v191 = vld [vmem:[%s165 + $0x90] sm:$0xff]
      %v192 = vld [vmem:[%s165 + $0x98] sm:$0xff]
      %v193 = vld [vmem:[%s165 + $0xa0] sm:$0xff]
      %v194 = vld [vmem:[%s165 + $0xa8] sm:$0xff]
      %v195 = vld [vmem:[%s165 + $0xb0] sm:$0xff]
      %v196 = vld [vmem:[%s165 + $0xb8] sm:$0xff]
      %v197 = vld [vmem:[%s165 + $0xc0] sm:$0xff]
      %v198 = vld [vmem:[%s165 + $0xc8] sm:$0xff]
      %v199 = vld [vmem:[%s165 + $0xd0] sm:$0xff]
      %v200 = vld [vmem:[%s165 + $0xd8] sm:$0xff]
      %v201 = vld [vmem:[%s165 + $0xe0] sm:$0xff]
      %v202 = vld [vmem:[%s165 + $0xe8] sm:$0xff]
      %v203 = vld [vmem:[%s165 + $0xf0] sm:$0xff]
      %v204 = vld [vmem:[%s165 + $0xf8] sm:$0xff]
      %v205 = vld [vmem:[%s165 + $0x100] sm:$0xff]
      %v206 = vld [vmem:[%s165 + $0x108] sm:$0xff]
      %v207 = vld [vmem:[%s165 + $0x110] sm:$0xff]
      %v208 = vld [vmem:[%s165 + $0x118] sm:$0xff]
      %v209 = vld [vmem:[%s165 + $0x120] sm:$0xff]
      %v210 = vld [vmem:[%s165 + $0x128] sm:$0xff]
      %v211 = vld [vmem:[%s165 + $0x130] sm:$0xff]
      %v212 = vld [vmem:[%s165 + $0x138] sm:$0xff]
      %v213 = vld [vmem:[%s165 + $0x140] sm:$0xff]
      %v214 = vld [vmem:[%s165 + $0x148] sm:$0xff]
      %v215 = vld [vmem:[%s165 + $0x150] sm:$0xff]
      %v216 = vld [vmem:[%s165 + $0x158] sm:$0xff]
      %v217 = vld [vmem:[%s165 + $0x160] sm:$0xff]
      %v218 = vld [vmem:[%s165 + $0x168] sm:$0xff]
      %v219 = vld [vmem:[%s165 + $0x170] sm:$0xff]
      %v220 = vld [vmem:[%s165 + $0x178] sm:$0xff]
      %v221 = vld [vmem:[%s165 + $0x180] sm:$0xff]
      %v222 = vld [vmem:[%s165 + $0x188] sm:$0xff]
      %v223 = vld [vmem:[%s165 + $0x190] sm:$0xff]
      %v224 = vld [vmem:[%s165 + $0x198] sm:$0xff]
      %v225 = vld [vmem:[%s165 + $0x1a0] sm:$0xff]
      %v226 = vld [vmem:[%s165 + $0x1a8] sm:$0xff]
      %v227 = vld [vmem:[%s165 + $0x1b0] sm:$0xff]
      %v228 = vld [vmem:[%s165 + $0x1b8] sm:$0xff]
      %v229 = vld [vmem:[%s165 + $0x1c0] sm:$0xff]
      %v230 = vld [vmem:[%s165 + $0x1c8] sm:$0xff]
      %v231 = vld [vmem:[%s165 + $0x1d0] sm:$0xff]
      %v232 = vld [vmem:[%s165 + $0x1d8] sm:$0xff]
      %v233 = vld [vmem:[%s165 + $0x1e0] sm:$0xff]
      %v234 = vld [vmem:[%s165 + $0x1e8] sm:$0xff]
      %v235 = vld [vmem:[%s165 + $0x1f0] sm:$0xff]
      %v236 = vld [vmem:[%s165 + $0x1f8] sm:$0xff]
      %v237 = vld [vmem:[%s2] sm:$0xff]
      %239 = vset.pattern.permute.xlu0 0
      %240 = vperm.xlu0 %239, %v237
      %v241 = vpop.permute.xlu0 %240
      %v307 = vunpack.c.l.b16 %v173
      %v308 = vunpack.c.h.b16 %v173
      %v309 = vunpack.c.l.b16 %v174
      %v310 = vunpack.c.h.b16 %v174
      %v311 = vunpack.c.l.b16 %v175
      %v312 = vunpack.c.h.b16 %v175
      %v313 = vunpack.c.l.b16 %v176
      %v314 = vunpack.c.h.b16 %v176
      %v315 = vunpack.c.l.b16 %v177
      %v316 = vunpack.c.h.b16 %v177
      %v317 = vunpack.c.l.b16 %v178
      %v318 = vunpack.c.h.b16 %v178
      %v319 = vunpack.c.l.b16 %v179
      %v320 = vunpack.c.h.b16 %v179
      %v321 = vunpack.c.l.b16 %v180
      %v322 = vunpack.c.h.b16 %v180
      %v323 = vunpack.c.l.b16 %v181
      %v324 = vunpack.c.h.b16 %v181
      %v325 = vunpack.c.l.b16 %v182
      %v326 = vunpack.c.h.b16 %v182
      %v327 = vunpack.c.l.b16 %v183
      %v328 = vunpack.c.h.b16 %v183
      %v329 = vunpack.c.l.b16 %v184
      %v330 = vunpack.c.h.b16 %v184
      %v331 = vunpack.c.l.b16 %v185
      %v332 = vunpack.c.h.b16 %v185
      %v333 = vunpack.c.l.b16 %v186
      %v334 = vunpack.c.h.b16 %v186
      %v335 = vunpack.c.l.b16 %v187
      %v336 = vunpack.c.h.b16 %v187
      %v337 = vunpack.c.l.b16 %v188
      %v338 = vunpack.c.h.b16 %v188
      %v339 = vunpack.c.l.b16 %v189
      %v340 = vunpack.c.h.b16 %v189
      %v341 = vunpack.c.l.b16 %v190
      %v342 = vunpack.c.h.b16 %v190
      %v343 = vunpack.c.l.b16 %v191
      %v344 = vunpack.c.h.b16 %v191
      %v345 = vunpack.c.l.b16 %v192
      %v346 = vunpack.c.h.b16 %v192
      %v347 = vunpack.c.l.b16 %v193
      %v348 = vunpack.c.h.b16 %v193
      %v349 = vunpack.c.l.b16 %v194
      %v350 = vunpack.c.h.b16 %v194
      %v351 = vunpack.c.l.b16 %v195
      %v352 = vunpack.c.h.b16 %v195
      %v353 = vunpack.c.l.b16 %v196
      %v354 = vunpack.c.h.b16 %v196
      %v355 = vunpack.c.l.b16 %v197
      %v356 = vunpack.c.h.b16 %v197
      %v357 = vunpack.c.l.b16 %v198
      %v358 = vunpack.c.h.b16 %v198
      %v359 = vunpack.c.l.b16 %v199
      %v360 = vunpack.c.h.b16 %v199
      %v361 = vunpack.c.l.b16 %v200
      %v362 = vunpack.c.h.b16 %v200
      %v363 = vunpack.c.l.b16 %v201
      %v364 = vunpack.c.h.b16 %v201
      %v365 = vunpack.c.l.b16 %v202
      %v366 = vunpack.c.h.b16 %v202
      %v367 = vunpack.c.l.b16 %v203
      %v368 = vunpack.c.h.b16 %v203
      %v369 = vunpack.c.l.b16 %v204
      %v370 = vunpack.c.h.b16 %v204
      %v371 = vunpack.c.l.b16 %v205
      %v372 = vunpack.c.h.b16 %v205
      %v373 = vunpack.c.l.b16 %v206
      %v374 = vunpack.c.h.b16 %v206
      %v375 = vunpack.c.l.b16 %v207
      %v376 = vunpack.c.h.b16 %v207
      %v377 = vunpack.c.l.b16 %v208
      %v378 = vunpack.c.h.b16 %v208
      %v379 = vunpack.c.l.b16 %v209
      %v380 = vunpack.c.h.b16 %v209
      %v381 = vunpack.c.l.b16 %v210
      %v382 = vunpack.c.h.b16 %v210
      %v383 = vunpack.c.l.b16 %v211
      %v384 = vunpack.c.h.b16 %v211
      %v385 = vunpack.c.l.b16 %v212
      %v386 = vunpack.c.h.b16 %v212
      %v387 = vunpack.c.l.b16 %v213
      %v388 = vunpack.c.h.b16 %v213
      %v389 = vunpack.c.l.b16 %v214
      %v390 = vunpack.c.h.b16 %v214
      %v391 = vunpack.c.l.b16 %v215
      %v392 = vunpack.c.h.b16 %v215
      %v393 = vunpack.c.l.b16 %v216
      %v394 = vunpack.c.h.b16 %v216
      %v395 = vunpack.c.l.b16 %v217
      %v396 = vunpack.c.h.b16 %v217
      %v397 = vunpack.c.l.b16 %v218
      %v398 = vunpack.c.h.b16 %v218
      %v399 = vunpack.c.l.b16 %v219
      %v400 = vunpack.c.h.b16 %v219
      %v401 = vunpack.c.l.b16 %v220
      %v402 = vunpack.c.h.b16 %v220
      %v403 = vunpack.c.l.b16 %v221
      %v404 = vunpack.c.h.b16 %v221
      %v405 = vunpack.c.l.b16 %v222
      %v406 = vunpack.c.h.b16 %v222
      %v407 = vunpack.c.l.b16 %v223
      %v408 = vunpack.c.h.b16 %v223
      %v409 = vunpack.c.l.b16 %v224
      %v410 = vunpack.c.h.b16 %v224
      %v411 = vunpack.c.l.b16 %v225
      %v412 = vunpack.c.h.b16 %v225
      %v413 = vunpack.c.l.b16 %v226
      %v414 = vunpack.c.h.b16 %v226
      %v415 = vunpack.c.l.b16 %v227
      %v416 = vunpack.c.h.b16 %v227
      %v417 = vunpack.c.l.b16 %v228
      %v418 = vunpack.c.h.b16 %v228
      %v419 = vunpack.c.l.b16 %v229
      %v420 = vunpack.c.h.b16 %v229
      %v421 = vunpack.c.l.b16 %v230
      %v422 = vunpack.c.h.b16 %v230
      %v423 = vunpack.c.l.b16 %v231
      %v424 = vunpack.c.h.b16 %v231
      %v425 = vunpack.c.l.b16 %v232
      %v426 = vunpack.c.h.b16 %v232
      %v427 = vunpack.c.l.b16 %v233
      %v428 = vunpack.c.h.b16 %v233
      %v429 = vunpack.c.l.b16 %v234
      %v430 = vunpack.c.h.b16 %v234
      %v431 = vunpack.c.l.b16 %v235
      %v432 = vunpack.c.h.b16 %v235
      %v433 = vunpack.c.l.b16 %v236
      %v434 = vunpack.c.h.b16 %v236
      %v435 = vpack.c.b16 %v315, %v307
      %v436 = vpack.c.b16 %v316, %v308
      %v437 = vpack.c.b16 %v317, %v309
      %v438 = vpack.c.b16 %v318, %v310
      %v439 = vpack.c.b16 %v319, %v311
      %v440 = vpack.c.b16 %v320, %v312
      %v441 = vpack.c.b16 %v321, %v313
      %v442 = vpack.c.b16 %v322, %v314
      %v443 = vpack.c.b16 %v331, %v323
      %v444 = vpack.c.b16 %v332, %v324
      %v445 = vpack.c.b16 %v333, %v325
      %v446 = vpack.c.b16 %v334, %v326
      %v447 = vpack.c.b16 %v335, %v327
      %v448 = vpack.c.b16 %v336, %v328
      %v449 = vpack.c.b16 %v337, %v329
      %v450 = vpack.c.b16 %v338, %v330
      %v451 = vpack.c.b16 %v347, %v339
      %v452 = vpack.c.b16 %v348, %v340
      %v453 = vpack.c.b16 %v349, %v341
      %v454 = vpack.c.b16 %v350, %v342
      %v455 = vpack.c.b16 %v351, %v343
      %v456 = vpack.c.b16 %v352, %v344
      %v457 = vpack.c.b16 %v353, %v345
      %v458 = vpack.c.b16 %v354, %v346
      %v459 = vpack.c.b16 %v363, %v355
      %v460 = vpack.c.b16 %v364, %v356
      %v461 = vpack.c.b16 %v365, %v357
      %v462 = vpack.c.b16 %v366, %v358
      %v463 = vpack.c.b16 %v367, %v359
      %v464 = vpack.c.b16 %v368, %v360
      %v465 = vpack.c.b16 %v369, %v361
      %v466 = vpack.c.b16 %v370, %v362
      %v467 = vpack.c.b16 %v379, %v371
      %v468 = vpack.c.b16 %v380, %v372
      %v469 = vpack.c.b16 %v381, %v373
      %v470 = vpack.c.b16 %v382, %v374
      %v471 = vpack.c.b16 %v383, %v375
      %v472 = vpack.c.b16 %v384, %v376
      %v473 = vpack.c.b16 %v385, %v377
      %v474 = vpack.c.b16 %v386, %v378
      %v475 = vpack.c.b16 %v395, %v387
      %v476 = vpack.c.b16 %v396, %v388
      %v477 = vpack.c.b16 %v397, %v389
      %v478 = vpack.c.b16 %v398, %v390
      %v479 = vpack.c.b16 %v399, %v391
      %v480 = vpack.c.b16 %v400, %v392
      %v481 = vpack.c.b16 %v401, %v393
      %v482 = vpack.c.b16 %v402, %v394
      %v483 = vpack.c.b16 %v411, %v403
      %v484 = vpack.c.b16 %v412, %v404
      %v485 = vpack.c.b16 %v413, %v405
      %v486 = vpack.c.b16 %v414, %v406
      %v487 = vpack.c.b16 %v415, %v407
      %v488 = vpack.c.b16 %v416, %v408
      %v489 = vpack.c.b16 %v417, %v409
      %v490 = vpack.c.b16 %v418, %v410
      %v491 = vpack.c.b16 %v427, %v419
      %v492 = vpack.c.b16 %v428, %v420
      %v493 = vpack.c.b16 %v429, %v421
      %v494 = vpack.c.b16 %v430, %v422
      %v495 = vpack.c.b16 %v431, %v423
      %v496 = vpack.c.b16 %v432, %v424
      %v497 = vpack.c.b16 %v433, %v425
      %v498 = vpack.c.b16 %v434, %v426
      %563 = vmatprep.subr.bf16.mxu0 %v436
      %564 = vmatpush1.bf16.msra.mxu0 %v435
      %565 = vmatprep.subr.bf16.mxu0 %v444
      %566 = vmatpush1.bf16.msra.mxu0 %v443
      %567 = vmatprep.subr.bf16.mxu0 %v452
      %568 = vmatpush1.bf16.msra.mxu0 %v451
      %569 = vmatprep.subr.bf16.mxu0 %v460
      %570 = vmatpush1.bf16.msra.mxu0 %v459
      %571 = vmatprep.subr.bf16.mxu0 %v468
      %572 = vmatpush1.bf16.msra.mxu0 %v467
      %573 = vmatprep.subr.bf16.mxu0 %v476
      %574 = vmatpush1.bf16.msra.mxu0 %v475
      %575 = vmatprep.subr.bf16.mxu0 %v484
      %576 = vmatpush1.bf16.msra.mxu0 %v483
      %577 = vmatprep.subr.bf16.mxu0 %v492
      %578 = vmatpush1.bf16.msra.mxu0 %v491
      %579 = vmatprep.subr.bf16.mxu0 0
      %580 = vmatpush1.bf16.msra.mxu0 0
      %581 = vmatprep.subr.bf16.mxu0 0
      %582 = vmatpush1.bf16.msra.mxu0 0
      %583 = vmatprep.subr.bf16.mxu0 0
      %584 = vmatpush1.bf16.msra.mxu0 0
      %585 = vmatprep.subr.bf16.mxu0 0
      %586 = vmatpush1.bf16.msra.mxu0 0
      %587 = vmatprep.subr.bf16.mxu0 0
      %588 = vmatpush1.bf16.msra.mxu0 0
      %589 = vmatprep.subr.bf16.mxu0 0
      %590 = vmatpush1.bf16.msra.mxu0 0
      %591 = vmatprep.subr.bf16.mxu0 0
      %592 = vmatpush1.bf16.msra.mxu0 0
      %593 = vmatprep.subr.bf16.mxu0 0
      %594 = vmatpush1.bf16.msra.mxu0 0
      %595 = vmatprep.mubr.bf16.mxu0 0
      %596 = vmatmul.mubr.bf16.gmra.mrb[0].mxu0 %v172
      %v597 = vpop.f32.mrb[0].mxu0
      %v598 = vadd.f32 %v241, %v597
      %v599 = vpop.f32.mrb[0].mxu0
      %v600 = vadd.f32 %v241, %v599
      %v601 = vpop.f32.mrb[0].mxu0
      %v602 = vpop.f32.mrb[0].mxu0
      %603 = vdwg.mxu0
      %604 = vmatprep.subr.bf16.mxu0 %v438
      %605 = vmatpush1.bf16.msra.mxu0 %v437
      %606 = vmatprep.subr.bf16.mxu0 %v446
      %607 = vmatpush1.bf16.msra.mxu0 %v445
      %608 = vmatprep.subr.bf16.mxu0 %v454
      %609 = vmatpush1.bf16.msra.mxu0 %v453
      %610 = vmatprep.subr.bf16.mxu0 %v462
      %611 = vmatpush1.bf16.msra.mxu0 %v461
      %612 = vmatprep.subr.bf16.mxu0 %v470
      %613 = vmatpush1.bf16.msra.mxu0 %v469
      %614 = vmatprep.subr.bf16.mxu0 %v478
      %615 = vmatpush1.bf16.msra.mxu0 %v477
      %616 = vmatprep.subr.bf16.mxu0 %v486
      %617 = vmatpush1.bf16.msra.mxu0 %v485
      %618 = vmatprep.subr.bf16.mxu0 %v494
      %619 = vmatpush1.bf16.msra.mxu0 %v493
      %620 = vmatprep.subr.bf16.mxu0 0
      %621 = vmatpush1.bf16.msra.mxu0 0
      %622 = vmatprep.subr.bf16.mxu0 0
      %623 = vmatpush1.bf16.msra.mxu0 0
      %624 = vmatprep.subr.bf16.mxu0 0
      %625 = vmatpush1.bf16.msra.mxu0 0
      %626 = vmatprep.subr.bf16.mxu0 0
      %627 = vmatpush1.bf16.msra.mxu0 0
      %628 = vmatprep.subr.bf16.mxu0 0
      %629 = vmatpush1.bf16.msra.mxu0 0
      %630 = vmatprep.subr.bf16.mxu0 0
      %631 = vmatpush1.bf16.msra.mxu0 0
      %632 = vmatprep.subr.bf16.mxu0 0
      %633 = vmatpush1.bf16.msra.mxu0 0
      %634 = vmatprep.subr.bf16.mxu0 0
      %635 = vmatpush1.bf16.msra.mxu0 0
      %636 = vmatprep.mubr.bf16.mxu0 0
      %637 = vmatmul.mubr.bf16.gmra.mrb[0].mxu0 %v172
      %v638 = vpop.f32.mrb[0].mxu0
      %v639 = vadd.f32 %v241, %v638
      %v640 = vpop.f32.mrb[0].mxu0
      %v641 = vadd.f32 %v241, %v640
      %v642 = vpop.f32.mrb[0].mxu0
      %v643 = vpop.f32.mrb[0].mxu0
      %644 = vdwg.mxu0
      %645 = vmatprep.subr.bf16.mxu0 %v440
      %646 = vmatpush1.bf16.msra.mxu0 %v439
      %647 = vmatprep.subr.bf16.mxu0 %v448
      %648 = vmatpush1.bf16.msra.mxu0 %v447
      %649 = vmatprep.subr.bf16.mxu0 %v456
      %650 = vmatpush1.bf16.msra.mxu0 %v455
      %651 = vmatprep.subr.bf16.mxu0 %v464
      %652 = vmatpush1.bf16.msra.mxu0 %v463
      %653 = vmatprep.subr.bf16.mxu0 %v472
      %654 = vmatpush1.bf16.msra.mxu0 %v471
      %655 = vmatprep.subr.bf16.mxu0 %v480
      %656 = vmatpush1.bf16.msra.mxu0 %v479
      %657 = vmatprep.subr.bf16.mxu0 %v488
      %658 = vmatpush1.bf16.msra.mxu0 %v487
      %659 = vmatprep.subr.bf16.mxu0 %v496
      %660 = vmatpush1.bf16.msra.mxu0 %v495
      %661 = vmatprep.subr.bf16.mxu0 0
      %662 = vmatpush1.bf16.msra.mxu0 0
      %663 = vmatprep.subr.bf16.mxu0 0
      %664 = vmatpush1.bf16.msra.mxu0 0
      %665 = vmatprep.subr.bf16.mxu0 0
      %666 = vmatpush1.bf16.msra.mxu0 0
      %667 = vmatprep.subr.bf16.mxu0 0
      %668 = vmatpush1.bf16.msra.mxu0 0
      %669 = vmatprep.subr.bf16.mxu0 0
      %670 = vmatpush1.bf16.msra.mxu0 0
      %671 = vmatprep.subr.bf16.mxu0 0
      %672 = vmatpush1.bf16.msra.mxu0 0
      %673 = vmatprep.subr.bf16.mxu0 0
      %674 = vmatpush1.bf16.msra.mxu0 0
      %675 = vmatprep.subr.bf16.mxu0 0
      %676 = vmatpush1.bf16.msra.mxu0 0
      %677 = vmatprep.mubr.bf16.mxu0 0
      %678 = vmatmul.mubr.bf16.gmra.mrb[0].mxu0 %v172
      %v679 = vpop.f32.mrb[0].mxu0
      %v680 = vadd.f32 %v241, %v679
      %v681 = vpop.f32.mrb[0].mxu0
      %v682 = vadd.f32 %v241, %v681
      %v683 = vpop.f32.mrb[0].mxu0
      %v684 = vpop.f32.mrb[0].mxu0
      %685 = vdwg.mxu0
      %686 = vmatprep.subr.bf16.mxu0 %v442
      %687 = vmatpush1.bf16.msra.mxu0 %v441
      %688 = vmatprep.subr.bf16.mxu0 %v450
      %689 = vmatpush1.bf16.msra.mxu0 %v449
      %690 = vmatprep.subr.bf16.mxu0 %v458
      %691 = vmatpush1.bf16.msra.mxu0 %v457
      %692 = vmatprep.subr.bf16.mxu0 %v466
      %693 = vmatpush1.bf16.msra.mxu0 %v465
      %694 = vmatprep.subr.bf16.mxu0 %v474
      %695 = vmatpush1.bf16.msra.mxu0 %v473
      %696 = vmatprep.subr.bf16.mxu0 %v482
      %697 = vmatpush1.bf16.msra.mxu0 %v481
      %698 = vmatprep.subr.bf16.mxu0 %v490
      %699 = vmatpush1.bf16.msra.mxu0 %v489
      %700 = vmatprep.subr.bf16.mxu0 %v498
      %701 = vmatpush1.bf16.msra.mxu0 %v497
      %702 = vmatprep.subr.bf16.mxu0 0
      %703 = vmatpush1.bf16.msra.mxu0 0
      %704 = vmatprep.subr.bf16.mxu0 0
      %705 = vmatpush1.bf16.msra.mxu0 0
      %706 = vmatprep.subr.bf16.mxu0 0
      %707 = vmatpush1.bf16.msra.mxu0 0
      %708 = vmatprep.subr.bf16.mxu0 0
      %709 = vmatpush1.bf16.msra.mxu0 0
      %710 = vmatprep.subr.bf16.mxu0 0
      %711 = vmatpush1.bf16.msra.mxu0 0
      %712 = vmatprep.subr.bf16.mxu0 0
      %713 = vmatpush1.bf16.msra.mxu0 0
      %714 = vmatprep.subr.bf16.mxu0 0
      %715 = vmatpush1.bf16.msra.mxu0 0
      %716 = vmatprep.subr.bf16.mxu0 0
      %717 = vmatpush1.bf16.msra.mxu0 0
      %718 = vmatprep.mubr.bf16.mxu0 0
      %719 = vmatmul.mubr.bf16.gmra.mrb[0].mxu0 %v172
      %v720 = vpop.f32.mrb[0].mxu0
      %v721 = vadd.f32 %v241, %v720
      %v722 = vpop.f32.mrb[0].mxu0
      %v723 = vadd.f32 %v241, %v722
      %v724 = vpop.f32.mrb[0].mxu0
      %v725 = vpop.f32.mrb[0].mxu0
      %726 = vdwg.mxu0
      %v727 = vmul.f32 %v598, 0.70710677
      %v728 = vmul.f32 %v600, 0.70710677
      %v729 = vmul.f32 %v639, 0.70710677
      %v730 = vmul.f32 %v641, 0.70710677
      %v731 = vmul.f32 %v680, 0.70710677
      %v732 = vmul.f32 %v682, 0.70710677
      %v733 = vmul.f32 %v721, 0.70710677
      %v734 = vmul.f32 %v723, 0.70710677
      %v735 = vand.u32 2147483647, %v727
      %v736 = vand.u32 2147483647, %v728
      %v737 = vand.u32 2147483647, %v729
      %v738 = vand.u32 2147483647, %v730
      %v739 = vand.u32 2147483647, %v731
      %v740 = vand.u32 2147483647, %v732
      %v741 = vand.u32 2147483647, %v733
      %v742 = vand.u32 2147483647, %v734
      %v743 = vmul.f32 %v735, 0.3275911
      %v744 = vmul.f32 %v736, 0.3275911
      %v745 = vmul.f32 %v737, 0.3275911
      %v746 = vmul.f32 %v738, 0.3275911
      %v747 = vmul.f32 %v739, 0.3275911
      %v748 = vmul.f32 %v740, 0.3275911
      %v749 = vmul.f32 %v741, 0.3275911
      %v750 = vmul.f32 %v742, 0.3275911
      %v751 = vadd.f32 %v743, 1.0
      %v752 = vadd.f32 %v744, 1.0
      %v753 = vadd.f32 %v745, 1.0
      %v754 = vadd.f32 %v746, 1.0
      %v755 = vadd.f32 %v747, 1.0
      %v756 = vadd.f32 %v748, 1.0
      %v757 = vadd.f32 %v749, 1.0
      %v758 = vadd.f32 %v750, 1.0
      %v759 = vrcp.pop %v751
      %v760 = vrcp.pop %v752
      %v761 = vrcp.pop %v753
      %v762 = vrcp.pop %v754
      %v763 = vrcp.pop %v755
      %v764 = vrcp.pop %v756
      %v765 = vrcp.pop %v757
      %v766 = vrcp.pop %v758
      %v767 = vmul.f32 %v759, 1.0614054
      %v768 = vmul.f32 %v760, 1.0614054
      %v769 = vmul.f32 %v761, 1.0614054
      %v770 = vmul.f32 %v762, 1.0614054
      %v771 = vmul.f32 %v763, 1.0614054
      %v772 = vmul.f32 %v764, 1.0614054
      %v773 = vmul.f32 %v765, 1.0614054
      %v774 = vmul.f32 %v766, 1.0614054
      %v775 = vsub.f32 %v767, 1.4531521
      %v776 = vsub.f32 %v768, 1.4531521
      %v777 = vsub.f32 %v769, 1.4531521
      %v778 = vsub.f32 %v770, 1.4531521
      %v779 = vsub.f32 %v771, 1.4531521
      %v780 = vsub.f32 %v772, 1.4531521
      %v781 = vsub.f32 %v773, 1.4531521
      %v782 = vsub.f32 %v774, 1.4531521
      %v783 = vmul.f32 %v775, %v759
      %v784 = vmul.f32 %v776, %v760
      %v785 = vmul.f32 %v777, %v761
      %v786 = vmul.f32 %v778, %v762
      %v787 = vmul.f32 %v779, %v763
      %v788 = vmul.f32 %v780, %v764
      %v789 = vmul.f32 %v781, %v765
      %v790 = vmul.f32 %v782, %v766
      %v791 = vadd.f32 %v783, 1.4214138
      %v792 = vadd.f32 %v784, 1.4214138
      %v793 = vadd.f32 %v785, 1.4214138
      %v794 = vadd.f32 %v786, 1.4214138
      %v795 = vadd.f32 %v787, 1.4214138
      %v796 = vadd.f32 %v788, 1.4214138
      %v797 = vadd.f32 %v789, 1.4214138
      %v798 = vadd.f32 %v790, 1.4214138
      %v799 = vmul.f32 %v791, %v759
      %v800 = vmul.f32 %v792, %v760
      %v801 = vmul.f32 %v793, %v761
      %v802 = vmul.f32 %v794, %v762
      %v803 = vmul.f32 %v795, %v763
      %v804 = vmul.f32 %v796, %v764
      %v805 = vmul.f32 %v797, %v765
      %v806 = vmul.f32 %v798, %v766
      %v807 = vsub.f32 %v799, 0.28449672
      %v808 = vsub.f32 %v800, 0.28449672
      %v809 = vsub.f32 %v801, 0.28449672
      %v810 = vsub.f32 %v802, 0.28449672
      %v811 = vsub.f32 %v803, 0.28449672
      %v812 = vsub.f32 %v804, 0.28449672
      %v813 = vsub.f32 %v805, 0.28449672
      %v814 = vsub.f32 %v806, 0.28449672
      %v815 = vmul.f32 %v807, %v759
      %v816 = vmul.f32 %v808, %v760
      %v817 = vmul.f32 %v809, %v761
      %v818 = vmul.f32 %v810, %v762
      %v819 = vmul.f32 %v811, %v763
      %v820 = vmul.f32 %v812, %v764
      %v821 = vmul.f32 %v813, %v765
      %v822 = vmul.f32 %v814, %v766
      %v823 = vadd.f32 %v815, 0.2548296
      %v824 = vadd.f32 %v816, 0.2548296
      %v825 = vadd.f32 %v817, 0.2548296
      %v826 = vadd.f32 %v818, 0.2548296
      %v827 = vadd.f32 %v819, 0.2548296
      %v828 = vadd.f32 %v820, 0.2548296
      %v829 = vadd.f32 %v821, 0.2548296
      %v830 = vadd.f32 %v822, 0.2548296
      %v831 = vmul.f32 %v823, %v759
      %v832 = vmul.f32 %v824, %v760
      %v833 = vmul.f32 %v825, %v761
      %v834 = vmul.f32 %v826, %v762
      %v835 = vmul.f32 %v827, %v763
      %v836 = vmul.f32 %v828, %v764
      %v837 = vmul.f32 %v829, %v765
      %v838 = vmul.f32 %v830, %v766
      %v839 = vsub.f32 0.0, %v735
      %v840 = vsub.f32 0.0, %v736
      %v841 = vsub.f32 0.0, %v737
      %v842 = vsub.f32 0.0, %v738
      %v843 = vsub.f32 0.0, %v739
      %v844 = vsub.f32 0.0, %v740
      %v845 = vsub.f32 0.0, %v741
      %v846 = vsub.f32 0.0, %v742
      %v847 = vmul.f32 %v839, %v735
      %v848 = vmul.f32 %v840, %v736
      %v849 = vmul.f32 %v841, %v737
      %v850 = vmul.f32 %v842, %v738
      %v851 = vmul.f32 %v843, %v739
      %v852 = vmul.f32 %v844, %v740
      %v853 = vmul.f32 %v845, %v741
      %v854 = vmul.f32 %v846, %v742
      %v855 = vmul.f32 %v847, 1.442695
      %v856 = vpow.pop %v855
      %v857 = vmul.f32 %v848, 1.442695
      %v858 = vpow.pop %v857
      %v859 = vmul.f32 %v849, 1.442695
      %v860 = vpow.pop %v859
      %v861 = vmul.f32 %v850, 1.442695
      %v862 = vpow.pop %v861
      %v863 = vmul.f32 %v851, 1.442695
      %v864 = vpow.pop %v863
      %v865 = vmul.f32 %v852, 1.442695
      %v866 = vpow.pop %v865
      %v867 = vmul.f32 %v853, 1.442695
      %v868 = vpow.pop %v867
      %v869 = vmul.f32 %v854, 1.442695
      %v870 = vpow.pop %v869
      %v871 = vmul.f32 %v831, %v856
      %v872 = vmul.f32 %v832, %v858
      %v873 = vmul.f32 %v833, %v860
      %v874 = vmul.f32 %v834, %v862
      %v875 = vmul.f32 %v835, %v864
      %v876 = vmul.f32 %v836, %v866
      %v877 = vmul.f32 %v837, %v868
      %v878 = vmul.f32 %v838, %v870
      %v879 = vsub.f32 1.0, %v871
      %v880 = vsub.f32 1.0, %v872
      %v881 = vsub.f32 1.0, %v873
      %v882 = vsub.f32 1.0, %v874
      %v883 = vsub.f32 1.0, %v875
      %v884 = vsub.f32 1.0, %v876
      %v885 = vsub.f32 1.0, %v877
      %v886 = vsub.f32 1.0, %v878
      %vm887 = vcmp.ge.f32.partialorder %v727, 0.0
      %vm888 = vcmp.ge.f32.partialorder %v728, 0.0
      %vm889 = vcmp.ge.f32.partialorder %v729, 0.0
      %vm890 = vcmp.ge.f32.partialorder %v730, 0.0
      %vm891 = vcmp.ge.f32.partialorder %v731, 0.0
      %vm892 = vcmp.ge.f32.partialorder %v732, 0.0
      %vm893 = vcmp.ge.f32.partialorder %v733, 0.0
      %vm894 = vcmp.ge.f32.partialorder %v734, 0.0
      %v895 = vsub.f32 0.0, %v879
      %v896 = vsub.f32 0.0, %v880
      %v897 = vsub.f32 0.0, %v881
      %v898 = vsub.f32 0.0, %v882
      %v899 = vsub.f32 0.0, %v883
      %v900 = vsub.f32 0.0, %v884
      %v901 = vsub.f32 0.0, %v885
      %v902 = vsub.f32 0.0, %v886
      %v903 = vsel %vm887, %v879, %v895
      %v904 = vsel %vm888, %v880, %v896
      %v905 = vsel %vm889, %v881, %v897
      %v906 = vsel %vm890, %v882, %v898
      %v907 = vsel %vm891, %v883, %v899
      %v908 = vsel %vm892, %v884, %v900
      %v909 = vsel %vm893, %v885, %v901
      %v910 = vsel %vm894, %v886, %v902
      %v911 = vmul.f32 %v598, 0.5
      %v912 = vmul.f32 %v600, 0.5
      %v913 = vmul.f32 %v639, 0.5
      %v914 = vmul.f32 %v641, 0.5
      %v915 = vmul.f32 %v680, 0.5
      %v916 = vmul.f32 %v682, 0.5
      %v917 = vmul.f32 %v721, 0.5
      %v918 = vmul.f32 %v723, 0.5
      %v919 = vadd.f32 %v903, 1.0
      %v920 = vadd.f32 %v904, 1.0
      %v921 = vadd.f32 %v905, 1.0
      %v922 = vadd.f32 %v906, 1.0
      %v923 = vadd.f32 %v907, 1.0
      %v924 = vadd.f32 %v908, 1.0
      %v925 = vadd.f32 %v909, 1.0
      %v926 = vadd.f32 %v910, 1.0
      %v927 = vmul.f32 %v911, %v919
      %v928 = vmul.f32 %v912, %v920
      %v929 = vmul.f32 %v913, %v921
      %v930 = vmul.f32 %v914, %v922
      %v931 = vmul.f32 %v915, %v923
      %v932 = vmul.f32 %v916, %v924
      %v933 = vmul.f32 %v917, %v925
      %v934 = vmul.f32 %v918, %v926
      %v935 = vmax.f32 %v927, %v929
      %v936 = vmax.f32 %v928, %v930
      %v937 = vmax.f32 %v931, %v933
      %v938 = vmax.f32 %v932, %v934
      %v939 = vmax.f32 %v935, %v937
      %v940 = vmax.f32 %v936, %v938
      %v941 = vpack.c.bf16 %v939, %v939
      %v942 = vpack.c.bf16 %v940, %v940
      %v945 = vunpack.c.l.b16 %v941
      %v946 = vunpack.c.l.b16 %v942
      %v947 = vpack.c.b16 %v946, %v945
      %949 = vst [vmem:[%s170] sm:$0xff] %v947
      %p950 = scmp.lt.s32.totalorder %s14, 1
      %s951 = scalar_select %p950, %s14, 1
      %s952 = smul.addr %s951, 2
      %s953 = smul.addr %s952, 4
      %s954 = scalar_lea.vmem %s3, %s953
      // Predicated region
      $region33: #{cnn_forward.3} parent=31 // pred_check
        %p955 = pneg %p100
      $region34: #{cnn_forward.3} parent=31 // pred_check_branch
        %957 = sbr.rel (%p955) target = $region36
      $region35: #{cnn_forward.3} parent=31 // pred_region
        _
      $region36: #{cnn_forward.3} parent=31 // pred_fallthru
        _
    $region32: #{cnn_forward.3} parent=5 // pred_fallthru
      _
    %p958 = scmp.le.s32.totalorder 2, %s9
    // Predicated region
    $region37: #{cnn_forward.3} parent=5 // pred_check
      %p959 = pneg %p958
    $region38: #{cnn_forward.3} parent=5 // pred_check_branch
      %961 = sbr.rel (%p959) target = $region40
    $region39: #{cnn_forward.3} parent=5 // pred_region
      %s962 = ssub.s32 %s9, 2
      // Predicated region
      $region41: #{cnn_forward.3} parent=39 // pred_check
        %p963 = pneg %p106
      $region42: #{cnn_forward.3} parent=39 // pred_check_branch
        %965 = sbr.rel (%p963) target = $region44
      $region43: #{cnn_forward.3} parent=39 // pred_region
        %p966 = scmp.lt.s32.totalorder %s15, 1
        %s967 = scalar_select %p966, %s15, 1
        %s968 = smul.addr %s967, 2
        %s969 = smul.addr %s968, 4
        %s970 = scalar_lea.vmem %s3, %s969
      $region44: #{cnn_forward.3} parent=39 // pred_fallthru
        _
    $region40: #{cnn_forward.3} parent=5 // pred_fallthru
      _
  $region6: #{cnn_forward.3} parent=0 // loop_footer
    %s13 = sadd.s32 1, %s9
  $region7: #{cnn_forward.3} parent=0 // loop_footer_branch
    %8 = sbr.rel target = $region3
  $region8: #{cnn_forward.3} parent=0 // loop_exit
    _

// kernel: cnn_forward.4
$region0: #{cnn_forward.4}
  #allocation0 [shape = 'u32[]', space=smem, size = 0x4, offset = 0x4, fixed_abs, tag = 'smem constant byte address 0x4 - core index']
  #allocation1 [shape = 'u32[144,128]{1,0:T(1,128)}', space=vmem, size = 0x12000, scoped, tag = 'internal scratch']
  %s0 = inlined_call_operand.vmem [shape: bf16[1,256,512], index: 0, kind: input, shape index: {}]
  %s1 = inlined_call_operand.vmem [shape: bf16[64,256], index: 1, kind: input, shape index: {}]
  %s2 = inlined_call_operand.vmem [shape: f32[64,1], index: 2, kind: input, shape index: {}]
  %s3 = inlined_call_operand.vmem [shape: bf16[1,64,128], index: 3, kind: output, shape index: {}]
  %s4 = sld [smem:[#allocation0]]
  $region22: #{cnn_forward.4} parent=0
    _
  %s6 = ssub.s32 1, %s4
  %s7 = scalar_select 0, %s6, %s4
  // Predicated region
  $region2: #{cnn_forward.4} parent=0 // pred_check
    _
  $region3: #{cnn_forward.4} parent=0 // pred_check_branch
    %9 = sbr.rel (0) target = $region5
  $region4: #{cnn_forward.4} parent=0 // pred_region
    _
  $region5: #{cnn_forward.4} parent=0 // pred_fallthru
    _
  // Predicated region
  $region6: #{cnn_forward.4} parent=0 // pred_check
    _
  $region7: #{cnn_forward.4} parent=0 // pred_check_branch
    %11 = sbr.rel (0) target = $region9
  $region8: #{cnn_forward.4} parent=0 // pred_region
    _
  $region9: #{cnn_forward.4} parent=0 // pred_fallthru
    _
  // Predicated region
  $region10: #{cnn_forward.4} parent=0 // pred_check
    _
  $region11: #{cnn_forward.4} parent=0 // pred_check_branch
    %13 = sbr.rel (0) target = $region13
  $region12: #{cnn_forward.4} parent=0 // pred_region
    _
  $region13: #{cnn_forward.4} parent=0 // pred_fallthru
    _
  %v14 = vld [vmem:[%s1] sm:$0xff]
  %v15 = vld [vmem:[%s1 + $0x8] sm:$0xff]
  %v16 = vld [vmem:[%s1 + $0x10] sm:$0xff]
  %v17 = vld [vmem:[%s1 + $0x18] sm:$0xff]
  %v18 = vld [vmem:[%s1 + $0x20] sm:$0xff]
  %v19 = vld [vmem:[%s1 + $0x28] sm:$0xff]
  %v20 = vld [vmem:[%s1 + $0x30] sm:$0xff]
  %v21 = vld [vmem:[%s1 + $0x38] sm:$0xff]
  %v22 = vld [vmem:[%s0] sm:$0xff]
  %v23 = vld [vmem:[%s0 + $0x8] sm:$0xff]
  %v24 = vld [vmem:[%s0 + $0x10] sm:$0xff]
  %v25 = vld [vmem:[%s0 + $0x18] sm:$0xff]
  %v26 = vld [vmem:[%s0 + $0x20] sm:$0xff]
  %v27 = vld [vmem:[%s0 + $0x28] sm:$0xff]
  %v28 = vld [vmem:[%s0 + $0x30] sm:$0xff]
  %v29 = vld [vmem:[%s0 + $0x38] sm:$0xff]
  %v30 = vld [vmem:[%s0 + $0x40] sm:$0xff]
  %v31 = vld [vmem:[%s0 + $0x48] sm:$0xff]
  %v32 = vld [vmem:[%s0 + $0x50] sm:$0xff]
  %v33 = vld [vmem:[%s0 + $0x58] sm:$0xff]
  %v34 = vld [vmem:[%s0 + $0x60] sm:$0xff]
  %v35 = vld [vmem:[%s0 + $0x68] sm:$0xff]
  %v36 = vld [vmem:[%s0 + $0x70] sm:$0xff]
  %v37 = vld [vmem:[%s0 + $0x78] sm:$0xff]
  %v38 = vld [vmem:[%s0 + $0x80] sm:$0xff]
  %v39 = vld [vmem:[%s0 + $0x88] sm:$0xff]
  %v40 = vld [vmem:[%s0 + $0x90] sm:$0xff]
  %v41 = vld [vmem:[%s0 + $0x98] sm:$0xff]
  %v42 = vld [vmem:[%s0 + $0xa0] sm:$0xff]
  %v43 = vld [vmem:[%s0 + $0xa8] sm:$0xff]
  %v44 = vld [vmem:[%s0 + $0xb0] sm:$0xff]
  %v45 = vld [vmem:[%s0 + $0xb8] sm:$0xff]
  %v46 = vld [vmem:[%s0 + $0xc0] sm:$0xff]
  %v47 = vld [vmem:[%s0 + $0xc8] sm:$0xff]
  %v48 = vld [vmem:[%s0 + $0xd0] sm:$0xff]
  %v49 = vld [vmem:[%s0 + $0xd8] sm:$0xff]
  %v50 = vld [vmem:[%s0 + $0xe0] sm:$0xff]
  %v51 = vld [vmem:[%s0 + $0xe8] sm:$0xff]
  %v52 = vld [vmem:[%s0 + $0xf0] sm:$0xff]
  %v53 = vld [vmem:[%s0 + $0xf8] sm:$0xff]
  %v54 = vld [vmem:[%s0 + $0x100] sm:$0xff]
  %v55 = vld [vmem:[%s0 + $0x108] sm:$0xff]
  %v56 = vld [vmem:[%s0 + $0x110] sm:$0xff]
  %v57 = vld [vmem:[%s0 + $0x118] sm:$0xff]
  %v58 = vld [vmem:[%s0 + $0x120] sm:$0xff]
  %v59 = vld [vmem:[%s0 + $0x128] sm:$0xff]
  %v60 = vld [vmem:[%s0 + $0x130] sm:$0xff]
  %v61 = vld [vmem:[%s0 + $0x138] sm:$0xff]
  %v62 = vld [vmem:[%s0 + $0x140] sm:$0xff]
  %v63 = vld [vmem:[%s0 + $0x148] sm:$0xff]
  %v64 = vld [vmem:[%s0 + $0x150] sm:$0xff]
  %v65 = vld [vmem:[%s0 + $0x158] sm:$0xff]
  %v66 = vld [vmem:[%s0 + $0x160] sm:$0xff]
  %v67 = vld [vmem:[%s0 + $0x168] sm:$0xff]
  %v68 = vld [vmem:[%s0 + $0x170] sm:$0xff]
  %v69 = vld [vmem:[%s0 + $0x178] sm:$0xff]
  %v70 = vld [vmem:[%s0 + $0x180] sm:$0xff]
  %v71 = vld [vmem:[%s0 + $0x188] sm:$0xff]
  %v72 = vld [vmem:[%s0 + $0x190] sm:$0xff]
  %v73 = vld [vmem:[%s0 + $0x198] sm:$0xff]
  %v74 = vld [vmem:[%s0 + $0x1a0] sm:$0xff]
  %v75 = vld [vmem:[%s0 + $0x1a8] sm:$0xff]
  %v76 = vld [vmem:[%s0 + $0x1b0] sm:$0xff]
  %v77 = vld [vmem:[%s0 + $0x1b8] sm:$0xff]
  %v78 = vld [vmem:[%s0 + $0x1c0] sm:$0xff]
  %v79 = vld [vmem:[%s0 + $0x1c8] sm:$0xff]
  %v80 = vld [vmem:[%s0 + $0x1d0] sm:$0xff]
  %v81 = vld [vmem:[%s0 + $0x1d8] sm:$0xff]
  %v82 = vld [vmem:[%s0 + $0x1e0] sm:$0xff]
  %v83 = vld [vmem:[%s0 + $0x1e8] sm:$0xff]
  %v84 = vld [vmem:[%s0 + $0x1f0] sm:$0xff]
  %v85 = vld [vmem:[%s0 + $0x1f8] sm:$0xff]
  %v86 = vld [vmem:[%s2] sm:$0xff]
  %v87 = vld [vmem:[%s2 + $0x8] sm:$0xff]
  %v88 = vld [vmem:[%s2 + $0x10] sm:$0xff]
  %v89 = vld [vmem:[%s2 + $0x18] sm:$0xff]
  %v90 = vld [vmem:[%s2 + $0x20] sm:$0xff]
  %v91 = vld [vmem:[%s2 + $0x28] sm:$0xff]
  %v92 = vld [vmem:[%s2 + $0x30] sm:$0xff]
  %v93 = vld [vmem:[%s2 + $0x38] sm:$0xff]
  %95 = vset.pattern.permute.xlu0 0
  %96 = vperm.xlu0 %95, %v86
  %v97 = vpop.permute.xlu0 %96
  %100 = vset.pattern.permute.xlu0 0
  %101 = vperm.xlu0 %100, %v87
  %v102 = vpop.permute.xlu0 %101
  %105 = vset.pattern.permute.xlu0 0
  %106 = vperm.xlu0 %105, %v88
  %v107 = vpop.permute.xlu0 %106
  %110 = vset.pattern.permute.xlu0 0
  %111 = vperm.xlu0 %110, %v89
  %v112 = vpop.permute.xlu0 %111
  %115 = vset.pattern.permute.xlu0 0
  %116 = vperm.xlu0 %115, %v90
  %v117 = vpop.permute.xlu0 %116
  %120 = vset.pattern.permute.xlu0 0
  %121 = vperm.xlu0 %120, %v91
  %v122 = vpop.permute.xlu0 %121
  %125 = vset.pattern.permute.xlu0 0
  %126 = vperm.xlu0 %125, %v92
  %v127 = vpop.permute.xlu0 %126
  %130 = vset.pattern.permute.xlu0 0
  %131 = vperm.xlu0 %130, %v93
  %v132 = vpop.permute.xlu0 %131
  %v142 = vunpack.c.l.b16 %v14
  %v143 = vunpack.c.h.b16 %v14
  %v144 = vunpack.c.l.b16 %v15
  %v145 = vunpack.c.h.b16 %v15
  %v146 = vunpack.c.l.b16 %v16
  %v147 = vunpack.c.h.b16 %v16
  %v148 = vunpack.c.l.b16 %v17
  %v149 = vunpack.c.h.b16 %v17
  %v150 = vunpack.c.l.b16 %v18
  %v151 = vunpack.c.h.b16 %v18
  %v152 = vunpack.c.l.b16 %v19
  %v153 = vunpack.c.h.b16 %v19
  %v154 = vunpack.c.l.b16 %v20
  %v155 = vunpack.c.h.b16 %v20
  %v156 = vunpack.c.l.b16 %v21
  %v157 = vunpack.c.h.b16 %v21
  %v158 = vpack.c.b16 %v144, %v142
  %v159 = vpack.c.b16 %v145, %v143
  %v160 = vpack.c.b16 %v148, %v146
  %v161 = vpack.c.b16 %v149, %v147
  %v162 = vpack.c.b16 %v152, %v150
  %v163 = vpack.c.b16 %v153, %v151
  %v164 = vpack.c.b16 %v156, %v154
  %v165 = vpack.c.b16 %v157, %v155
  %v238 = vunpack.c.l.b16 %v22
  %v239 = vunpack.c.h.b16 %v22
  %v240 = vunpack.c.l.b16 %v23
  %v241 = vunpack.c.h.b16 %v23
  %v242 = vunpack.c.l.b16 %v24
  %v243 = vunpack.c.h.b16 %v24
  %v244 = vunpack.c.l.b16 %v25
  %v245 = vunpack.c.h.b16 %v25
  %v246 = vunpack.c.l.b16 %v26
  %v247 = vunpack.c.h.b16 %v26
  %v248 = vunpack.c.l.b16 %v27
  %v249 = vunpack.c.h.b16 %v27
  %v250 = vunpack.c.l.b16 %v28
  %v251 = vunpack.c.h.b16 %v28
  %v252 = vunpack.c.l.b16 %v29
  %v253 = vunpack.c.h.b16 %v29
  %v254 = vunpack.c.l.b16 %v30
  %v255 = vunpack.c.h.b16 %v30
  %v256 = vunpack.c.l.b16 %v31
  %v257 = vunpack.c.h.b16 %v31
  %v258 = vunpack.c.l.b16 %v32
  %v259 = vunpack.c.h.b16 %v32
  %v260 = vunpack.c.l.b16 %v33
  %v261 = vunpack.c.h.b16 %v33
  %v262 = vunpack.c.l.b16 %v34
  %v263 = vunpack.c.h.b16 %v34
  %v264 = vunpack.c.l.b16 %v35
  %v265 = vunpack.c.h.b16 %v35
  %v266 = vunpack.c.l.b16 %v36
  %v267 = vunpack.c.h.b16 %v36
  %v268 = vunpack.c.l.b16 %v37
  %v269 = vunpack.c.h.b16 %v37
  %v270 = vunpack.c.l.b16 %v38
  %v271 = vunpack.c.h.b16 %v38
  %v272 = vunpack.c.l.b16 %v39
  %v273 = vunpack.c.h.b16 %v39
  %v274 = vunpack.c.l.b16 %v40
  %v275 = vunpack.c.h.b16 %v40
  %v276 = vunpack.c.l.b16 %v41
  %v277 = vunpack.c.h.b16 %v41
  %v278 = vunpack.c.l.b16 %v42
  %v279 = vunpack.c.h.b16 %v42
  %v280 = vunpack.c.l.b16 %v43
  %v281 = vunpack.c.h.b16 %v43
  %v282 = vunpack.c.l.b16 %v44
  %v283 = vunpack.c.h.b16 %v44
  %v284 = vunpack.c.l.b16 %v45
  %v285 = vunpack.c.h.b16 %v45
  %v286 = vunpack.c.l.b16 %v46
  %v287 = vunpack.c.h.b16 %v46
  %v288 = vunpack.c.l.b16 %v47
  %v289 = vunpack.c.h.b16 %v47
  %v290 = vunpack.c.l.b16 %v48
  %v291 = vunpack.c.h.b16 %v48
  %v292 = vunpack.c.l.b16 %v49
  %v293 = vunpack.c.h.b16 %v49
  %v294 = vunpack.c.l.b16 %v50
  %v295 = vunpack.c.h.b16 %v50
  %v296 = vunpack.c.l.b16 %v51
  %v297 = vunpack.c.h.b16 %v51
  %v298 = vunpack.c.l.b16 %v52
  %v299 = vunpack.c.h.b16 %v52
  %v300 = vunpack.c.l.b16 %v53
  %v301 = vunpack.c.h.b16 %v53
  %v302 = vunpack.c.l.b16 %v54
  %v303 = vunpack.c.h.b16 %v54
  %v304 = vunpack.c.l.b16 %v55
  %v305 = vunpack.c.h.b16 %v55
  %v306 = vunpack.c.l.b16 %v56
  %v307 = vunpack.c.h.b16 %v56
  %v308 = vunpack.c.l.b16 %v57
  %v309 = vunpack.c.h.b16 %v57
  %v310 = vunpack.c.l.b16 %v58
  %v311 = vunpack.c.h.b16 %v58
  %v312 = vunpack.c.l.b16 %v59
  %v313 = vunpack.c.h.b16 %v59
  %v314 = vunpack.c.l.b16 %v60
  %v315 = vunpack.c.h.b16 %v60
  %v316 = vunpack.c.l.b16 %v61
  %v317 = vunpack.c.h.b16 %v61
  %v318 = vunpack.c.l.b16 %v62
  %v319 = vunpack.c.h.b16 %v62
  %v320 = vunpack.c.l.b16 %v63
  %v321 = vunpack.c.h.b16 %v63
  %v322 = vunpack.c.l.b16 %v64
  %v323 = vunpack.c.h.b16 %v64
  %v324 = vunpack.c.l.b16 %v65
  %v325 = vunpack.c.h.b16 %v65
  %v326 = vunpack.c.l.b16 %v66
  %v327 = vunpack.c.h.b16 %v66
  %v328 = vunpack.c.l.b16 %v67
  %v329 = vunpack.c.h.b16 %v67
  %v330 = vunpack.c.l.b16 %v68
  %v331 = vunpack.c.h.b16 %v68
  %v332 = vunpack.c.l.b16 %v69
  %v333 = vunpack.c.h.b16 %v69
  %v334 = vunpack.c.l.b16 %v70
  %v335 = vunpack.c.h.b16 %v70
  %v336 = vunpack.c.l.b16 %v71
  %v337 = vunpack.c.h.b16 %v71
  %v338 = vunpack.c.l.b16 %v72
  %v339 = vunpack.c.h.b16 %v72
  %v340 = vunpack.c.l.b16 %v73
  %v341 = vunpack.c.h.b16 %v73
  %v342 = vunpack.c.l.b16 %v74
  %v343 = vunpack.c.h.b16 %v74
  %v344 = vunpack.c.l.b16 %v75
  %v345 = vunpack.c.h.b16 %v75
  %v346 = vunpack.c.l.b16 %v76
  %v347 = vunpack.c.h.b16 %v76
  %v348 = vunpack.c.l.b16 %v77
  %v349 = vunpack.c.h.b16 %v77
  %v350 = vunpack.c.l.b16 %v78
  %v351 = vunpack.c.h.b16 %v78
  %v352 = vunpack.c.l.b16 %v79
  %v353 = vunpack.c.h.b16 %v79
  %v354 = vunpack.c.l.b16 %v80
  %v355 = vunpack.c.h.b16 %v80
  %v356 = vunpack.c.l.b16 %v81
  %v357 = vunpack.c.h.b16 %v81
  %v358 = vunpack.c.l.b16 %v82
  %v359 = vunpack.c.h.b16 %v82
  %v360 = vunpack.c.l.b16 %v83
  %v361 = vunpack.c.h.b16 %v83
  %v362 = vunpack.c.l.b16 %v84
  %v363 = vunpack.c.h.b16 %v84
  %v364 = vunpack.c.l.b16 %v85
  %v365 = vunpack.c.h.b16 %v85
  %v366 = vpack.c.b16 %v242, %v238
  %v367 = vpack.c.b16 %v243, %v239
  %v368 = vpack.c.b16 %v244, %v240
  %v369 = vpack.c.b16 %v245, %v241
  %v370 = vpack.c.b16 %v250, %v246
  %v371 = vpack.c.b16 %v251, %v247
  %v372 = vpack.c.b16 %v252, %v248
  %v373 = vpack.c.b16 %v253, %v249
  %v374 = vpack.c.b16 %v258, %v254
  %v375 = vpack.c.b16 %v259, %v255
  %v376 = vpack.c.b16 %v260, %v256
  %v377 = vpack.c.b16 %v261, %v257
  %v378 = vpack.c.b16 %v266, %v262
  %v379 = vpack.c.b16 %v267, %v263
  %v380 = vpack.c.b16 %v268, %v264
  %v381 = vpack.c.b16 %v269, %v265
  %v382 = vpack.c.b16 %v274, %v270
  %v383 = vpack.c.b16 %v275, %v271
  %v384 = vpack.c.b16 %v276, %v272
  %v385 = vpack.c.b16 %v277, %v273
  %v386 = vpack.c.b16 %v282, %v278
  %v387 = vpack.c.b16 %v283, %v279
  %v388 = vpack.c.b16 %v284, %v280
  %v389 = vpack.c.b16 %v285, %v281
  %v390 = vpack.c.b16 %v290, %v286
  %v391 = vpack.c.b16 %v291, %v287
  %v392 = vpack.c.b16 %v292, %v288
  %v393 = vpack.c.b16 %v293, %v289
  %v394 = vpack.c.b16 %v298, %v294
  %v395 = vpack.c.b16 %v299, %v295
  %v396 = vpack.c.b16 %v300, %v296
  %v397 = vpack.c.b16 %v301, %v297
  %v398 = vpack.c.b16 %v306, %v302
  %v399 = vpack.c.b16 %v307, %v303
  %v400 = vpack.c.b16 %v308, %v304
  %v401 = vpack.c.b16 %v309, %v305
  %v402 = vpack.c.b16 %v314, %v310
  %v403 = vpack.c.b16 %v315, %v311
  %v404 = vpack.c.b16 %v316, %v312
  %v405 = vpack.c.b16 %v317, %v313
  %v406 = vpack.c.b16 %v322, %v318
  %v407 = vpack.c.b16 %v323, %v319
  %v408 = vpack.c.b16 %v324, %v320
  %v409 = vpack.c.b16 %v325, %v321
  %v410 = vpack.c.b16 %v330, %v326
  %v411 = vpack.c.b16 %v331, %v327
  %v412 = vpack.c.b16 %v332, %v328
  %v413 = vpack.c.b16 %v333, %v329
  %v414 = vpack.c.b16 %v338, %v334
  %v415 = vpack.c.b16 %v339, %v335
  %v416 = vpack.c.b16 %v340, %v336
  %v417 = vpack.c.b16 %v341, %v337
  %v418 = vpack.c.b16 %v346, %v342
  %v419 = vpack.c.b16 %v347, %v343
  %v420 = vpack.c.b16 %v348, %v344
  %v421 = vpack.c.b16 %v349, %v345
  %v422 = vpack.c.b16 %v354, %v350
  %v423 = vpack.c.b16 %v355, %v351
  %v424 = vpack.c.b16 %v356, %v352
  %v425 = vpack.c.b16 %v357, %v353
  %v426 = vpack.c.b16 %v362, %v358
  %v427 = vpack.c.b16 %v363, %v359
  %v428 = vpack.c.b16 %v364, %v360
  %v429 = vpack.c.b16 %v365, %v361
  %494 = vmatprep.subr.bf16.mxu0 %v367
  %495 = vmatpush1.bf16.msra.mxu0 %v366
  %496 = vmatprep.subr.bf16.mxu0 %v371
  %497 = vmatpush1.bf16.msra.mxu0 %v370
  %498 = vmatprep.subr.bf16.mxu0 %v375
  %499 = vmatpush1.bf16.msra.mxu0 %v374
  %500 = vmatprep.subr.bf16.mxu0 %v379
  %501 = vmatpush1.bf16.msra.mxu0 %v378
  %502 = vmatprep.subr.bf16.mxu0 %v383
  %503 = vmatpush1.bf16.msra.mxu0 %v382
  %504 = vmatprep.subr.bf16.mxu0 %v387
  %505 = vmatpush1.bf16.msra.mxu0 %v386
  %506 = vmatprep.subr.bf16.mxu0 %v391
  %507 = vmatpush1.bf16.msra.mxu0 %v390
  %508 = vmatprep.subr.bf16.mxu0 %v395
  %509 = vmatpush1.bf16.msra.mxu0 %v394
  %510 = vmatprep.subr.bf16.mxu0 %v399
  %511 = vmatpush1.bf16.msra.mxu0 %v398
  %512 = vmatprep.subr.bf16.mxu0 %v403
  %513 = vmatpush1.bf16.msra.mxu0 %v402
  %514 = vmatprep.subr.bf16.mxu0 %v407
  %515 = vmatpush1.bf16.msra.mxu0 %v406
  %516 = vmatprep.subr.bf16.mxu0 %v411
  %517 = vmatpush1.bf16.msra.mxu0 %v410
  %518 = vmatprep.subr.bf16.mxu0 %v415
  %519 = vmatpush1.bf16.msra.mxu0 %v414
  %520 = vmatprep.subr.bf16.mxu0 %v419
  %521 = vmatpush1.bf16.msra.mxu0 %v418
  %522 = vmatprep.subr.bf16.mxu0 %v423
  %523 = vmatpush1.bf16.msra.mxu0 %v422
  %524 = vmatprep.subr.bf16.mxu0 %v427
  %525 = vmatpush1.bf16.msra.mxu0 %v426
  %526 = vmatprep.mubr.bf16.mxu0 %v159
  %527 = vmatmul.mubr.bf16.gmra.mrb[0].mxu0 %v158
  %v528 = vpop.f32.mrb[0].mxu0
  %v529 = vadd.f32 %v97, %v528
  %v530 = vpop.f32.mrb[0].mxu0
  %v531 = vadd.f32 %v97, %v530
  %v532 = vpop.f32.mrb[0].mxu0
  %v533 = vadd.f32 %v102, %v532
  %v534 = vpop.f32.mrb[0].mxu0
  %v535 = vadd.f32 %v102, %v534
  %536 = vmatprep.mubr.bf16.mxu0 %v161
  %537 = vmatmul.mubr.bf16.gmra.mrb[0].mxu0 %v160
  %v538 = vpop.f32.mrb[0].mxu0
  %v539 = vadd.f32 %v107, %v538
  %v540 = vpop.f32.mrb[0].mxu0
  %v541 = vadd.f32 %v107, %v540
  %v542 = vpop.f32.mrb[0].mxu0
  %v543 = vadd.f32 %v112, %v542
  %v544 = vpop.f32.mrb[0].mxu0
  %v545 = vadd.f32 %v112, %v544
  %546 = vmatprep.mubr.bf16.mxu0 %v163
  %547 = vmatmul.mubr.bf16.gmra.mrb[0].mxu0 %v162
  %v548 = vpop.f32.mrb[0].mxu0
  %v549 = vadd.f32 %v117, %v548
  %v550 = vpop.f32.mrb[0].mxu0
  %v551 = vadd.f32 %v117, %v550
  %v552 = vpop.f32.mrb[0].mxu0
  %v553 = vadd.f32 %v122, %v552
  %v554 = vpop.f32.mrb[0].mxu0
  %v555 = vadd.f32 %v122, %v554
  %556 = vmatprep.mubr.bf16.mxu0 %v165
  %557 = vmatmul.mubr.bf16.gmra.mrb[0].mxu0 %v164
  %v558 = vpop.f32.mrb[0].mxu0
  %v559 = vadd.f32 %v127, %v558
  %v560 = vpop.f32.mrb[0].mxu0
  %v561 = vadd.f32 %v127, %v560
  %v562 = vpop.f32.mrb[0].mxu0
  %v563 = vadd.f32 %v132, %v562
  %v564 = vpop.f32.mrb[0].mxu0
  %v565 = vadd.f32 %v132, %v564
  %566 = vdwg.mxu0
  %567 = vmatprep.subr.bf16.mxu0 %v369
  %568 = vmatpush1.bf16.msra.mxu0 %v368
  %569 = vmatprep.subr.bf16.mxu0 %v373
  %570 = vmatpush1.bf16.msra.mxu0 %v372
  %571 = vmatprep.subr.bf16.mxu0 %v377
  %572 = vmatpush1.bf16.msra.mxu0 %v376
  %573 = vmatprep.subr.bf16.mxu0 %v381
  %574 = vmatpush1.bf16.msra.mxu0 %v380
  %575 = vmatprep.subr.bf16.mxu0 %v385
  %576 = vmatpush1.bf16.msra.mxu0 %v384
  %577 = vmatprep.subr.bf16.mxu0 %v389
  %578 = vmatpush1.bf16.msra.mxu0 %v388
  %579 = vmatprep.subr.bf16.mxu0 %v393
  %580 = vmatpush1.bf16.msra.mxu0 %v392
  %581 = vmatprep.subr.bf16.mxu0 %v397
  %582 = vmatpush1.bf16.msra.mxu0 %v396
  %583 = vmatprep.subr.bf16.mxu0 %v401
  %584 = vmatpush1.bf16.msra.mxu0 %v400
  %585 = vmatprep.subr.bf16.mxu0 %v405
  %586 = vmatpush1.bf16.msra.mxu0 %v404
  %587 = vmatprep.subr.bf16.mxu0 %v409
  %588 = vmatpush1.bf16.msra.mxu0 %v408
  %589 = vmatprep.subr.bf16.mxu0 %v413
  %590 = vmatpush1.bf16.msra.mxu0 %v412
  %591 = vmatprep.subr.bf16.mxu0 %v417
  %592 = vmatpush1.bf16.msra.mxu0 %v416
  %593 = vmatprep.subr.bf16.mxu0 %v421
  %594 = vmatpush1.bf16.msra.mxu0 %v420
  %595 = vmatprep.subr.bf16.mxu0 %v425
  %596 = vmatpush1.bf16.msra.mxu0 %v424
  %597 = vmatprep.subr.bf16.mxu0 %v429
  %598 = vmatpush1.bf16.msra.mxu0 %v428
  %599 = vmatprep.mubr.bf16.mxu0 %v159
  %600 = vmatmul.mubr.bf16.gmra.mrb[0].mxu0 %v158
  %v601 = vpop.f32.mrb[0].mxu0
  %v602 = vadd.f32 %v97, %v601
  %v603 = vpop.f32.mrb[0].mxu0
  %v604 = vadd.f32 %v97, %v603
  %v605 = vpop.f32.mrb[0].mxu0
  %v606 = vadd.f32 %v102, %v605
  %v607 = vpop.f32.mrb[0].mxu0
  %v608 = vadd.f32 %v102, %v607
  %609 = vmatprep.mubr.bf16.mxu0 %v161
  %610 = vmatmul.mubr.bf16.gmra.mrb[0].mxu0 %v160
  %v611 = vpop.f32.mrb[0].mxu0
  %v612 = vadd.f32 %v107, %v611
  %v613 = vpop.f32.mrb[0].mxu0
  %v614 = vadd.f32 %v107, %v613
  %v615 = vpop.f32.mrb[0].mxu0
  %v616 = vadd.f32 %v112, %v615
  %v617 = vpop.f32.mrb[0].mxu0
  %v618 = vadd.f32 %v112, %v617
  %619 = vmatprep.mubr.bf16.mxu0 %v163
  %620 = vmatmul.mubr.bf16.gmra.mrb[0].mxu0 %v162
  %v621 = vpop.f32.mrb[0].mxu0
  %v622 = vadd.f32 %v117, %v621
  %v623 = vpop.f32.mrb[0].mxu0
  %v624 = vadd.f32 %v117, %v623
  %v625 = vpop.f32.mrb[0].mxu0
  %v626 = vadd.f32 %v122, %v625
  %v627 = vpop.f32.mrb[0].mxu0
  %v628 = vadd.f32 %v122, %v627
  %629 = vmatprep.mubr.bf16.mxu0 %v165
  %630 = vmatmul.mubr.bf16.gmra.mrb[0].mxu0 %v164
  %v631 = vpop.f32.mrb[0].mxu0
  %v632 = vadd.f32 %v127, %v631
  %v633 = vpop.f32.mrb[0].mxu0
  %v634 = vadd.f32 %v127, %v633
  %v635 = vpop.f32.mrb[0].mxu0
  %v636 = vadd.f32 %v132, %v635
  %v637 = vpop.f32.mrb[0].mxu0
  %v638 = vadd.f32 %v132, %v637
  %639 = vdwg.mxu0
  %v640 = vmul.f32 %v529, 0.70710677
  %v641 = vmul.f32 %v531, 0.70710677
  %v642 = vmul.f32 %v602, 0.70710677
  %v643 = vmul.f32 %v604, 0.70710677
  %v644 = vmul.f32 %v533, 0.70710677
  %v645 = vmul.f32 %v535, 0.70710677
  %v646 = vmul.f32 %v606, 0.70710677
  %v647 = vmul.f32 %v608, 0.70710677
  %v648 = vmul.f32 %v539, 0.70710677
  %v649 = vmul.f32 %v541, 0.70710677
  %v650 = vmul.f32 %v612, 0.70710677
  %v651 = vmul.f32 %v614, 0.70710677
  %v652 = vmul.f32 %v543, 0.70710677
  %v653 = vmul.f32 %v545, 0.70710677
  %v654 = vmul.f32 %v616, 0.70710677
  %v655 = vmul.f32 %v618, 0.70710677
  %v656 = vmul.f32 %v549, 0.70710677
  %v657 = vmul.f32 %v551, 0.70710677
  %v658 = vmul.f32 %v622, 0.70710677
  %v659 = vmul.f32 %v624, 0.70710677
  %v660 = vmul.f32 %v553, 0.70710677
  %v661 = vmul.f32 %v555, 0.70710677
  %v662 = vmul.f32 %v626, 0.70710677
  %v663 = vmul.f32 %v628, 0.70710677
  %v664 = vmul.f32 %v559, 0.70710677
  %v665 = vmul.f32 %v561, 0.70710677
  %v666 = vmul.f32 %v632, 0.70710677
  %v667 = vmul.f32 %v634, 0.70710677
  %v668 = vmul.f32 %v563, 0.70710677
  %v669 = vmul.f32 %v565, 0.70710677
  %v670 = vmul.f32 %v636, 0.70710677
  %v671 = vmul.f32 %v638, 0.70710677
  %v672 = vand.u32 2147483647, %v640
  %v673 = vand.u32 2147483647, %v641
  %v674 = vand.u32 2147483647, %v642
  %v675 = vand.u32 2147483647, %v643
  %v676 = vand.u32 2147483647, %v644
  %v677 = vand.u32 2147483647, %v645
  %v678 = vand.u32 2147483647, %v646
  %v679 = vand.u32 2147483647, %v647
  %v680 = vand.u32 2147483647, %v648
  %v681 = vand.u32 2147483647, %v649
  %v682 = vand.u32 2147483647, %v650
  %v683 = vand.u32 2147483647, %v651
  %v684 = vand.u32 2147483647, %v652
  %v685 = vand.u32 2147483647, %v653
  %v686 = vand.u32 2147483647, %v654
  %v687 = vand.u32 2147483647, %v655
  %v688 = vand.u32 2147483647, %v656
  %v689 = vand.u32 2147483647, %v657
  %v690 = vand.u32 2147483647, %v658
  %v691 = vand.u32 2147483647, %v659
  %v692 = vand.u32 2147483647, %v660
  %v693 = vand.u32 2147483647, %v661
  %v694 = vand.u32 2147483647, %v662
  %v695 = vand.u32 2147483647, %v663
  %v696 = vand.u32 2147483647, %v664
  %v697 = vand.u32 2147483647, %v665
  %v698 = vand.u32 2147483647, %v666
  %v699 = vand.u32 2147483647, %v667
  %v700 = vand.u32 2147483647, %v668
  %v701 = vand.u32 2147483647, %v669
  %v702 = vand.u32 2147483647, %v670
  %v703 = vand.u32 2147483647, %v671
  %v704 = vmul.f32 %v672, 0.3275911
  %v705 = vmul.f32 %v673, 0.3275911
  %v706 = vmul.f32 %v674, 0.3275911
  %v707 = vmul.f32 %v675, 0.3275911
  %v708 = vmul.f32 %v676, 0.3275911
  %v709 = vmul.f32 %v677, 0.3275911
  %v710 = vmul.f32 %v678, 0.3275911
  %v711 = vmul.f32 %v679, 0.3275911
  %v712 = vmul.f32 %v680, 0.3275911
  %v713 = vmul.f32 %v681, 0.3275911
  %v714 = vmul.f32 %v682, 0.3275911
  %v715 = vmul.f32 %v683, 0.3275911
  %v716 = vmul.f32 %v684, 0.3275911
  %v717 = vmul.f32 %v685, 0.3275911
  %v718 = vmul.f32 %v686, 0.3275911
  %v719 = vmul.f32 %v687, 0.3275911
  %v720 = vmul.f32 %v688, 0.3275911
  %v721 = vmul.f32 %v689, 0.3275911
  %v722 = vmul.f32 %v690, 0.3275911
  %v723 = vmul.f32 %v691, 0.3275911
  %v724 = vmul.f32 %v692, 0.3275911
  %v725 = vmul.f32 %v693, 0.3275911
  %v726 = vmul.f32 %v694, 0.3275911
  %v727 = vmul.f32 %v695, 0.3275911
  %v728 = vmul.f32 %v696, 0.3275911
  %v729 = vmul.f32 %v697, 0.3275911
  %v730 = vmul.f32 %v698, 0.3275911
  %v731 = vmul.f32 %v699, 0.3275911
  %v732 = vmul.f32 %v700, 0.3275911
  %v733 = vmul.f32 %v701, 0.3275911
  %v734 = vmul.f32 %v702, 0.3275911
  %v735 = vmul.f32 %v703, 0.3275911
  %v736 = vadd.f32 %v704, 1.0
  %v737 = vadd.f32 %v705, 1.0
  %v738 = vadd.f32 %v706, 1.0
  %v739 = vadd.f32 %v707, 1.0
  %v740 = vadd.f32 %v708, 1.0
  %v741 = vadd.f32 %v709, 1.0
  %v742 = vadd.f32 %v710, 1.0
  %v743 = vadd.f32 %v711, 1.0
  %v744 = vadd.f32 %v712, 1.0
  %v745 = vadd.f32 %v713, 1.0
  %v746 = vadd.f32 %v714, 1.0
  %v747 = vadd.f32 %v715, 1.0
  %v748 = vadd.f32 %v716, 1.0
  %v749 = vadd.f32 %v717, 1.0
  %v750 = vadd.f32 %v718, 1.0
  %v751 = vadd.f32 %v719, 1.0
  %v752 = vadd.f32 %v720, 1.0
  %v753 = vadd.f32 %v721, 1.0
  %v754 = vadd.f32 %v722, 1.0
  %v755 = vadd.f32 %v723, 1.0
  %v756 = vadd.f32 %v724, 1.0
  %v757 = vadd.f32 %v725, 1.0
  %v758 = vadd.f32 %v726, 1.0
  %v759 = vadd.f32 %v727, 1.0
  %v760 = vadd.f32 %v728, 1.0
  %v761 = vadd.f32 %v729, 1.0
  %v762 = vadd.f32 %v730, 1.0
  %v763 = vadd.f32 %v731, 1.0
  %v764 = vadd.f32 %v732, 1.0
  %v765 = vadd.f32 %v733, 1.0
  %v766 = vadd.f32 %v734, 1.0
  %v767 = vadd.f32 %v735, 1.0
  %v768 = vrcp.pop %v736
  %v769 = vrcp.pop %v737
  %v770 = vrcp.pop %v738
  %v771 = vrcp.pop %v739
  %v772 = vrcp.pop %v740
  %v773 = vrcp.pop %v741
  %v774 = vrcp.pop %v742
  %v775 = vrcp.pop %v743
  %v776 = vrcp.pop %v744
  %v777 = vrcp.pop %v745
  %v778 = vrcp.pop %v746
  %v779 = vrcp.pop %v747
  %v780 = vrcp.pop %v748
  %v781 = vrcp.pop %v749
  %v782 = vrcp.pop %v750
  %v783 = vrcp.pop %v751
  %v784 = vrcp.pop %v752
  %v785 = vrcp.pop %v753
  %v786 = vrcp.pop %v754
  %v787 = vrcp.pop %v755
  %v788 = vrcp.pop %v756
  %v789 = vrcp.pop %v757
  %v790 = vrcp.pop %v758
  %v791 = vrcp.pop %v759
  %v792 = vrcp.pop %v760
  %v793 = vrcp.pop %v761
  %v794 = vrcp.pop %v762
  %v795 = vrcp.pop %v763
  %v796 = vrcp.pop %v764
  %v797 = vrcp.pop %v765
  %v798 = vrcp.pop %v766
  %v799 = vrcp.pop %v767
  %v800 = vmul.f32 %v768, 1.0614054
  %v801 = vmul.f32 %v769, 1.0614054
  %v802 = vmul.f32 %v770, 1.0614054
  %v803 = vmul.f32 %v771, 1.0614054
  %v804 = vmul.f32 %v772, 1.0614054
  %v805 = vmul.f32 %v773, 1.0614054
  %v806 = vmul.f32 %v774, 1.0614054
  %v807 = vmul.f32 %v775, 1.0614054
  %v808 = vmul.f32 %v776, 1.0614054
  %v809 = vmul.f32 %v777, 1.0614054
  %v810 = vmul.f32 %v778, 1.0614054
  %v811 = vmul.f32 %v779, 1.0614054
  %v812 = vmul.f32 %v780, 1.0614054
  %v813 = vmul.f32 %v781, 1.0614054
  %v814 = vmul.f32 %v782, 1.0614054
  %v815 = vmul.f32 %v783, 1.0614054
  %v816 = vmul.f32 %v784, 1.0614054
  %v817 = vmul.f32 %v785, 1.0614054
  %v818 = vmul.f32 %v786, 1.0614054
  %v819 = vmul.f32 %v787, 1.0614054
  %v820 = vmul.f32 %v788, 1.0614054
  %v821 = vmul.f32 %v789, 1.0614054
  %v822 = vmul.f32 %v790, 1.0614054
  %v823 = vmul.f32 %v791, 1.0614054
  %v824 = vmul.f32 %v792, 1.0614054
  %v825 = vmul.f32 %v793, 1.0614054
  %v826 = vmul.f32 %v794, 1.0614054
  %v827 = vmul.f32 %v795, 1.0614054
  %v828 = vmul.f32 %v796, 1.0614054
  %v829 = vmul.f32 %v797, 1.0614054
  %v830 = vmul.f32 %v798, 1.0614054
  %v831 = vmul.f32 %v799, 1.0614054
  %v832 = vsub.f32 %v800, 1.4531521
  %v833 = vsub.f32 %v801, 1.4531521
  %v834 = vsub.f32 %v802, 1.4531521
  %v835 = vsub.f32 %v803, 1.4531521
  %v836 = vsub.f32 %v804, 1.4531521
  %v837 = vsub.f32 %v805, 1.4531521
  %v838 = vsub.f32 %v806, 1.4531521
  %v839 = vsub.f32 %v807, 1.4531521
  %v840 = vsub.f32 %v808, 1.4531521
  %v841 = vsub.f32 %v809, 1.4531521
  %v842 = vsub.f32 %v810, 1.4531521
  %v843 = vsub.f32 %v811, 1.4531521
  %v844 = vsub.f32 %v812, 1.4531521
  %v845 = vsub.f32 %v813, 1.4531521
  %v846 = vsub.f32 %v814, 1.4531521
  %v847 = vsub.f32 %v815, 1.4531521
  %v848 = vsub.f32 %v816, 1.4531521
  %v849 = vsub.f32 %v817, 1.4531521
  %v850 = vsub.f32 %v818, 1.4531521
  %v851 = vsub.f32 %v819, 1.4531521
  %v852 = vsub.f32 %v820, 1.4531521
  %v853 = vsub.f32 %v821, 1.4531521
  %v854 = vsub.f32 %v822, 1.4531521
  %v855 = vsub.f32 %v823, 1.4531521
  %v856 = vsub.f32 %v824, 1.4531521
  %v857 = vsub.f32 %v825, 1.4531521
  %v858 = vsub.f32 %v826, 1.4531521
  %v859 = vsub.f32 %v827, 1.4531521
  %v860 = vsub.f32 %v828, 1.4531521
  %v861 = vsub.f32 %v829, 1.4531521
  %v862 = vsub.f32 %v830, 1.4531521
  %v863 = vsub.f32 %v831, 1.4531521
  %v864 = vmul.f32 %v832, %v768
  %v865 = vmul.f32 %v833, %v769
  %v866 = vmul.f32 %v834, %v770
  %v867 = vmul.f32 %v835, %v771
  %v868 = vmul.f32 %v836, %v772
  %v869 = vmul.f32 %v837, %v773
  %v870 = vmul.f32 %v838, %v774
  %v871 = vmul.f32 %v839, %v775
  %v872 = vmul.f32 %v840, %v776
  %v873 = vmul.f32 %v841, %v777
  %v874 = vmul.f32 %v842, %v778
  %v875 = vmul.f32 %v843, %v779
  %v876 = vmul.f32 %v844, %v780
  %v877 = vmul.f32 %v845, %v781
  %v878 = vmul.f32 %v846, %v782
  %v879 = vmul.f32 %v847, %v783
  %v880 = vmul.f32 %v848, %v784
  %v881 = vmul.f32 %v849, %v785
  %v882 = vmul.f32 %v850, %v786
  %v883 = vmul.f32 %v851, %v787
  %v884 = vmul.f32 %v852, %v788
  %v885 = vmul.f32 %v853, %v789
  %v886 = vmul.f32 %v854, %v790
  %v887 = vmul.f32 %v855, %v791
  %v888 = vmul.f32 %v856, %v792
  %v889 = vmul.f32 %v857, %v793
  %v890 = vmul.f32 %v858, %v794
  %v891 = vmul.f32 %v859, %v795
  %v892 = vmul.f32 %v860, %v796
  %v893 = vmul.f32 %v861, %v797
  %v894 = vmul.f32 %v862, %v798
  %v895 = vmul.f32 %v863, %v799
  %v896 = vadd.f32 %v864, 1.4214138
  %v897 = vadd.f32 %v865, 1.4214138
  %v898 = vadd.f32 %v866, 1.4214138
  %v899 = vadd.f32 %v867, 1.4214138
  %v900 = vadd.f32 %v868, 1.4214138
  %v901 = vadd.f32 %v869, 1.4214138
  %v902 = vadd.f32 %v870, 1.4214138
  %v903 = vadd.f32 %v871, 1.4214138
  %v904 = vadd.f32 %v872, 1.4214138
  %v905 = vadd.f32 %v873, 1.4214138
  %v906 = vadd.f32 %v874, 1.4214138
  %v907 = vadd.f32 %v875, 1.4214138
  %v908 = vadd.f32 %v876, 1.4214138
  %v909 = vadd.f32 %v877, 1.4214138
  %v910 = vadd.f32 %v878, 1.4214138
  %v911 = vadd.f32 %v879, 1.4214138
  %v912 = vadd.f32 %v880, 1.4214138
  %v913 = vadd.f32 %v881, 1.4214138
  %v914 = vadd.f32 %v882, 1.4214138
  %v915 = vadd.f32 %v883, 1.4214138
  %v916 = vadd.f32 %v884, 1.4214138
  %v917 = vadd.f32 %v885, 1.4214138
  %v918 = vadd.f32 %v886, 1.4214138
  %v919 = vadd.f32 %v887, 1.4214138
  %v920 = vadd.f32 %v888, 1.4214138
  %v921 = vadd.f32 %v889, 1.4214138
  %v922 = vadd.f32 %v890, 1.4214138
  %v923 = vadd.f32 %v891, 1.4214138
  %v924 = vadd.f32 %v892, 1.4214138
  %v925 = vadd.f32 %v893, 1.4214138
  %v926 = vadd.f32 %v894, 1.4214138
  %v927 = vadd.f32 %v895, 1.4214138
  %v928 = vmul.f32 %v896, %v768
  %v929 = vmul.f32 %v897, %v769
  %v930 = vmul.f32 %v898, %v770
  %v931 = vmul.f32 %v899, %v771
  %v932 = vmul.f32 %v900, %v772
  %v933 = vmul.f32 %v901, %v773
  %v934 = vmul.f32 %v902, %v774
  %v935 = vmul.f32 %v903, %v775
  %v936 = vmul.f32 %v904, %v776
  %v937 = vmul.f32 %v905, %v777
  %v938 = vmul.f32 %v906, %v778
  %v939 = vmul.f32 %v907, %v779
  %v940 = vmul.f32 %v908, %v780
  %v941 = vmul.f32 %v909, %v781
  %v942 = vmul.f32 %v910, %v782
  %v943 = vmul.f32 %v911, %v783
  %v944 = vmul.f32 %v912, %v784
  %v945 = vmul.f32 %v913, %v785
  %v946 = vmul.f32 %v914, %v786
  %v947 = vmul.f32 %v915, %v787
  %v948 = vmul.f32 %v916, %v788
  %v949 = vmul.f32 %v917, %v789
  %v950 = vmul.f32 %v918, %v790
  %v951 = vmul.f32 %v919, %v791
  %v952 = vmul.f32 %v920, %v792
  %v953 = vmul.f32 %v921, %v793
  %v954 = vmul.f32 %v922, %v794
  %v955 = vmul.f32 %v923, %v795
  %v956 = vmul.f32 %v924, %v796
  %v957 = vmul.f32 %v925, %v797
  %v958 = vmul.f32 %v926, %v798
  %v959 = vmul.f32 %v927, %v799
  %v960 = vsub.f32 %v928, 0.28449672
  %v961 = vsub.f32 %v929, 0.28449672
  %v962 = vsub.f32 %v930, 0.28449672
  %v963 = vsub.f32 %v931, 0.28449672
  %v964 = vsub.f32 %v932, 0.28449672
  %v965 = vsub.f32 %v933, 0.28449672
  %v966 = vsub.f32 %v934, 0.28449672
  %v967 = vsub.f32 %v935, 0.28449672
  %v968 = vsub.f32 %v936, 0.28449672
  %v969 = vsub.f32 %v937, 0.28449672
  %v970 = vsub.f32 %v938, 0.28449672
  %v971 = vsub.f32 %v939, 0.28449672
  %v972 = vsub.f32 %v940, 0.28449672
  %v973 = vsub.f32 %v941, 0.28449672
  %v974 = vsub.f32 %v942, 0.28449672
  %v975 = vsub.f32 %v943, 0.28449672
  %v976 = vsub.f32 %v944, 0.28449672
  %v977 = vsub.f32 %v945, 0.28449672
  %v978 = vsub.f32 %v946, 0.28449672
  %v979 = vsub.f32 %v947, 0.28449672
  %v980 = vsub.f32 %v948, 0.28449672
  %v981 = vsub.f32 %v949, 0.28449672
  %v982 = vsub.f32 %v950, 0.28449672
  %v983 = vsub.f32 %v951, 0.28449672
  %v984 = vsub.f32 %v952, 0.28449672
  %v985 = vsub.f32 %v953, 0.28449672
  %v986 = vsub.f32 %v954, 0.28449672
  %v987 = vsub.f32 %v955, 0.28449672
  %v988 = vsub.f32 %v956, 0.28449672
  %v989 = vsub.f32 %v957, 0.28449672
  %v990 = vsub.f32 %v958, 0.28449672
  %v991 = vsub.f32 %v959, 0.28449672
  %v992 = vmul.f32 %v960, %v768
  %v993 = vmul.f32 %v961, %v769
  %v994 = vmul.f32 %v962, %v770
  %v995 = vmul.f32 %v963, %v771
  %v996 = vmul.f32 %v964, %v772
  %v997 = vmul.f32 %v965, %v773
  %v998 = vmul.f32 %v966, %v774
  %v999 = vmul.f32 %v967, %v775
  %v1000 = vmul.f32 %v968, %v776
  %v1001 = vmul.f32 %v969, %v777
  %v1002 = vmul.f32 %v970, %v778
  %v1003 = vmul.f32 %v971, %v779
  %v1004 = vmul.f32 %v972, %v780
  %v1005 = vmul.f32 %v973, %v781
  %v1006 = vmul.f32 %v974, %v782
  %v1007 = vmul.f32 %v975, %v783
  %v1008 = vmul.f32 %v976, %v784
  %v1009 = vmul.f32 %v977, %v785
  %v1010 = vmul.f32 %v978, %v786
  %v1011 = vmul.f32 %v979, %v787
  %v1012 = vmul.f32 %v980, %v788
  %v1013 = vmul.f32 %v981, %v789
  %v1014 = vmul.f32 %v982, %v790
  %v1015 = vmul.f32 %v983, %v791
  %v1016 = vmul.f32 %v984, %v792
  %v1017 = vmul.f32 %v985, %v793
  %v1018 = vmul.f32 %v986, %v794
  %v1019 = vmul.f32 %v987, %v795
  %v1020 = vmul.f32 %v988, %v796
  %v1021 = vmul.f32 %v989, %v797
  %v1022 = vmul.f32 %v990, %v798
  %v1023 = vmul.f32 %v991, %v799
  %v1024 = vadd.f32 %v992, 0.2548296
  %v1025 = vadd.f32 %v993, 0.2548296
  %v1026 = vadd.f32 %v994, 0.2548296
  %v1027 = vadd.f32 %v995, 0.2548296
  %v1028 = vadd.f32 %v996, 0.2548296
  %v1029 = vadd.f32 %v997, 0.2548296
  %v1030 = vadd.f32 %v998, 0.2548296
  %v1031 = vadd.f32 %v999, 0.2548296
  %v1032 = vadd.f32 %v1000, 0.2548296
  %v1033 = vadd.f32 %v1001, 0.2548296
  %v1034 = vadd.f32 %v1002, 0.2548296
  %v1035 = vadd.f32 %v1003, 0.2548296
  %v1036 = vadd.f32 %v1004, 0.2548296
  %v1037 = vadd.f32 %v1005, 0.2548296
  %v1038 = vadd.f32 %v1006, 0.2548296
  %v1039 = vadd.f32 %v1007, 0.2548296
  %v1040 = vadd.f32 %v1008, 0.2548296
  %v1041 = vadd.f32 %v1009, 0.2548296
  %v1042 = vadd.f32 %v1010, 0.2548296
  %v1043 = vadd.f32 %v1011, 0.2548296
  %v1044 = vadd.f32 %v1012, 0.2548296
  %v1045 = vadd.f32 %v1013, 0.2548296
  %v1046 = vadd.f32 %v1014, 0.2548296
  %v1047 = vadd.f32 %v1015, 0.2548296
  %v1048 = vadd.f32 %v1016, 0.2548296
  %v1049 = vadd.f32 %v1017, 0.2548296
  %v1050 = vadd.f32 %v1018, 0.2548296
  %v1051 = vadd.f32 %v1019, 0.2548296
  %v1052 = vadd.f32 %v1020, 0.2548296
  %v1053 = vadd.f32 %v1021, 0.2548296
  %v1054 = vadd.f32 %v1022, 0.2548296
  %v1055 = vadd.f32 %v1023, 0.2548296
  %v1056 = vmul.f32 %v1024, %v768
  %v1057 = vmul.f32 %v1025, %v769
  %v1058 = vmul.f32 %v1026, %v770
  %v1059 = vmul.f32 %v1027, %v771
  %v1060 = vmul.f32 %v1028, %v772
  %v1061 = vmul.f32 %v1029, %v773
  %v1062 = vmul.f32 %v1030, %v774
  %v1063 = vmul.f32 %v1031, %v775
  %v1064 = vmul.f32 %v1032, %v776
  %v1065 = vmul.f32 %v1033, %v777
  %v1066 = vmul.f32 %v1034, %v778
  %v1067 = vmul.f32 %v1035, %v779
  %v1068 = vmul.f32 %v1036, %v780
  %v1069 = vmul.f32 %v1037, %v781
  %v1070 = vmul.f32 %v1038, %v782
  %v1071 = vmul.f32 %v1039, %v783
  %v1072 = vmul.f32 %v1040, %v784
  %v1073 = vmul.f32 %v1041, %v785
  %v1074 = vmul.f32 %v1042, %v786
  %v1075 = vmul.f32 %v1043, %v787
  %v1076 = vmul.f32 %v1044, %v788
  %v1077 = vmul.f32 %v1045, %v789
  %v1078 = vmul.f32 %v1046, %v790
  %v1079 = vmul.f32 %v1047, %v791
  %v1080 = vmul.f32 %v1048, %v792
  %v1081 = vmul.f32 %v1049, %v793
  %v1082 = vmul.f32 %v1050, %v794
  %v1083 = vmul.f32 %v1051, %v795
  %v1084 = vmul.f32 %v1052, %v796
  %v1085 = vmul.f32 %v1053, %v797
  %v1086 = vmul.f32 %v1054, %v798
  %v1087 = vmul.f32 %v1055, %v799
  %v1088 = vsub.f32 0.0, %v672
  %v1089 = vsub.f32 0.0, %v673
  %v1090 = vsub.f32 0.0, %v674
  %v1091 = vsub.f32 0.0, %v675
  %v1092 = vsub.f32 0.0, %v676
  %v1093 = vsub.f32 0.0, %v677
  %v1094 = vsub.f32 0.0, %v678
  %v1095 = vsub.f32 0.0, %v679
  %v1096 = vsub.f32 0.0, %v680
  %v1097 = vsub.f32 0.0, %v681
  %v1098 = vsub.f32 0.0, %v682
  %v1099 = vsub.f32 0.0, %v683
  %v1100 = vsub.f32 0.0, %v684
  %v1101 = vsub.f32 0.0, %v685
  %v1102 = vsub.f32 0.0, %v686
  %v1103 = vsub.f32 0.0, %v687
  %v1104 = vsub.f32 0.0, %v688
  %v1105 = vsub.f32 0.0, %v689
  %v1106 = vsub.f32 0.0, %v690
  %v1107 = vsub.f32 0.0, %v691
  %v1108 = vsub.f32 0.0, %v692
  %v1109 = vsub.f32 0.0, %v693
  %v1110 = vsub.f32 0.0, %v694
  %v1111 = vsub.f32 0.0, %v695
  %v1112 = vsub.f32 0.0, %v696
  %v1113 = vsub.f32 0.0, %v697
  %v1114 = vsub.f32 0.0, %v698
  %v1115 = vsub.f32 0.0, %v699
  %v1116 = vsub.f32 0.0, %v700
  %v1117 = vsub.f32 0.0, %v701
  %v1118 = vsub.f32 0.0, %v702
  %v1119 = vsub.f32 0.0, %v703
  %v1120 = vmul.f32 %v1088, %v672
  %v1121 = vmul.f32 %v1089, %v673
  %v1122 = vmul.f32 %v1090, %v674
  %v1123 = vmul.f32 %v1091, %v675
  %v1124 = vmul.f32 %v1092, %v676
  %v1125 = vmul.f32 %v1093, %v677
  %v1126 = vmul.f32 %v1094, %v678
  %v1127 = vmul.f32 %v1095, %v679
  %v1128 = vmul.f32 %v1096, %v680
  %v1129 = vmul.f32 %v1097, %v681
  %v1130 = vmul.f32 %v1098, %v682
  %v1131 = vmul.f32 %v1099, %v683
  %v1132 = vmul.f32 %v1100, %v684
  %v1133 = vmul.f32 %v1101, %v685
  %v1134 = vmul.f32 %v1102, %v686
  %v1135 = vmul.f32 %v1103, %v687
  %v1136 = vmul.f32 %v1104, %v688
  %v1137 = vmul.f32 %v1105, %v689
  %v1138 = vmul.f32 %v1106, %v690
  %v1139 = vmul.f32 %v1107, %v691
  %v1140 = vmul.f32 %v1108, %v692
  %v1141 = vmul.f32 %v1109, %v693
  %v1142 = vmul.f32 %v1110, %v694
  %v1143 = vmul.f32 %v1111, %v695
  %v1144 = vmul.f32 %v1112, %v696
  %v1145 = vmul.f32 %v1113, %v697
  %v1146 = vmul.f32 %v1114, %v698
  %v1147 = vmul.f32 %v1115, %v699
  %v1148 = vmul.f32 %v1116, %v700
  %v1149 = vmul.f32 %v1117, %v701
  %v1150 = vmul.f32 %v1118, %v702
  %v1151 = vmul.f32 %v1119, %v703
  %v1152 = vmul.f32 %v1120, 1.442695
  %v1153 = vpow.pop %v1152
  %v1154 = vmul.f32 %v1121, 1.442695
  %v1155 = vpow.pop %v1154
  %v1156 = vmul.f32 %v1122, 1.442695
  %v1157 = vpow.pop %v1156
  %v1158 = vmul.f32 %v1123, 1.442695
  %v1159 = vpow.pop %v1158
  %v1160 = vmul.f32 %v1124, 1.442695
  %v1161 = vpow.pop %v1160
  %v1162 = vmul.f32 %v1125, 1.442695
  %v1163 = vpow.pop %v1162
  %v1164 = vmul.f32 %v1126, 1.442695
  %v1165 = vpow.pop %v1164
  %v1166 = vmul.f32 %v1127, 1.442695
  %v1167 = vpow.pop %v1166
  %v1168 = vmul.f32 %v1128, 1.442695
  %v1169 = vpow.pop %v1168
  %v1170 = vmul.f32 %v1129, 1.442695
  %v1171 = vpow.pop %v1170
  %v1172 = vmul.f32 %v1130, 1.442695
  %v1173 = vpow.pop %v1172
  %v1174 = vmul.f32 %v1131, 1.442695
  %v1175 = vpow.pop %v1174
  %v1176 = vmul.f32 %v1132, 1.442695
  %v1177 = vpow.pop %v1176
  %v1178 = vmul.f32 %v1133, 1.442695
  %v1179 = vpow.pop %v1178
  %v1180 = vmul.f32 %v1134, 1.442695
  %v1181 = vpow.pop %v1180
  %v1182 = vmul.f32 %v1135, 1.442695
  %v1183 = vpow.pop %v1182
  %v1184 = vmul.f32 %v1136, 1.442695
  %v1185 = vpow.pop %v1184
  %v1186 = vmul.f32 %v1137, 1.442695
  %v1187 = vpow.pop %v1186
  %v1188 = vmul.f32 %v1138, 1.442695
  %v1189 = vpow.pop %v1188
  %v1190 = vmul.f32 %v1139, 1.442695
  %v1191 = vpow.pop %v1190
  %v1192 = vmul.f32 %v1140, 1.442695
  %v1193 = vpow.pop %v1192
  %v1194 = vmul.f32 %v1141, 1.442695
  %v1195 = vpow.pop %v1194
  %v1196 = vmul.f32 %v1142, 1.442695
  %v1197 = vpow.pop %v1196
  %v1198 = vmul.f32 %v1143, 1.442695
  %v1199 = vpow.pop %v1198
  %v1200 = vmul.f32 %v1144, 1.442695
  %v1201 = vpow.pop %v1200
  %v1202 = vmul.f32 %v1145, 1.442695
  %v1203 = vpow.pop %v1202
  %v1204 = vmul.f32 %v1146, 1.442695
  %v1205 = vpow.pop %v1204
  %v1206 = vmul.f32 %v1147, 1.442695
  %v1207 = vpow.pop %v1206
  %v1208 = vmul.f32 %v1148, 1.442695
  %v1209 = vpow.pop %v1208
  %v1210 = vmul.f32 %v1149, 1.442695
  %v1211 = vpow.pop %v1210
  %v1212 = vmul.f32 %v1150, 1.442695
  %v1213 = vpow.pop %v1212
  %v1214 = vmul.f32 %v1151, 1.442695
  %v1215 = vpow.pop %v1214
  %v1216 = vmul.f32 %v1056, %v1153
  %v1217 = vmul.f32 %v1057, %v1155
  %v1218 = vmul.f32 %v1058, %v1157
  %v1219 = vmul.f32 %v1059, %v1159
  %v1220 = vmul.f32 %v1060, %v1161
  %v1221 = vmul.f32 %v1061, %v1163
  %v1222 = vmul.f32 %v1062, %v1165
  %v1223 = vmul.f32 %v1063, %v1167
  %v1224 = vmul.f32 %v1064, %v1169
  %v1225 = vmul.f32 %v1065, %v1171
  %v1226 = vmul.f32 %v1066, %v1173
  %v1227 = vmul.f32 %v1067, %v1175
  %v1228 = vmul.f32 %v1068, %v1177
  %v1229 = vmul.f32 %v1069, %v1179
  %v1230 = vmul.f32 %v1070, %v1181
  %v1231 = vmul.f32 %v1071, %v1183
  %v1232 = vmul.f32 %v1072, %v1185
  %v1233 = vmul.f32 %v1073, %v1187
  %v1234 = vmul.f32 %v1074, %v1189
  %v1235 = vmul.f32 %v1075, %v1191
  %v1236 = vmul.f32 %v1076, %v1193
  %v1237 = vmul.f32 %v1077, %v1195
  %v1238 = vmul.f32 %v1078, %v1197
  %v1239 = vmul.f32 %v1079, %v1199
  %v1240 = vmul.f32 %v1080, %v1201
  %v1241 = vmul.f32 %v1081, %v1203
  %v1242 = vmul.f32 %v1082, %v1205
  %v1243 = vmul.f32 %v1083, %v1207
  %v1244 = vmul.f32 %v1084, %v1209
  %v1245 = vmul.f32 %v1085, %v1211
  %v1246 = vmul.f32 %v1086, %v1213
  %v1247 = vmul.f32 %v1087, %v1215
  %v1248 = vsub.f32 1.0, %v1216
  %v1249 = vsub.f32 1.0, %v1217
  %v1250 = vsub.f32 1.0, %v1218
  %v1251 = vsub.f32 1.0, %v1219
  %v1252 = vsub.f32 1.0, %v1220
  %v1253 = vsub.f32 1.0, %v1221
  %v1254 = vsub.f32 1.0, %v1222
  %v1255 = vsub.f32 1.0, %v1223
  %v1256 = vsub.f32 1.0, %v1224
  %v1257 = vsub.f32 1.0, %v1225
  %v1258 = vsub.f32 1.0, %v1226
  %v1259 = vsub.f32 1.0, %v1227
  %v1260 = vsub.f32 1.0, %v1228
  %v1261 = vsub.f32 1.0, %v1229
  %v1262 = vsub.f32 1.0, %v1230
  %v1263 = vsub.f32 1.0, %v1231
  %v1264 = vsub.f32 1.0, %v1232
  %v1265 = vsub.f32 1.0, %v1233
  %v1266 = vsub.f32 1.0, %v1234
  %v1267 = vsub.f32 1.0, %v1235
  %v1268 = vsub.f32 1.0, %v1236
  %v1269 = vsub.f32 1.0, %v1237
  %v1270 = vsub.f32 1.0, %v1238
  %v1271 = vsub.f32 1.0, %v1239
  %v1272 = vsub.f32 1.0, %v1240
  %v1273 = vsub.f32 1.0, %v1241
  %v1274 = vsub.f32 1.0, %v1242
  %v1275 = vsub.f32 1.0, %v1243
  %v1276 = vsub.f32 1.0, %v1244
  %v1277 = vsub.f32 1.0, %v1245
  %v1278 = vsub.f32 1.0, %v1246
  %v1279 = vsub.f32 1.0, %v1247
  %vm1280 = vcmp.ge.f32.partialorder %v640, 0.0
  %vm1281 = vcmp.ge.f32.partialorder %v641, 0.0
  %vm1282 = vcmp.ge.f32.partialorder %v642, 0.0
  %vm1283 = vcmp.ge.f32.partialorder %v643, 0.0
  %vm1284 = vcmp.ge.f32.partialorder %v644, 0.0
  %vm1285 = vcmp.ge.f32.partialorder %v645, 0.0
  %vm1286 = vcmp.ge.f32.partialorder %v646, 0.0
  %vm1287 = vcmp.ge.f32.partialorder %v647, 0.0
  %vm1288 = vcmp.ge.f32.partialorder %v648, 0.0
  %vm1289 = vcmp.ge.f32.partialorder %v649, 0.0
  %vm1290 = vcmp.ge.f32.partialorder %v650, 0.0
  %vm1291 = vcmp.ge.f32.partialorder %v651, 0.0
  %vm1292 = vcmp.ge.f32.partialorder %v652, 0.0
  %vm1293 = vcmp.ge.f32.partialorder %v653, 0.0
  %vm1294 = vcmp.ge.f32.partialorder %v654, 0.0
  %vm1295 = vcmp.ge.f32.partialorder %v655, 0.0
  %vm1296 = vcmp.ge.f32.partialorder %v656, 0.0
  %vm1297 = vcmp.ge.f32.partialorder %v657, 0.0
  %vm1298 = vcmp.ge.f32.partialorder %v658, 0.0
  %vm1299 = vcmp.ge.f32.partialorder %v659, 0.0
  %vm1300 = vcmp.ge.f32.partialorder %v660, 0.0
  %vm1301 = vcmp.ge.f32.partialorder %v661, 0.0
  %vm1302 = vcmp.ge.f32.partialorder %v662, 0.0
  %vm1303 = vcmp.ge.f32.partialorder %v663, 0.0
  %vm1304 = vcmp.ge.f32.partialorder %v664, 0.0
  %vm1305 = vcmp.ge.f32.partialorder %v665, 0.0
  %vm1306 = vcmp.ge.f32.partialorder %v666, 0.0
  %vm1307 = vcmp.ge.f32.partialorder %v667, 0.0
  %vm1308 = vcmp.ge.f32.partialorder %v668, 0.0
  %vm1309 = vcmp.ge.f32.partialorder %v669, 0.0
  %vm1310 = vcmp.ge.f32.partialorder %v670, 0.0
  %vm1311 = vcmp.ge.f32.partialorder %v671, 0.0
  %v1312 = vsub.f32 0.0, %v1248
  %v1313 = vsub.f32 0.0, %v1249
  %v1314 = vsub.f32 0.0, %v1250
  %v1315 = vsub.f32 0.0, %v1251
  %v1316 = vsub.f32 0.0, %v1252
  %v1317 = vsub.f32 0.0, %v1253
  %v1318 = vsub.f32 0.0, %v1254
  %v1319 = vsub.f32 0.0, %v1255
  %v1320 = vsub.f32 0.0, %v1256
  %v1321 = vsub.f32 0.0, %v1257
  %v1322 = vsub.f32 0.0, %v1258
  %v1323 = vsub.f32 0.0, %v1259
  %v1324 = vsub.f32 0.0, %v1260
  %v1325 = vsub.f32 0.0, %v1261
  %v1326 = vsub.f32 0.0, %v1262
  %v1327 = vsub.f32 0.0, %v1263
  %v1328 = vsub.f32 0.0, %v1264
  %v1329 = vsub.f32 0.0, %v1265
  %v1330 = vsub.f32 0.0, %v1266
  %v1331 = vsub.f32 0.0, %v1267
  %v1332 = vsub.f32 0.0, %v1268
  %v1333 = vsub.f32 0.0, %v1269
  %v1334 = vsub.f32 0.0, %v1270
  %v1335 = vsub.f32 0.0, %v1271
  %v1336 = vsub.f32 0.0, %v1272
  %v1337 = vsub.f32 0.0, %v1273
  %v1338 = vsub.f32 0.0, %v1274
  %v1339 = vsub.f32 0.0, %v1275
  %v1340 = vsub.f32 0.0, %v1276
  %v1341 = vsub.f32 0.0, %v1277
  %v1342 = vsub.f32 0.0, %v1278
  %v1343 = vsub.f32 0.0, %v1279
  %v1344 = vsel %vm1280, %v1248, %v1312
  %v1345 = vsel %vm1281, %v1249, %v1313
  %v1346 = vsel %vm1282, %v1250, %v1314
  %v1347 = vsel %vm1283, %v1251, %v1315
  %v1348 = vsel %vm1284, %v1252, %v1316
  %v1349 = vsel %vm1285, %v1253, %v1317
  %v1350 = vsel %vm1286, %v1254, %v1318
  %v1351 = vsel %vm1287, %v1255, %v1319
  %v1352 = vsel %vm1288, %v1256, %v1320
  %v1353 = vsel %vm1289, %v1257, %v1321
  %v1354 = vsel %vm1290, %v1258, %v1322
  %v1355 = vsel %vm1291, %v1259, %v1323
  %v1356 = vsel %vm1292, %v1260, %v1324
  %v1357 = vsel %vm1293, %v1261, %v1325
  %v1358 = vsel %vm1294, %v1262, %v1326
  %v1359 = vsel %vm1295, %v1263, %v1327
  %v1360 = vsel %vm1296, %v1264, %v1328
  %v1361 = vsel %vm1297, %v1265, %v1329
  %v1362 = vsel %vm1298, %v1266, %v1330
  %v1363 = vsel %vm1299, %v1267, %v1331
  %v1364 = vsel %vm1300, %v1268, %v1332
  %v1365 = vsel %vm1301, %v1269, %v1333
  %v1366 = vsel %vm1302, %v1270, %v1334
  %v1367 = vsel %vm1303, %v1271, %v1335
  %v1368 = vsel %vm1304, %v1272, %v1336
  %v1369 = vsel %vm1305, %v1273, %v1337
  %v1370 = vsel %vm1306, %v1274, %v1338
  %v1371 = vsel %vm1307, %v1275, %v1339
  %v1372 = vsel %vm1308, %v1276, %v1340
  %v1373 = vsel %vm1309, %v1277, %v1341
  %v1374 = vsel %vm1310, %v1278, %v1342
  %v1375 = vsel %vm1311, %v1279, %v1343
  %v1376 = vmul.f32 %v529, 0.5
  %v1377 = vmul.f32 %v531, 0.5
  %v1378 = vmul.f32 %v602, 0.5
  %v1379 = vmul.f32 %v604, 0.5
  %v1380 = vmul.f32 %v533, 0.5
  %v1381 = vmul.f32 %v535, 0.5
  %v1382 = vmul.f32 %v606, 0.5
  %v1383 = vmul.f32 %v608, 0.5
  %v1384 = vmul.f32 %v539, 0.5
  %v1385 = vmul.f32 %v541, 0.5
  %v1386 = vmul.f32 %v612, 0.5
  %v1387 = vmul.f32 %v614, 0.5
  %v1388 = vmul.f32 %v543, 0.5
  %v1389 = vmul.f32 %v545, 0.5
  %v1390 = vmul.f32 %v616, 0.5
  %v1391 = vmul.f32 %v618, 0.5
  %v1392 = vmul.f32 %v549, 0.5
  %v1393 = vmul.f32 %v551, 0.5
  %v1394 = vmul.f32 %v622, 0.5
  %v1395 = vmul.f32 %v624, 0.5
  %v1396 = vmul.f32 %v553, 0.5
  %v1397 = vmul.f32 %v555, 0.5
  %v1398 = vmul.f32 %v626, 0.5
  %v1399 = vmul.f32 %v628, 0.5
  %v1400 = vmul.f32 %v559, 0.5
  %v1401 = vmul.f32 %v561, 0.5
  %v1402 = vmul.f32 %v632, 0.5
  %v1403 = vmul.f32 %v634, 0.5
  %v1404 = vmul.f32 %v563, 0.5
  %v1405 = vmul.f32 %v565, 0.5
  %v1406 = vmul.f32 %v636, 0.5
  %v1407 = vmul.f32 %v638, 0.5
  %v1408 = vadd.f32 %v1344, 1.0
  %v1409 = vadd.f32 %v1345, 1.0
  %v1410 = vadd.f32 %v1346, 1.0
  %v1411 = vadd.f32 %v1347, 1.0
  %v1412 = vadd.f32 %v1348, 1.0
  %v1413 = vadd.f32 %v1349, 1.0
  %v1414 = vadd.f32 %v1350, 1.0
  %v1415 = vadd.f32 %v1351, 1.0
  %v1416 = vadd.f32 %v1352, 1.0
  %v1417 = vadd.f32 %v1353, 1.0
  %v1418 = vadd.f32 %v1354, 1.0
  %v1419 = vadd.f32 %v1355, 1.0
  %v1420 = vadd.f32 %v1356, 1.0
  %v1421 = vadd.f32 %v1357, 1.0
  %v1422 = vadd.f32 %v1358, 1.0
  %v1423 = vadd.f32 %v1359, 1.0
  %v1424 = vadd.f32 %v1360, 1.0
  %v1425 = vadd.f32 %v1361, 1.0
  %v1426 = vadd.f32 %v1362, 1.0
  %v1427 = vadd.f32 %v1363, 1.0
  %v1428 = vadd.f32 %v1364, 1.0
  %v1429 = vadd.f32 %v1365, 1.0
  %v1430 = vadd.f32 %v1366, 1.0
  %v1431 = vadd.f32 %v1367, 1.0
  %v1432 = vadd.f32 %v1368, 1.0
  %v1433 = vadd.f32 %v1369, 1.0
  %v1434 = vadd.f32 %v1370, 1.0
  %v1435 = vadd.f32 %v1371, 1.0
  %v1436 = vadd.f32 %v1372, 1.0
  %v1437 = vadd.f32 %v1373, 1.0
  %v1438 = vadd.f32 %v1374, 1.0
  %v1439 = vadd.f32 %v1375, 1.0
  %v1440 = vmul.f32 %v1376, %v1408
  %v1441 = vmul.f32 %v1377, %v1409
  %v1442 = vmul.f32 %v1378, %v1410
  %v1443 = vmul.f32 %v1379, %v1411
  %v1444 = vmul.f32 %v1380, %v1412
  %v1445 = vmul.f32 %v1381, %v1413
  %v1446 = vmul.f32 %v1382, %v1414
  %v1447 = vmul.f32 %v1383, %v1415
  %v1448 = vmul.f32 %v1384, %v1416
  %v1449 = vmul.f32 %v1385, %v1417
  %v1450 = vmul.f32 %v1386, %v1418
  %v1451 = vmul.f32 %v1387, %v1419
  %v1452 = vmul.f32 %v1388, %v1420
  %v1453 = vmul.f32 %v1389, %v1421
  %v1454 = vmul.f32 %v1390, %v1422
  %v1455 = vmul.f32 %v1391, %v1423
  %v1456 = vmul.f32 %v1392, %v1424
  %v1457 = vmul.f32 %v1393, %v1425
  %v1458 = vmul.f32 %v1394, %v1426
  %v1459 = vmul.f32 %v1395, %v1427
  %v1460 = vmul.f32 %v1396, %v1428
  %v1461 = vmul.f32 %v1397, %v1429
  %v1462 = vmul.f32 %v1398, %v1430
  %v1463 = vmul.f32 %v1399, %v1431
  %v1464 = vmul.f32 %v1400, %v1432
  %v1465 = vmul.f32 %v1401, %v1433
  %v1466 = vmul.f32 %v1402, %v1434
  %v1467 = vmul.f32 %v1403, %v1435
  %v1468 = vmul.f32 %v1404, %v1436
  %v1469 = vmul.f32 %v1405, %v1437
  %v1470 = vmul.f32 %v1406, %v1438
  %v1471 = vmul.f32 %v1407, %v1439
  %v1472 = vmax.f32 %v1440, %v1441
  %v1473 = vmax.f32 %v1444, %v1445
  %v1474 = vmax.f32 %v1448, %v1449
  %v1475 = vmax.f32 %v1452, %v1453
  %v1476 = vmax.f32 %v1456, %v1457
  %v1477 = vmax.f32 %v1460, %v1461
  %v1478 = vmax.f32 %v1464, %v1465
  %v1479 = vmax.f32 %v1468, %v1469
  %v1480 = vmax.f32 %v1442, %v1443
  %v1481 = vmax.f32 %v1446, %v1447
  %v1482 = vmax.f32 %v1450, %v1451
  %v1483 = vmax.f32 %v1454, %v1455
  %v1484 = vmax.f32 %v1458, %v1459
  %v1485 = vmax.f32 %v1462, %v1463
  %v1486 = vmax.f32 %v1466, %v1467
  %v1487 = vmax.f32 %v1470, %v1471
  %v1488 = vmax.f32 %v1472, %v1480
  %v1489 = vmax.f32 %v1473, %v1481
  %v1490 = vmax.f32 %v1474, %v1482
  %v1491 = vmax.f32 %v1475, %v1483
  %v1492 = vmax.f32 %v1476, %v1484
  %v1493 = vmax.f32 %v1477, %v1485
  %v1494 = vmax.f32 %v1478, %v1486
  %v1495 = vmax.f32 %v1479, %v1487
  %v1496 = vpack.c.bf16 %v1489, %v1488
  %v1497 = vpack.c.bf16 %v1491, %v1490
  %v1498 = vpack.c.bf16 %v1493, %v1492
  %v1499 = vpack.c.bf16 %v1495, %v1494
  %v1504 = vunpack.c.l.b16 %v1496
  %v1505 = vunpack.c.h.b16 %v1496
  %v1506 = vunpack.c.l.b16 %v1497
  %v1507 = vunpack.c.h.b16 %v1497
  %v1508 = vunpack.c.l.b16 %v1498
  %v1509 = vunpack.c.h.b16 %v1498
  %v1510 = vunpack.c.l.b16 %v1499
  %v1511 = vunpack.c.h.b16 %v1499
  %v1512 = vpack.c.b16 %v1504, %v1504
  %v1513 = vpack.c.b16 %v1505, %v1505
  %v1514 = vpack.c.b16 %v1506, %v1506
  %v1515 = vpack.c.b16 %v1507, %v1507
  %v1516 = vpack.c.b16 %v1508, %v1508
  %v1517 = vpack.c.b16 %v1509, %v1509
  %v1518 = vpack.c.b16 %v1510, %v1510
  %v1519 = vpack.c.b16 %v1511, %v1511
  %1528 = vst [vmem:[%s3] sm:$0xf] %v1512
  %1529 = vst [vmem:[%s3 + $0x4] sm:$0xf] %v1513
  %1530 = vst [vmem:[%s3 + $0x8] sm:$0xf] %v1514
  %1531 = vst [vmem:[%s3 + $0xc] sm:$0xf] %v1515
  %1532 = vst [vmem:[%s3 + $0x10] sm:$0xf] %v1516
  %1533 = vst [vmem:[%s3 + $0x14] sm:$0xf] %v1517
  %1534 = vst [vmem:[%s3 + $0x18] sm:$0xf] %v1518
  %1535 = vst [vmem:[%s3 + $0x1c] sm:$0xf] %v1519
  // Predicated region
  $region14: #{cnn_forward.4} parent=0 // pred_check
    _
  $region15: #{cnn_forward.4} parent=0 // pred_check_branch
    %1537 = sbr.rel (0) target = $region17
  $region16: #{cnn_forward.4} parent=0 // pred_region
    _
  $region17: #{cnn_forward.4} parent=0 // pred_fallthru
    _
  // Predicated region
  $region18: #{cnn_forward.4} parent=0 // pred_check
    _
  $region19: #{cnn_forward.4} parent=0 // pred_check_branch
    %1539 = sbr.rel (0) target = $region21
  $region20: #{cnn_forward.4} parent=0 // pred_region
    _
  $region21: #{cnn_forward.4} parent=0 // pred_fallthru
    _

// kernel: cnn_forward.5
$region0: #{cnn_forward.5}
  #allocation0 [shape = 'u32[]', space=smem, size = 0x4, offset = 0x4, fixed_abs, tag = 'smem constant byte address 0x4 - core index']
  #allocation1 [shape = 'u32[144,128]{1,0:T(1,128)}', space=vmem, size = 0x12000, scoped, tag = 'internal scratch']
  %s0 = inlined_call_operand.vmem [shape: bf16[2,4096], index: 0, kind: input, shape index: {}]
  %s1 = inlined_call_operand.vmem [shape: bf16[4096,128], index: 1, kind: input, shape index: {}]
  %s2 = inlined_call_operand.vmem [shape: f32[1,128], index: 2, kind: input, shape index: {}]
  %s3 = inlined_call_operand.hbm [shape: f32[2,128], index: 3, kind: output, shape index: {}]
  %s4 = sld [smem:[#allocation0]]
  $region22: #{cnn_forward.5} parent=0
    _
  %s6 = ssub.s32 1, %s4
  %s7 = scalar_select 0, %s6, %s4
  $region1: #{cnn_forward.5} parent=0
    #allocation2 [shape = 'u8[1024]{0}', space=vmem, size = 0x400, scoped, tag = 'output window, operand 0, single buffered']
    #allocation3 [shape = 's32[1]{0}', space=sflag, size = 0x4, scoped, tag = 'scoped memory for cnn_forward.5']
    %8 = vsyncpa [#allocation3], 0
    // Predicated region
    $region2: #{cnn_forward.5} parent=1 // pred_check
      _
    $region3: #{cnn_forward.5} parent=1 // pred_check_branch
      %10 = sbr.rel (0) target = $region5
    $region4: #{cnn_forward.5} parent=1 // pred_region
      _
    $region5: #{cnn_forward.5} parent=1 // pred_fallthru
      _
    // Predicated region
    $region6: #{cnn_forward.5} parent=1 // pred_check
      _
    $region7: #{cnn_forward.5} parent=1 // pred_check_branch
      %12 = sbr.rel (0) target = $region9
    $region8: #{cnn_forward.5} parent=1 // pred_region
      _
    $region9: #{cnn_forward.5} parent=1 // pred_fallthru
      _
    // Predicated region
    $region10: #{cnn_forward.5} parent=1 // pred_check
      _
    $region11: #{cnn_forward.5} parent=1 // pred_check_branch
      %14 = sbr.rel (0) target = $region13
    $region12: #{cnn_forward.5} parent=1 // pred_region
      _
    $region13: #{cnn_forward.5} parent=1 // pred_fallthru
      _
    %v16 = vld [vmem:[%s0] sm:$0xff]
    %v17 = vld [vmem:[%s0 + $0x8] sm:$0xff]
    %v18 = vld [vmem:[%s0 + $0x10] sm:$0xff]
    %v19 = vld [vmem:[%s0 + $0x18] sm:$0xff]
    %v20 = vld [vmem:[%s1] sm:$0xf]
    %v21 = vld [vmem:[%s1 + $0x4] sm:$0xf]
    %v22 = vld [vmem:[%s1 + $0x8] sm:$0xf]
    %v23 = vld [vmem:[%s1 + $0xc] sm:$0xf]
    %v24 = vld [vmem:[%s1 + $0x10] sm:$0xf]
    %v25 = vld [vmem:[%s1 + $0x14] sm:$0xf]
    %v26 = vld [vmem:[%s1 + $0x18] sm:$0xf]
    %v27 = vld [vmem:[%s1 + $0x1c] sm:$0xf]
    %v28 = vld [vmem:[%s1 + $0x20] sm:$0xf]
    %v29 = vld [vmem:[%s1 + $0x24] sm:$0xf]
    %v30 = vld [vmem:[%s1 + $0x28] sm:$0xf]
    %v31 = vld [vmem:[%s1 + $0x2c] sm:$0xf]
    %v32 = vld [vmem:[%s1 + $0x30] sm:$0xf]
    %v33 = vld [vmem:[%s1 + $0x34] sm:$0xf]
    %v34 = vld [vmem:[%s1 + $0x38] sm:$0xf]
    %v35 = vld [vmem:[%s1 + $0x3c] sm:$0xf]
    %v36 = vld [vmem:[%s1 + $0x40] sm:$0xf]
    %v37 = vld [vmem:[%s1 + $0x44] sm:$0xf]
    %v38 = vld [vmem:[%s1 + $0x48] sm:$0xf]
    %v39 = vld [vmem:[%s1 + $0x4c] sm:$0xf]
    %v40 = vld [vmem:[%s1 + $0x50] sm:$0xf]
    %v41 = vld [vmem:[%s1 + $0x54] sm:$0xf]
    %v42 = vld [vmem:[%s1 + $0x58] sm:$0xf]
    %v43 = vld [vmem:[%s1 + $0x5c] sm:$0xf]
    %v44 = vld [vmem:[%s1 + $0x60] sm:$0xf]
    %v45 = vld [vmem:[%s1 + $0x64] sm:$0xf]
    %v46 = vld [vmem:[%s1 + $0x68] sm:$0xf]
    %v47 = vld [vmem:[%s1 + $0x6c] sm:$0xf]
    %v48 = vld [vmem:[%s1 + $0x70] sm:$0xf]
    %v49 = vld [vmem:[%s1 + $0x74] sm:$0xf]
    %v50 = vld [vmem:[%s1 + $0x78] sm:$0xf]
    %v51 = vld [vmem:[%s1 + $0x7c] sm:$0xf]
    %v52 = vld [vmem:[%s1 + $0x80] sm:$0xf]
    %v53 = vld [vmem:[%s1 + $0x84] sm:$0xf]
    %v54 = vld [vmem:[%s1 + $0x88] sm:$0xf]
    %v55 = vld [vmem:[%s1 + $0x8c] sm:$0xf]
    %v56 = vld [vmem:[%s1 + $0x90] sm:$0xf]
    %v57 = vld [vmem:[%s1 + $0x94] sm:$0xf]
    %v58 = vld [vmem:[%s1 + $0x98] sm:$0xf]
    %v59 = vld [vmem:[%s1 + $0x9c] sm:$0xf]
    %v60 = vld [vmem:[%s1 + $0xa0] sm:$0xf]
    %v61 = vld [vmem:[%s1 + $0xa4] sm:$0xf]
    %v62 = vld [vmem:[%s1 + $0xa8] sm:$0xf]
    %v63 = vld [vmem:[%s1 + $0xac] sm:$0xf]
    %v64 = vld [vmem:[%s1 + $0xb0] sm:$0xf]
    %v65 = vld [vmem:[%s1 + $0xb4] sm:$0xf]
    %v66 = vld [vmem:[%s1 + $0xb8] sm:$0xf]
    %v67 = vld [vmem:[%s1 + $0xbc] sm:$0xf]
    %v68 = vld [vmem:[%s1 + $0xc0] sm:$0xf]
    %v69 = vld [vmem:[%s1 + $0xc4] sm:$0xf]
    %v70 = vld [vmem:[%s1 + $0xc8] sm:$0xf]
    %v71 = vld [vmem:[%s1 + $0xcc] sm:$0xf]
    %v72 = vld [vmem:[%s1 + $0xd0] sm:$0xf]
    %v73 = vld [vmem:[%s1 + $0xd4] sm:$0xf]
    %v74 = vld [vmem:[%s1 + $0xd8] sm:$0xf]
    %v75 = vld [vmem:[%s1 + $0xdc] sm:$0xf]
    %v76 = vld [vmem:[%s1 + $0xe0] sm:$0xf]
    %v77 = vld [vmem:[%s1 + $0xe4] sm:$0xf]
    %v78 = vld [vmem:[%s1 + $0xe8] sm:$0xf]
    %v79 = vld [vmem:[%s1 + $0xec] sm:$0xf]
    %v80 = vld [vmem:[%s1 + $0xf0] sm:$0xf]
    %v81 = vld [vmem:[%s1 + $0xf4] sm:$0xf]
    %v82 = vld [vmem:[%s1 + $0xf8] sm:$0xf]
    %v83 = vld [vmem:[%s1 + $0xfc] sm:$0xf]
    %v84 = vld [vmem:[%s1 + $0x100] sm:$0xf]
    %v85 = vld [vmem:[%s1 + $0x104] sm:$0xf]
    %v86 = vld [vmem:[%s1 + $0x108] sm:$0xf]
    %v87 = vld [vmem:[%s1 + $0x10c] sm:$0xf]
    %v88 = vld [vmem:[%s1 + $0x110] sm:$0xf]
    %v89 = vld [vmem:[%s1 + $0x114] sm:$0xf]
    %v90 = vld [vmem:[%s1 + $0x118] sm:$0xf]
    %v91 = vld [vmem:[%s1 + $0x11c] sm:$0xf]
    %v92 = vld [vmem:[%s1 + $0x120] sm:$0xf]
    %v93 = vld [vmem:[%s1 + $0x124] sm:$0xf]
    %v94 = vld [vmem:[%s1 + $0x128] sm:$0xf]
    %v95 = vld [vmem:[%s1 + $0x12c] sm:$0xf]
    %v96 = vld [vmem:[%s1 + $0x130] sm:$0xf]
    %v97 = vld [vmem:[%s1 + $0x134] sm:$0xf]
    %v98 = vld [vmem:[%s1 + $0x138] sm:$0xf]
    %v99 = vld [vmem:[%s1 + $0x13c] sm:$0xf]
    %v100 = vld [vmem:[%s1 + $0x140] sm:$0xf]
    %v101 = vld [vmem:[%s1 + $0x144] sm:$0xf]
    %v102 = vld [vmem:[%s1 + $0x148] sm:$0xf]
    %v103 = vld [vmem:[%s1 + $0x14c] sm:$0xf]
    %v104 = vld [vmem:[%s1 + $0x150] sm:$0xf]
    %v105 = vld [vmem:[%s1 + $0x154] sm:$0xf]
    %v106 = vld [vmem:[%s1 + $0x158] sm:$0xf]
    %v107 = vld [vmem:[%s1 + $0x15c] sm:$0xf]
    %v108 = vld [vmem:[%s1 + $0x160] sm:$0xf]
    %v109 = vld [vmem:[%s1 + $0x164] sm:$0xf]
    %v110 = vld [vmem:[%s1 + $0x168] sm:$0xf]
    %v111 = vld [vmem:[%s1 + $0x16c] sm:$0xf]
    %v112 = vld [vmem:[%s1 + $0x170] sm:$0xf]
    %v113 = vld [vmem:[%s1 + $0x174] sm:$0xf]
    %v114 = vld [vmem:[%s1 + $0x178] sm:$0xf]
    %v115 = vld [vmem:[%s1 + $0x17c] sm:$0xf]
    %v116 = vld [vmem:[%s1 + $0x180] sm:$0xf]
    %v117 = vld [vmem:[%s1 + $0x184] sm:$0xf]
    %v118 = vld [vmem:[%s1 + $0x188] sm:$0xf]
    %v119 = vld [vmem:[%s1 + $0x18c] sm:$0xf]
    %v120 = vld [vmem:[%s1 + $0x190] sm:$0xf]
    %v121 = vld [vmem:[%s1 + $0x194] sm:$0xf]
    %v122 = vld [vmem:[%s1 + $0x198] sm:$0xf]
    %v123 = vld [vmem:[%s1 + $0x19c] sm:$0xf]
    %v124 = vld [vmem:[%s1 + $0x1a0] sm:$0xf]
    %v125 = vld [vmem:[%s1 + $0x1a4] sm:$0xf]
    %v126 = vld [vmem:[%s1 + $0x1a8] sm:$0xf]
    %v127 = vld [vmem:[%s1 + $0x1ac] sm:$0xf]
    %v128 = vld [vmem:[%s1 + $0x1b0] sm:$0xf]
    %v129 = vld [vmem:[%s1 + $0x1b4] sm:$0xf]
    %v130 = vld [vmem:[%s1 + $0x1b8] sm:$0xf]
    %v131 = vld [vmem:[%s1 + $0x1bc] sm:$0xf]
    %v132 = vld [vmem:[%s1 + $0x1c0] sm:$0xf]
    %v133 = vld [vmem:[%s1 + $0x1c4] sm:$0xf]
    %v134 = vld [vmem:[%s1 + $0x1c8] sm:$0xf]
    %v135 = vld [vmem:[%s1 + $0x1cc] sm:$0xf]
    %v136 = vld [vmem:[%s1 + $0x1d0] sm:$0xf]
    %v137 = vld [vmem:[%s1 + $0x1d4] sm:$0xf]
    %v138 = vld [vmem:[%s1 + $0x1d8] sm:$0xf]
    %v139 = vld [vmem:[%s1 + $0x1dc] sm:$0xf]
    %v140 = vld [vmem:[%s1 + $0x1e0] sm:$0xf]
    %v141 = vld [vmem:[%s1 + $0x1e4] sm:$0xf]
    %v142 = vld [vmem:[%s1 + $0x1e8] sm:$0xf]
    %v143 = vld [vmem:[%s1 + $0x1ec] sm:$0xf]
    %v144 = vld [vmem:[%s1 + $0x1f0] sm:$0xf]
    %v145 = vld [vmem:[%s1 + $0x1f4] sm:$0xf]
    %v146 = vld [vmem:[%s1 + $0x1f8] sm:$0xf]
    %v147 = vld [vmem:[%s1 + $0x1fc] sm:$0xf]
    %v148 = vld [vmem:[%s1 + $0x200] sm:$0xf]
    %v149 = vld [vmem:[%s1 + $0x204] sm:$0xf]
    %v150 = vld [vmem:[%s1 + $0x208] sm:$0xf]
    %v151 = vld [vmem:[%s1 + $0x20c] sm:$0xf]
    %v152 = vld [vmem:[%s1 + $0x210] sm:$0xf]
    %v153 = vld [vmem:[%s1 + $0x214] sm:$0xf]
    %v154 = vld [vmem:[%s1 + $0x218] sm:$0xf]
    %v155 = vld [vmem:[%s1 + $0x21c] sm:$0xf]
    %v156 = vld [vmem:[%s1 + $0x220] sm:$0xf]
    %v157 = vld [vmem:[%s1 + $0x224] sm:$0xf]
    %v158 = vld [vmem:[%s1 + $0x228] sm:$0xf]
    %v159 = vld [vmem:[%s1 + $0x22c] sm:$0xf]
    %v160 = vld [vmem:[%s1 + $0x230] sm:$0xf]
    %v161 = vld [vmem:[%s1 + $0x234] sm:$0xf]
    %v162 = vld [vmem:[%s1 + $0x238] sm:$0xf]
    %v163 = vld [vmem:[%s1 + $0x23c] sm:$0xf]
    %v164 = vld [vmem:[%s1 + $0x240] sm:$0xf]
    %v165 = vld [vmem:[%s1 + $0x244] sm:$0xf]
    %v166 = vld [vmem:[%s1 + $0x248] sm:$0xf]
    %v167 = vld [vmem:[%s1 + $0x24c] sm:$0xf]
    %v168 = vld [vmem:[%s1 + $0x250] sm:$0xf]
    %v169 = vld [vmem:[%s1 + $0x254] sm:$0xf]
    %v170 = vld [vmem:[%s1 + $0x258] sm:$0xf]
    %v171 = vld [vmem:[%s1 + $0x25c] sm:$0xf]
    %v172 = vld [vmem:[%s1 + $0x260] sm:$0xf]
    %v173 = vld [vmem:[%s1 + $0x264] sm:$0xf]
    %v174 = vld [vmem:[%s1 + $0x268] sm:$0xf]
    %v175 = vld [vmem:[%s1 + $0x26c] sm:$0xf]
    %v176 = vld [vmem:[%s1 + $0x270] sm:$0xf]
    %v177 = vld [vmem:[%s1 + $0x274] sm:$0xf]
    %v178 = vld [vmem:[%s1 + $0x278] sm:$0xf]
    %v179 = vld [vmem:[%s1 + $0x27c] sm:$0xf]
    %v180 = vld [vmem:[%s1 + $0x280] sm:$0xf]
    %v181 = vld [vmem:[%s1 + $0x284] sm:$0xf]
    %v182 = vld [vmem:[%s1 + $0x288] sm:$0xf]
    %v183 = vld [vmem:[%s1 + $0x28c] sm:$0xf]
    %v184 = vld [vmem:[%s1 + $0x290] sm:$0xf]
    %v185 = vld [vmem:[%s1 + $0x294] sm:$0xf]
    %v186 = vld [vmem:[%s1 + $0x298] sm:$0xf]
    %v187 = vld [vmem:[%s1 + $0x29c] sm:$0xf]
    %v188 = vld [vmem:[%s1 + $0x2a0] sm:$0xf]
    %v189 = vld [vmem:[%s1 + $0x2a4] sm:$0xf]
    %v190 = vld [vmem:[%s1 + $0x2a8] sm:$0xf]
    %v191 = vld [vmem:[%s1 + $0x2ac] sm:$0xf]
    %v192 = vld [vmem:[%s1 + $0x2b0] sm:$0xf]
    %v193 = vld [vmem:[%s1 + $0x2b4] sm:$0xf]
    %v194 = vld [vmem:[%s1 + $0x2b8] sm:$0xf]
    %v195 = vld [vmem:[%s1 + $0x2bc] sm:$0xf]
    %v196 = vld [vmem:[%s1 + $0x2c0] sm:$0xf]
    %v197 = vld [vmem:[%s1 + $0x2c4] sm:$0xf]
    %v198 = vld [vmem:[%s1 + $0x2c8] sm:$0xf]
    %v199 = vld [vmem:[%s1 + $0x2cc] sm:$0xf]
    %v200 = vld [vmem:[%s1 + $0x2d0] sm:$0xf]
    %v201 = vld [vmem:[%s1 + $0x2d4] sm:$0xf]
    %v202 = vld [vmem:[%s1 + $0x2d8] sm:$0xf]
    %v203 = vld [vmem:[%s1 + $0x2dc] sm:$0xf]
    %v204 = vld [vmem:[%s1 + $0x2e0] sm:$0xf]
    %v205 = vld [vmem:[%s1 + $0x2e4] sm:$0xf]
    %v206 = vld [vmem:[%s1 + $0x2e8] sm:$0xf]
    %v207 = vld [vmem:[%s1 + $0x2ec] sm:$0xf]
    %v208 = vld [vmem:[%s1 + $0x2f0] sm:$0xf]
    %v209 = vld [vmem:[%s1 + $0x2f4] sm:$0xf]
    %v210 = vld [vmem:[%s1 + $0x2f8] sm:$0xf]
    %v211 = vld [vmem:[%s1 + $0x2fc] sm:$0xf]
    %v212 = vld [vmem:[%s1 + $0x300] sm:$0xf]
    %v213 = vld [vmem:[%s1 + $0x304] sm:$0xf]
    %v214 = vld [vmem:[%s1 + $0x308] sm:$0xf]
    %v215 = vld [vmem:[%s1 + $0x30c] sm:$0xf]
    %v216 = vld [vmem:[%s1 + $0x310] sm:$0xf]
    %v217 = vld [vmem:[%s1 + $0x314] sm:$0xf]
    %v218 = vld [vmem:[%s1 + $0x318] sm:$0xf]
    %v219 = vld [vmem:[%s1 + $0x31c] sm:$0xf]
    %v220 = vld [vmem:[%s1 + $0x320] sm:$0xf]
    %v221 = vld [vmem:[%s1 + $0x324] sm:$0xf]
    %v222 = vld [vmem:[%s1 + $0x328] sm:$0xf]
    %v223 = vld [vmem:[%s1 + $0x32c] sm:$0xf]
    %v224 = vld [vmem:[%s1 + $0x330] sm:$0xf]
    %v225 = vld [vmem:[%s1 + $0x334] sm:$0xf]
    %v226 = vld [vmem:[%s1 + $0x338] sm:$0xf]
    %v227 = vld [vmem:[%s1 + $0x33c] sm:$0xf]
    %v228 = vld [vmem:[%s1 + $0x340] sm:$0xf]
    %v229 = vld [vmem:[%s1 + $0x344] sm:$0xf]
    %v230 = vld [vmem:[%s1 + $0x348] sm:$0xf]
    %v231 = vld [vmem:[%s1 + $0x34c] sm:$0xf]
    %v232 = vld [vmem:[%s1 + $0x350] sm:$0xf]
    %v233 = vld [vmem:[%s1 + $0x354] sm:$0xf]
    %v234 = vld [vmem:[%s1 + $0x358] sm:$0xf]
    %v235 = vld [vmem:[%s1 + $0x35c] sm:$0xf]
    %v236 = vld [vmem:[%s1 + $0x360] sm:$0xf]
    %v237 = vld [vmem:[%s1 + $0x364] sm:$0xf]
    %v238 = vld [vmem:[%s1 + $0x368] sm:$0xf]
    %v239 = vld [vmem:[%s1 + $0x36c] sm:$0xf]
    %v240 = vld [vmem:[%s1 + $0x370] sm:$0xf]
    %v241 = vld [vmem:[%s1 + $0x374] sm:$0xf]
    %v242 = vld [vmem:[%s1 + $0x378] sm:$0xf]
    %v243 = vld [vmem:[%s1 + $0x37c] sm:$0xf]
    %v244 = vld [vmem:[%s1 + $0x380] sm:$0xf]
    %v245 = vld [vmem:[%s1 + $0x384] sm:$0xf]
    %v246 = vld [vmem:[%s1 + $0x388] sm:$0xf]
    %v247 = vld [vmem:[%s1 + $0x38c] sm:$0xf]
    %v248 = vld [vmem:[%s1 + $0x390] sm:$0xf]
    %v249 = vld [vmem:[%s1 + $0x394] sm:$0xf]
    %v250 = vld [vmem:[%s1 + $0x398] sm:$0xf]
    %v251 = vld [vmem:[%s1 + $0x39c] sm:$0xf]
    %v252 = vld [vmem:[%s1 + $0x3a0] sm:$0xf]
    %v253 = vld [vmem:[%s1 + $0x3a4] sm:$0xf]
    %v254 = vld [vmem:[%s1 + $0x3a8] sm:$0xf]
    %v255 = vld [vmem:[%s1 + $0x3ac] sm:$0xf]
    %v256 = vld [vmem:[%s1 + $0x3b0] sm:$0xf]
    %v257 = vld [vmem:[%s1 + $0x3b4] sm:$0xf]
    %v258 = vld [vmem:[%s1 + $0x3b8] sm:$0xf]
    %v259 = vld [vmem:[%s1 + $0x3bc] sm:$0xf]
    %v260 = vld [vmem:[%s1 + $0x3c0] sm:$0xf]
    %v261 = vld [vmem:[%s1 + $0x3c4] sm:$0xf]
    %v262 = vld [vmem:[%s1 + $0x3c8] sm:$0xf]
    %v263 = vld [vmem:[%s1 + $0x3cc] sm:$0xf]
    %v264 = vld [vmem:[%s1 + $0x3d0] sm:$0xf]
    %v265 = vld [vmem:[%s1 + $0x3d4] sm:$0xf]
    %v266 = vld [vmem:[%s1 + $0x3d8] sm:$0xf]
    %v267 = vld [vmem:[%s1 + $0x3dc] sm:$0xf]
    %v268 = vld [vmem:[%s1 + $0x3e0] sm:$0xf]
    %v269 = vld [vmem:[%s1 + $0x3e4] sm:$0xf]
    %v270 = vld [vmem:[%s1 + $0x3e8] sm:$0xf]
    %v271 = vld [vmem:[%s1 + $0x3ec] sm:$0xf]
    %v272 = vld [vmem:[%s1 + $0x3f0] sm:$0xf]
    %v273 = vld [vmem:[%s1 + $0x3f4] sm:$0xf]
    %v274 = vld [vmem:[%s1 + $0x3f8] sm:$0xf]
    %v275 = vld [vmem:[%s1 + $0x3fc] sm:$0xf]
    %v276 = vld [vmem:[%s1 + $0x400] sm:$0xf]
    %v277 = vld [vmem:[%s1 + $0x404] sm:$0xf]
    %v278 = vld [vmem:[%s1 + $0x408] sm:$0xf]
    %v279 = vld [vmem:[%s1 + $0x40c] sm:$0xf]
    %v280 = vld [vmem:[%s1 + $0x410] sm:$0xf]
    %v281 = vld [vmem:[%s1 + $0x414] sm:$0xf]
    %v282 = vld [vmem:[%s1 + $0x418] sm:$0xf]
    %v283 = vld [vmem:[%s1 + $0x41c] sm:$0xf]
    %v284 = vld [vmem:[%s1 + $0x420] sm:$0xf]
    %v285 = vld [vmem:[%s1 + $0x424] sm:$0xf]
    %v286 = vld [vmem:[%s1 + $0x428] sm:$0xf]
    %v287 = vld [vmem:[%s1 + $0x42c] sm:$0xf]
    %v288 = vld [vmem:[%s1 + $0x430] sm:$0xf]
    %v289 = vld [vmem:[%s1 + $0x434] sm:$0xf]
    %v290 = vld [vmem:[%s1 + $0x438] sm:$0xf]
    %v291 = vld [vmem:[%s1 + $0x43c] sm:$0xf]
    %v292 = vld [vmem:[%s1 + $0x440] sm:$0xf]
    %v293 = vld [vmem:[%s1 + $0x444] sm:$0xf]
    %v294 = vld [vmem:[%s1 + $0x448] sm:$0xf]
    %v295 = vld [vmem:[%s1 + $0x44c] sm:$0xf]
    %v296 = vld [vmem:[%s1 + $0x450] sm:$0xf]
    %v297 = vld [vmem:[%s1 + $0x454] sm:$0xf]
    %v298 = vld [vmem:[%s1 + $0x458] sm:$0xf]
    %v299 = vld [vmem:[%s1 + $0x45c] sm:$0xf]
    %v300 = vld [vmem:[%s1 + $0x460] sm:$0xf]
    %v301 = vld [vmem:[%s1 + $0x464] sm:$0xf]
    %v302 = vld [vmem:[%s1 + $0x468] sm:$0xf]
    %v303 = vld [vmem:[%s1 + $0x46c] sm:$0xf]
    %v304 = vld [vmem:[%s1 + $0x470] sm:$0xf]
    %v305 = vld [vmem:[%s1 + $0x474] sm:$0xf]
    %v306 = vld [vmem:[%s1 + $0x478] sm:$0xf]
    %v307 = vld [vmem:[%s1 + $0x47c] sm:$0xf]
    %v308 = vld [vmem:[%s1 + $0x480] sm:$0xf]
    %v309 = vld [vmem:[%s1 + $0x484] sm:$0xf]
    %v310 = vld [vmem:[%s1 + $0x488] sm:$0xf]
    %v311 = vld [vmem:[%s1 + $0x48c] sm:$0xf]
    %v312 = vld [vmem:[%s1 + $0x490] sm:$0xf]
    %v313 = vld [vmem:[%s1 + $0x494] sm:$0xf]
    %v314 = vld [vmem:[%s1 + $0x498] sm:$0xf]
    %v315 = vld [vmem:[%s1 + $0x49c] sm:$0xf]
    %v316 = vld [vmem:[%s1 + $0x4a0] sm:$0xf]
    %v317 = vld [vmem:[%s1 + $0x4a4] sm:$0xf]
    %v318 = vld [vmem:[%s1 + $0x4a8] sm:$0xf]
    %v319 = vld [vmem:[%s1 + $0x4ac] sm:$0xf]
    %v320 = vld [vmem:[%s1 + $0x4b0] sm:$0xf]
    %v321 = vld [vmem:[%s1 + $0x4b4] sm:$0xf]
    %v322 = vld [vmem:[%s1 + $0x4b8] sm:$0xf]
    %v323 = vld [vmem:[%s1 + $0x4bc] sm:$0xf]
    %v324 = vld [vmem:[%s1 + $0x4c0] sm:$0xf]
    %v325 = vld [vmem:[%s1 + $0x4c4] sm:$0xf]
    %v326 = vld [vmem:[%s1 + $0x4c8] sm:$0xf]
    %v327 = vld [vmem:[%s1 + $0x4cc] sm:$0xf]
    %v328 = vld [vmem:[%s1 + $0x4d0] sm:$0xf]
    %v329 = vld [vmem:[%s1 + $0x4d4] sm:$0xf]
    %v330 = vld [vmem:[%s1 + $0x4d8] sm:$0xf]
    %v331 = vld [vmem:[%s1 + $0x4dc] sm:$0xf]
    %v332 = vld [vmem:[%s1 + $0x4e0] sm:$0xf]
    %v333 = vld [vmem:[%s1 + $0x4e4] sm:$0xf]
    %v334 = vld [vmem:[%s1 + $0x4e8] sm:$0xf]
    %v335 = vld [vmem:[%s1 + $0x4ec] sm:$0xf]
    %v336 = vld [vmem:[%s1 + $0x4f0] sm:$0xf]
    %v337 = vld [vmem:[%s1 + $0x4f4] sm:$0xf]
    %v338 = vld [vmem:[%s1 + $0x4f8] sm:$0xf]
    %v339 = vld [vmem:[%s1 + $0x4fc] sm:$0xf]
    %v340 = vld [vmem:[%s1 + $0x500] sm:$0xf]
    %v341 = vld [vmem:[%s1 + $0x504] sm:$0xf]
    %v342 = vld [vmem:[%s1 + $0x508] sm:$0xf]
    %v343 = vld [vmem:[%s1 + $0x50c] sm:$0xf]
    %v344 = vld [vmem:[%s1 + $0x510] sm:$0xf]
    %v345 = vld [vmem:[%s1 + $0x514] sm:$0xf]
    %v346 = vld [vmem:[%s1 + $0x518] sm:$0xf]
    %v347 = vld [vmem:[%s1 + $0x51c] sm:$0xf]
    %v348 = vld [vmem:[%s1 + $0x520] sm:$0xf]
    %v349 = vld [vmem:[%s1 + $0x524] sm:$0xf]
    %v350 = vld [vmem:[%s1 + $0x528] sm:$0xf]
    %v351 = vld [vmem:[%s1 + $0x52c] sm:$0xf]
    %v352 = vld [vmem:[%s1 + $0x530] sm:$0xf]
    %v353 = vld [vmem:[%s1 + $0x534] sm:$0xf]
    %v354 = vld [vmem:[%s1 + $0x538] sm:$0xf]
    %v355 = vld [vmem:[%s1 + $0x53c] sm:$0xf]
    %v356 = vld [vmem:[%s1 + $0x540] sm:$0xf]
    %v357 = vld [vmem:[%s1 + $0x544] sm:$0xf]
    %v358 = vld [vmem:[%s1 + $0x548] sm:$0xf]
    %v359 = vld [vmem:[%s1 + $0x54c] sm:$0xf]
    %v360 = vld [vmem:[%s1 + $0x550] sm:$0xf]
    %v361 = vld [vmem:[%s1 + $0x554] sm:$0xf]
    %v362 = vld [vmem:[%s1 + $0x558] sm:$0xf]
    %v363 = vld [vmem:[%s1 + $0x55c] sm:$0xf]
    %v364 = vld [vmem:[%s1 + $0x560] sm:$0xf]
    %v365 = vld [vmem:[%s1 + $0x564] sm:$0xf]
    %v366 = vld [vmem:[%s1 + $0x568] sm:$0xf]
    %v367 = vld [vmem:[%s1 + $0x56c] sm:$0xf]
    %v368 = vld [vmem:[%s1 + $0x570] sm:$0xf]
    %v369 = vld [vmem:[%s1 + $0x574] sm:$0xf]
    %v370 = vld [vmem:[%s1 + $0x578] sm:$0xf]
    %v371 = vld [vmem:[%s1 + $0x57c] sm:$0xf]
    %v372 = vld [vmem:[%s1 + $0x580] sm:$0xf]
    %v373 = vld [vmem:[%s1 + $0x584] sm:$0xf]
    %v374 = vld [vmem:[%s1 + $0x588] sm:$0xf]
    %v375 = vld [vmem:[%s1 + $0x58c] sm:$0xf]
    %v376 = vld [vmem:[%s1 + $0x590] sm:$0xf]
    %v377 = vld [vmem:[%s1 + $0x594] sm:$0xf]
    %v378 = vld [vmem:[%s1 + $0x598] sm:$0xf]
    %v379 = vld [vmem:[%s1 + $0x59c] sm:$0xf]
    %v380 = vld [vmem:[%s1 + $0x5a0] sm:$0xf]
    %v381 = vld [vmem:[%s1 + $0x5a4] sm:$0xf]
    %v382 = vld [vmem:[%s1 + $0x5a8] sm:$0xf]
    %v383 = vld [vmem:[%s1 + $0x5ac] sm:$0xf]
    %v384 = vld [vmem:[%s1 + $0x5b0] sm:$0xf]
    %v385 = vld [vmem:[%s1 + $0x5b4] sm:$0xf]
    %v386 = vld [vmem:[%s1 + $0x5b8] sm:$0xf]
    %v387 = vld [vmem:[%s1 + $0x5bc] sm:$0xf]
    %v388 = vld [vmem:[%s1 + $0x5c0] sm:$0xf]
    %v389 = vld [vmem:[%s1 + $0x5c4] sm:$0xf]
    %v390 = vld [vmem:[%s1 + $0x5c8] sm:$0xf]
    %v391 = vld [vmem:[%s1 + $0x5cc] sm:$0xf]
    %v392 = vld [vmem:[%s1 + $0x5d0] sm:$0xf]
    %v393 = vld [vmem:[%s1 + $0x5d4] sm:$0xf]
    %v394 = vld [vmem:[%s1 + $0x5d8] sm:$0xf]
    %v395 = vld [vmem:[%s1 + $0x5dc] sm:$0xf]
    %v396 = vld [vmem:[%s1 + $0x5e0] sm:$0xf]
    %v397 = vld [vmem:[%s1 + $0x5e4] sm:$0xf]
    %v398 = vld [vmem:[%s1 + $0x5e8] sm:$0xf]
    %v399 = vld [vmem:[%s1 + $0x5ec] sm:$0xf]
    %v400 = vld [vmem:[%s1 + $0x5f0] sm:$0xf]
    %v401 = vld [vmem:[%s1 + $0x5f4] sm:$0xf]
    %v402 = vld [vmem:[%s1 + $0x5f8] sm:$0xf]
    %v403 = vld [vmem:[%s1 + $0x5fc] sm:$0xf]
    %v404 = vld [vmem:[%s1 + $0x600] sm:$0xf]
    %v405 = vld [vmem:[%s1 + $0x604] sm:$0xf]
    %v406 = vld [vmem:[%s1 + $0x608] sm:$0xf]
    %v407 = vld [vmem:[%s1 + $0x60c] sm:$0xf]
    %v408 = vld [vmem:[%s1 + $0x610] sm:$0xf]
    %v409 = vld [vmem:[%s1 + $0x614] sm:$0xf]
    %v410 = vld [vmem:[%s1 + $0x618] sm:$0xf]
    %v411 = vld [vmem:[%s1 + $0x61c] sm:$0xf]
    %v412 = vld [vmem:[%s1 + $0x620] sm:$0xf]
    %v413 = vld [vmem:[%s1 + $0x624] sm:$0xf]
    %v414 = vld [vmem:[%s1 + $0x628] sm:$0xf]
    %v415 = vld [vmem:[%s1 + $0x62c] sm:$0xf]
    %v416 = vld [vmem:[%s1 + $0x630] sm:$0xf]
    %v417 = vld [vmem:[%s1 + $0x634] sm:$0xf]
    %v418 = vld [vmem:[%s1 + $0x638] sm:$0xf]
    %v419 = vld [vmem:[%s1 + $0x63c] sm:$0xf]
    %v420 = vld [vmem:[%s1 + $0x640] sm:$0xf]
    %v421 = vld [vmem:[%s1 + $0x644] sm:$0xf]
    %v422 = vld [vmem:[%s1 + $0x648] sm:$0xf]
    %v423 = vld [vmem:[%s1 + $0x64c] sm:$0xf]
    %v424 = vld [vmem:[%s1 + $0x650] sm:$0xf]
    %v425 = vld [vmem:[%s1 + $0x654] sm:$0xf]
    %v426 = vld [vmem:[%s1 + $0x658] sm:$0xf]
    %v427 = vld [vmem:[%s1 + $0x65c] sm:$0xf]
    %v428 = vld [vmem:[%s1 + $0x660] sm:$0xf]
    %v429 = vld [vmem:[%s1 + $0x664] sm:$0xf]
    %v430 = vld [vmem:[%s1 + $0x668] sm:$0xf]
    %v431 = vld [vmem:[%s1 + $0x66c] sm:$0xf]
    %v432 = vld [vmem:[%s1 + $0x670] sm:$0xf]
    %v433 = vld [vmem:[%s1 + $0x674] sm:$0xf]
    %v434 = vld [vmem:[%s1 + $0x678] sm:$0xf]
    %v435 = vld [vmem:[%s1 + $0x67c] sm:$0xf]
    %v436 = vld [vmem:[%s1 + $0x680] sm:$0xf]
    %v437 = vld [vmem:[%s1 + $0x684] sm:$0xf]
    %v438 = vld [vmem:[%s1 + $0x688] sm:$0xf]
    %v439 = vld [vmem:[%s1 + $0x68c] sm:$0xf]
    %v440 = vld [vmem:[%s1 + $0x690] sm:$0xf]
    %v441 = vld [vmem:[%s1 + $0x694] sm:$0xf]
    %v442 = vld [vmem:[%s1 + $0x698] sm:$0xf]
    %v443 = vld [vmem:[%s1 + $0x69c] sm:$0xf]
    %v444 = vld [vmem:[%s1 + $0x6a0] sm:$0xf]
    %v445 = vld [vmem:[%s1 + $0x6a4] sm:$0xf]
    %v446 = vld [vmem:[%s1 + $0x6a8] sm:$0xf]
    %v447 = vld [vmem:[%s1 + $0x6ac] sm:$0xf]
    %v448 = vld [vmem:[%s1 + $0x6b0] sm:$0xf]
    %v449 = vld [vmem:[%s1 + $0x6b4] sm:$0xf]
    %v450 = vld [vmem:[%s1 + $0x6b8] sm:$0xf]
    %v451 = vld [vmem:[%s1 + $0x6bc] sm:$0xf]
    %v452 = vld [vmem:[%s1 + $0x6c0] sm:$0xf]
    %v453 = vld [vmem:[%s1 + $0x6c4] sm:$0xf]
    %v454 = vld [vmem:[%s1 + $0x6c8] sm:$0xf]
    %v455 = vld [vmem:[%s1 + $0x6cc] sm:$0xf]
    %v456 = vld [vmem:[%s1 + $0x6d0] sm:$0xf]
    %v457 = vld [vmem:[%s1 + $0x6d4] sm:$0xf]
    %v458 = vld [vmem:[%s1 + $0x6d8] sm:$0xf]
    %v459 = vld [vmem:[%s1 + $0x6dc] sm:$0xf]
    %v460 = vld [vmem:[%s1 + $0x6e0] sm:$0xf]
    %v461 = vld [vmem:[%s1 + $0x6e4] sm:$0xf]
    %v462 = vld [vmem:[%s1 + $0x6e8] sm:$0xf]
    %v463 = vld [vmem:[%s1 + $0x6ec] sm:$0xf]
    %v464 = vld [vmem:[%s1 + $0x6f0] sm:$0xf]
    %v465 = vld [vmem:[%s1 + $0x6f4] sm:$0xf]
    %v466 = vld [vmem:[%s1 + $0x6f8] sm:$0xf]
    %v467 = vld [vmem:[%s1 + $0x6fc] sm:$0xf]
    %v468 = vld [vmem:[%s1 + $0x700] sm:$0xf]
    %v469 = vld [vmem:[%s1 + $0x704] sm:$0xf]
    %v470 = vld [vmem:[%s1 + $0x708] sm:$0xf]
    %v471 = vld [vmem:[%s1 + $0x70c] sm:$0xf]
    %v472 = vld [vmem:[%s1 + $0x710] sm:$0xf]
    %v473 = vld [vmem:[%s1 + $0x714] sm:$0xf]
    %v474 = vld [vmem:[%s1 + $0x718] sm:$0xf]
    %v475 = vld [vmem:[%s1 + $0x71c] sm:$0xf]
    %v476 = vld [vmem:[%s1 + $0x720] sm:$0xf]
    %v477 = vld [vmem:[%s1 + $0x724] sm:$0xf]
    %v478 = vld [vmem:[%s1 + $0x728] sm:$0xf]
    %v479 = vld [vmem:[%s1 + $0x72c] sm:$0xf]
    %v480 = vld [vmem:[%s1 + $0x730] sm:$0xf]
    %v481 = vld [vmem:[%s1 + $0x734] sm:$0xf]
    %v482 = vld [vmem:[%s1 + $0x738] sm:$0xf]
    %v483 = vld [vmem:[%s1 + $0x73c] sm:$0xf]
    %v484 = vld [vmem:[%s1 + $0x740] sm:$0xf]
    %v485 = vld [vmem:[%s1 + $0x744] sm:$0xf]
    %v486 = vld [vmem:[%s1 + $0x748] sm:$0xf]
    %v487 = vld [vmem:[%s1 + $0x74c] sm:$0xf]
    %v488 = vld [vmem:[%s1 + $0x750] sm:$0xf]
    %v489 = vld [vmem:[%s1 + $0x754] sm:$0xf]
    %v490 = vld [vmem:[%s1 + $0x758] sm:$0xf]
    %v491 = vld [vmem:[%s1 + $0x75c] sm:$0xf]
    %v492 = vld [vmem:[%s1 + $0x760] sm:$0xf]
    %v493 = vld [vmem:[%s1 + $0x764] sm:$0xf]
    %v494 = vld [vmem:[%s1 + $0x768] sm:$0xf]
    %v495 = vld [vmem:[%s1 + $0x76c] sm:$0xf]
    %v496 = vld [vmem:[%s1 + $0x770] sm:$0xf]
    %v497 = vld [vmem:[%s1 + $0x774] sm:$0xf]
    %v498 = vld [vmem:[%s1 + $0x778] sm:$0xf]
    %v499 = vld [vmem:[%s1 + $0x77c] sm:$0xf]
    %v500 = vld [vmem:[%s1 + $0x780] sm:$0xf]
    %v501 = vld [vmem:[%s1 + $0x784] sm:$0xf]
    %v502 = vld [vmem:[%s1 + $0x788] sm:$0xf]
    %v503 = vld [vmem:[%s1 + $0x78c] sm:$0xf]
    %v504 = vld [vmem:[%s1 + $0x790] sm:$0xf]
    %v505 = vld [vmem:[%s1 + $0x794] sm:$0xf]
    %v506 = vld [vmem:[%s1 + $0x798] sm:$0xf]
    %v507 = vld [vmem:[%s1 + $0x79c] sm:$0xf]
    %v508 = vld [vmem:[%s1 + $0x7a0] sm:$0xf]
    %v509 = vld [vmem:[%s1 + $0x7a4] sm:$0xf]
    %v510 = vld [vmem:[%s1 + $0x7a8] sm:$0xf]
    %v511 = vld [vmem:[%s1 + $0x7ac] sm:$0xf]
    %v512 = vld [vmem:[%s1 + $0x7b0] sm:$0xf]
    %v513 = vld [vmem:[%s1 + $0x7b4] sm:$0xf]
    %v514 = vld [vmem:[%s1 + $0x7b8] sm:$0xf]
    %v515 = vld [vmem:[%s1 + $0x7bc] sm:$0xf]
    %v516 = vld [vmem:[%s1 + $0x7c0] sm:$0xf]
    %v517 = vld [vmem:[%s1 + $0x7c4] sm:$0xf]
    %v518 = vld [vmem:[%s1 + $0x7c8] sm:$0xf]
    %v519 = vld [vmem:[%s1 + $0x7cc] sm:$0xf]
    %v520 = vld [vmem:[%s1 + $0x7d0] sm:$0xf]
    %v521 = vld [vmem:[%s1 + $0x7d4] sm:$0xf]
    %v522 = vld [vmem:[%s1 + $0x7d8] sm:$0xf]
    %v523 = vld [vmem:[%s1 + $0x7dc] sm:$0xf]
    %v524 = vld [vmem:[%s1 + $0x7e0] sm:$0xf]
    %v525 = vld [vmem:[%s1 + $0x7e4] sm:$0xf]
    %v526 = vld [vmem:[%s1 + $0x7e8] sm:$0xf]
    %v527 = vld [vmem:[%s1 + $0x7ec] sm:$0xf]
    %v528 = vld [vmem:[%s1 + $0x7f0] sm:$0xf]
    %v529 = vld [vmem:[%s1 + $0x7f4] sm:$0xf]
    %v530 = vld [vmem:[%s1 + $0x7f8] sm:$0xf]
    %v531 = vld [vmem:[%s1 + $0x7fc] sm:$0xf]
    %v532 = vld [vmem:[%s2] sm:$0x1]
    %v534 = vlaneseq
    %v535 = vshrl.u32 %v534, 7
    %v536 = vsub.s32 0, %v535
    %v537 = vrot.slane %v532, %v536
    %v543 = vcombine.high %v16, %v16
    %v545 = vunpack.c.l.s4 1966171168
    %v546 = vunpack.c.0.s8 %v545
    %v547 = vlaneseq
    %v548 = vshrl.u32 %v547, 7
    %v549 = vsub.s32 %v546, %v548
    %v550 = vrot.slane %v16, %v549
    %v552 = vunpack.c.l.s4 1966171168
    %v553 = vunpack.c.0.s8 %v552
    %v554 = vlaneseq
    %v555 = vshrl.u32 %v554, 7
    %v556 = vsub.s32 %v553, %v555
    %v557 = vrot.slane %v543, %v556
    %v558 = vcombine.high %v550, %v550
    %v559 = vcombine.high %v557, %v557
    %v561 = vunpack.c.l.s4 1966171168
    %v562 = vunpack.c.0.s8 %v561
    %v563 = vlaneseq
    %v564 = vshrl.u32 %v563, 7
    %v565 = vsub.s32 %v562, %v564
    %v566 = vrot.slane %v550, %v565
    %v568 = vunpack.c.l.s4 1966171168
    %v569 = vunpack.c.0.s8 %v568
    %v570 = vlaneseq
    %v571 = vshrl.u32 %v570, 7
    %v572 = vsub.s32 %v569, %v571
    %v573 = vrot.slane %v557, %v572
    %v575 = vunpack.c.l.s4 1966171168
    %v576 = vunpack.c.0.s8 %v575
    %v577 = vlaneseq
    %v578 = vshrl.u32 %v577, 7
    %v579 = vsub.s32 %v576, %v578
    %v580 = vrot.slane %v558, %v579
    %v582 = vunpack.c.l.s4 1966171168
    %v583 = vunpack.c.0.s8 %v582
    %v584 = vlaneseq
    %v585 = vshrl.u32 %v584, 7
    %v586 = vsub.s32 %v583, %v585
    %v587 = vrot.slane %v559, %v586
    %v588 = vcombine.high %v566, %v566
    %v589 = vcombine.high %v573, %v573
    %v590 = vcombine.high %v580, %v580
    %v591 = vcombine.high %v587, %v587
    %v592 = vcombine.high %v17, %v17
    %v594 = vunpack.c.l.s4 1966171168
    %v595 = vunpack.c.0.s8 %v594
    %v596 = vlaneseq
    %v597 = vshrl.u32 %v596, 7
    %v598 = vsub.s32 %v595, %v597
    %v599 = vrot.slane %v17, %v598
    %v601 = vunpack.c.l.s4 1966171168
    %v602 = vunpack.c.0.s8 %v601
    %v603 = vlaneseq
    %v604 = vshrl.u32 %v603, 7
    %v605 = vsub.s32 %v602, %v604
    %v606 = vrot.slane %v592, %v605
    %v607 = vcombine.high %v599, %v599
    %v608 = vcombine.high %v606, %v606
    %v610 = vunpack.c.l.s4 1966171168
    %v611 = vunpack.c.0.s8 %v610
    %v612 = vlaneseq
    %v613 = vshrl.u32 %v612, 7
    %v614 = vsub.s32 %v611, %v613
    %v615 = vrot.slane %v599, %v614
    %v617 = vunpack.c.l.s4 1966171168
    %v618 = vunpack.c.0.s8 %v617
    %v619 = vlaneseq
    %v620 = vshrl.u32 %v619, 7
    %v621 = vsub.s32 %v618, %v620
    %v622 = vrot.slane %v606, %v621
    %v624 = vunpack.c.l.s4 1966171168
    %v625 = vunpack.c.0.s8 %v624
    %v626 = vlaneseq
    %v627 = vshrl.u32 %v626, 7
    %v628 = vsub.s32 %v625, %v627
    %v629 = vrot.slane %v607, %v628
    %v631 = vunpack.c.l.s4 1966171168
    %v632 = vunpack.c.0.s8 %v631
    %v633 = vlaneseq
    %v634 = vshrl.u32 %v633, 7
    %v635 = vsub.s32 %v632, %v634
    %v636 = vrot.slane %v608, %v635
    %v637 = vcombine.high %v615, %v615
    %v638 = vcombine.high %v622, %v622
    %v639 = vcombine.high %v629, %v629
    %v640 = vcombine.high %v636, %v636
    %v641 = vcombine.high %v18, %v18
    %v643 = vunpack.c.l.s4 1966171168
    %v644 = vunpack.c.0.s8 %v643
    %v645 = vlaneseq
    %v646 = vshrl.u32 %v645, 7
    %v647 = vsub.s32 %v644, %v646
    %v648 = vrot.slane %v18, %v647
    %v650 = vunpack.c.l.s4 1966171168
    %v651 = vunpack.c.0.s8 %v650
    %v652 = vlaneseq
    %v653 = vshrl.u32 %v652, 7
    %v654 = vsub.s32 %v651, %v653
    %v655 = vrot.slane %v641, %v654
    %v656 = vcombine.high %v648, %v648
    %v657 = vcombine.high %v655, %v655
    %v659 = vunpack.c.l.s4 1966171168
    %v660 = vunpack.c.0.s8 %v659
    %v661 = vlaneseq
    %v662 = vshrl.u32 %v661, 7
    %v663 = vsub.s32 %v660, %v662
    %v664 = vrot.slane %v648, %v663
    %v666 = vunpack.c.l.s4 1966171168
    %v667 = vunpack.c.0.s8 %v666
    %v668 = vlaneseq
    %v669 = vshrl.u32 %v668, 7
    %v670 = vsub.s32 %v667, %v669
    %v671 = vrot.slane %v655, %v670
    %v673 = vunpack.c.l.s4 1966171168
    %v674 = vunpack.c.0.s8 %v673
    %v675 = vlaneseq
    %v676 = vshrl.u32 %v675, 7
    %v677 = vsub.s32 %v674, %v676
    %v678 = vrot.slane %v656, %v677
    %v680 = vunpack.c.l.s4 1966171168
    %v681 = vunpack.c.0.s8 %v680
    %v682 = vlaneseq
    %v683 = vshrl.u32 %v682, 7
    %v684 = vsub.s32 %v681, %v683
    %v685 = vrot.slane %v657, %v684
    %v686 = vcombine.high %v664, %v664
    %v687 = vcombine.high %v671, %v671
    %v688 = vcombine.high %v678, %v678
    %v689 = vcombine.high %v685, %v685
    %v690 = vcombine.high %v19, %v19
    %v692 = vunpack.c.l.s4 1966171168
    %v693 = vunpack.c.0.s8 %v692
    %v694 = vlaneseq
    %v695 = vshrl.u32 %v694, 7
    %v696 = vsub.s32 %v693, %v695
    %v697 = vrot.slane %v19, %v696
    %v699 = vunpack.c.l.s4 1966171168
    %v700 = vunpack.c.0.s8 %v699
    %v701 = vlaneseq
    %v702 = vshrl.u32 %v701, 7
    %v703 = vsub.s32 %v700, %v702
    %v704 = vrot.slane %v690, %v703
    %v705 = vcombine.high %v697, %v697
    %v706 = vcombine.high %v704, %v704
    %v708 = vunpack.c.l.s4 1966171168
    %v709 = vunpack.c.0.s8 %v708
    %v710 = vlaneseq
    %v711 = vshrl.u32 %v710, 7
    %v712 = vsub.s32 %v709, %v711
    %v713 = vrot.slane %v697, %v712
    %v715 = vunpack.c.l.s4 1966171168
    %v716 = vunpack.c.0.s8 %v715
    %v717 = vlaneseq
    %v718 = vshrl.u32 %v717, 7
    %v719 = vsub.s32 %v716, %v718
    %v720 = vrot.slane %v704, %v719
    %v722 = vunpack.c.l.s4 1966171168
    %v723 = vunpack.c.0.s8 %v722
    %v724 = vlaneseq
    %v725 = vshrl.u32 %v724, 7
    %v726 = vsub.s32 %v723, %v725
    %v727 = vrot.slane %v705, %v726
    %v729 = vunpack.c.l.s4 1966171168
    %v730 = vunpack.c.0.s8 %v729
    %v731 = vlaneseq
    %v732 = vshrl.u32 %v731, 7
    %v733 = vsub.s32 %v730, %v732
    %v734 = vrot.slane %v706, %v733
    %v735 = vcombine.high %v713, %v713
    %v736 = vcombine.high %v720, %v720
    %v737 = vcombine.high %v727, %v727
    %v738 = vcombine.high %v734, %v734
    %v1283 = vunpack.c.l.b16 %v20
    %v1284 = vunpack.c.l.b16 %v21
    %v1285 = vunpack.c.l.b16 %v22
    %v1286 = vunpack.c.l.b16 %v23
    %v1287 = vunpack.c.l.b16 %v24
    %v1288 = vunpack.c.l.b16 %v25
    %v1289 = vunpack.c.l.b16 %v26
    %v1290 = vunpack.c.l.b16 %v27
    %v1291 = vunpack.c.l.b16 %v28
    %v1292 = vunpack.c.l.b16 %v29
    %v1293 = vunpack.c.l.b16 %v30
    %v1294 = vunpack.c.l.b16 %v31
    %v1295 = vunpack.c.l.b16 %v32
    %v1296 = vunpack.c.l.b16 %v33
    %v1297 = vunpack.c.l.b16 %v34
    %v1298 = vunpack.c.l.b16 %v35
    %v1299 = vunpack.c.l.b16 %v36
    %v1300 = vunpack.c.l.b16 %v37
    %v1301 = vunpack.c.l.b16 %v38
    %v1302 = vunpack.c.l.b16 %v39
    %v1303 = vunpack.c.l.b16 %v40
    %v1304 = vunpack.c.l.b16 %v41
    %v1305 = vunpack.c.l.b16 %v42
    %v1306 = vunpack.c.l.b16 %v43
    %v1307 = vunpack.c.l.b16 %v44
    %v1308 = vunpack.c.l.b16 %v45
    %v1309 = vunpack.c.l.b16 %v46
    %v1310 = vunpack.c.l.b16 %v47
    %v1311 = vunpack.c.l.b16 %v48
    %v1312 = vunpack.c.l.b16 %v49
    %v1313 = vunpack.c.l.b16 %v50
    %v1314 = vunpack.c.l.b16 %v51
    %v1315 = vunpack.c.l.b16 %v52
    %v1316 = vunpack.c.l.b16 %v53
    %v1317 = vunpack.c.l.b16 %v54
    %v1318 = vunpack.c.l.b16 %v55
    %v1319 = vunpack.c.l.b16 %v56
    %v1320 = vunpack.c.l.b16 %v57
    %v1321 = vunpack.c.l.b16 %v58
    %v1322 = vunpack.c.l.b16 %v59
    %v1323 = vunpack.c.l.b16 %v60
    %v1324 = vunpack.c.l.b16 %v61
    %v1325 = vunpack.c.l.b16 %v62
    %v1326 = vunpack.c.l.b16 %v63
    %v1327 = vunpack.c.l.b16 %v64
    %v1328 = vunpack.c.l.b16 %v65
    %v1329 = vunpack.c.l.b16 %v66
    %v1330 = vunpack.c.l.b16 %v67
    %v1331 = vunpack.c.l.b16 %v68
    %v1332 = vunpack.c.l.b16 %v69
    %v1333 = vunpack.c.l.b16 %v70
    %v1334 = vunpack.c.l.b16 %v71
    %v1335 = vunpack.c.l.b16 %v72
    %v1336 = vunpack.c.l.b16 %v73
    %v1337 = vunpack.c.l.b16 %v74
    %v1338 = vunpack.c.l.b16 %v75
    %v1339 = vunpack.c.l.b16 %v76
    %v1340 = vunpack.c.l.b16 %v77
    %v1341 = vunpack.c.l.b16 %v78
    %v1342 = vunpack.c.l.b16 %v79
    %v1343 = vunpack.c.l.b16 %v80
    %v1344 = vunpack.c.l.b16 %v81
    %v1345 = vunpack.c.l.b16 %v82
    %v1346 = vunpack.c.l.b16 %v83
    %v1347 = vunpack.c.l.b16 %v84
    %v1348 = vunpack.c.l.b16 %v85
    %v1349 = vunpack.c.l.b16 %v86
    %v1350 = vunpack.c.l.b16 %v87
    %v1351 = vunpack.c.l.b16 %v88
    %v1352 = vunpack.c.l.b16 %v89
    %v1353 = vunpack.c.l.b16 %v90
    %v1354 = vunpack.c.l.b16 %v91
    %v1355 = vunpack.c.l.b16 %v92
    %v1356 = vunpack.c.l.b16 %v93
    %v1357 = vunpack.c.l.b16 %v94
    %v1358 = vunpack.c.l.b16 %v95
    %v1359 = vunpack.c.l.b16 %v96
    %v1360 = vunpack.c.l.b16 %v97
    %v1361 = vunpack.c.l.b16 %v98
    %v1362 = vunpack.c.l.b16 %v99
    %v1363 = vunpack.c.l.b16 %v100
    %v1364 = vunpack.c.l.b16 %v101
    %v1365 = vunpack.c.l.b16 %v102
    %v1366 = vunpack.c.l.b16 %v103
    %v1367 = vunpack.c.l.b16 %v104
    %v1368 = vunpack.c.l.b16 %v105
    %v1369 = vunpack.c.l.b16 %v106
    %v1370 = vunpack.c.l.b16 %v107
    %v1371 = vunpack.c.l.b16 %v108
    %v1372 = vunpack.c.l.b16 %v109
    %v1373 = vunpack.c.l.b16 %v110
    %v1374 = vunpack.c.l.b16 %v111
    %v1375 = vunpack.c.l.b16 %v112
    %v1376 = vunpack.c.l.b16 %v113
    %v1377 = vunpack.c.l.b16 %v114
    %v1378 = vunpack.c.l.b16 %v115
    %v1379 = vunpack.c.l.b16 %v116
    %v1380 = vunpack.c.l.b16 %v117
    %v1381 = vunpack.c.l.b16 %v118
    %v1382 = vunpack.c.l.b16 %v119
    %v1383 = vunpack.c.l.b16 %v120
    %v1384 = vunpack.c.l.b16 %v121
    %v1385 = vunpack.c.l.b16 %v122
    %v1386 = vunpack.c.l.b16 %v123
    %v1387 = vunpack.c.l.b16 %v124
    %v1388 = vunpack.c.l.b16 %v125
    %v1389 = vunpack.c.l.b16 %v126
    %v1390 = vunpack.c.l.b16 %v127
    %v1391 = vunpack.c.l.b16 %v128
    %v1392 = vunpack.c.l.b16 %v129
    %v1393 = vunpack.c.l.b16 %v130
    %v1394 = vunpack.c.l.b16 %v131
    %v1395 = vunpack.c.l.b16 %v132
    %v1396 = vunpack.c.l.b16 %v133
    %v1397 = vunpack.c.l.b16 %v134
    %v1398 = vunpack.c.l.b16 %v135
    %v1399 = vunpack.c.l.b16 %v136
    %v1400 = vunpack.c.l.b16 %v137
    %v1401 = vunpack.c.l.b16 %v138
    %v1402 = vunpack.c.l.b16 %v139
    %v1403 = vunpack.c.l.b16 %v140
    %v1404 = vunpack.c.l.b16 %v141
    %v1405 = vunpack.c.l.b16 %v142
    %v1406 = vunpack.c.l.b16 %v143
    %v1407 = vunpack.c.l.b16 %v144
    %v1408 = vunpack.c.l.b16 %v145
    %v1409 = vunpack.c.l.b16 %v146
    %v1410 = vunpack.c.l.b16 %v147
    %v1411 = vunpack.c.l.b16 %v148
    %v1412 = vunpack.c.l.b16 %v149
    %v1413 = vunpack.c.l.b16 %v150
    %v1414 = vunpack.c.l.b16 %v151
    %v1415 = vunpack.c.l.b16 %v152
    %v1416 = vunpack.c.l.b16 %v153
    %v1417 = vunpack.c.l.b16 %v154
    %v1418 = vunpack.c.l.b16 %v155
    %v1419 = vunpack.c.l.b16 %v156
    %v1420 = vunpack.c.l.b16 %v157
    %v1421 = vunpack.c.l.b16 %v158
    %v1422 = vunpack.c.l.b16 %v159
    %v1423 = vunpack.c.l.b16 %v160
    %v1424 = vunpack.c.l.b16 %v161
    %v1425 = vunpack.c.l.b16 %v162
    %v1426 = vunpack.c.l.b16 %v163
    %v1427 = vunpack.c.l.b16 %v164
    %v1428 = vunpack.c.l.b16 %v165
    %v1429 = vunpack.c.l.b16 %v166
    %v1430 = vunpack.c.l.b16 %v167
    %v1431 = vunpack.c.l.b16 %v168
    %v1432 = vunpack.c.l.b16 %v169
    %v1433 = vunpack.c.l.b16 %v170
    %v1434 = vunpack.c.l.b16 %v171
    %v1435 = vunpack.c.l.b16 %v172
    %v1436 = vunpack.c.l.b16 %v173
    %v1437 = vunpack.c.l.b16 %v174
    %v1438 = vunpack.c.l.b16 %v175
    %v1439 = vunpack.c.l.b16 %v176
    %v1440 = vunpack.c.l.b16 %v177
    %v1441 = vunpack.c.l.b16 %v178
    %v1442 = vunpack.c.l.b16 %v179
    %v1443 = vunpack.c.l.b16 %v180
    %v1444 = vunpack.c.l.b16 %v181
    %v1445 = vunpack.c.l.b16 %v182
    %v1446 = vunpack.c.l.b16 %v183
    %v1447 = vunpack.c.l.b16 %v184
    %v1448 = vunpack.c.l.b16 %v185
    %v1449 = vunpack.c.l.b16 %v186
    %v1450 = vunpack.c.l.b16 %v187
    %v1451 = vunpack.c.l.b16 %v188
    %v1452 = vunpack.c.l.b16 %v189
    %v1453 = vunpack.c.l.b16 %v190
    %v1454 = vunpack.c.l.b16 %v191
    %v1455 = vunpack.c.l.b16 %v192
    %v1456 = vunpack.c.l.b16 %v193
    %v1457 = vunpack.c.l.b16 %v194
    %v1458 = vunpack.c.l.b16 %v195
    %v1459 = vunpack.c.l.b16 %v196
    %v1460 = vunpack.c.l.b16 %v197
    %v1461 = vunpack.c.l.b16 %v198
    %v1462 = vunpack.c.l.b16 %v199
    %v1463 = vunpack.c.l.b16 %v200
    %v1464 = vunpack.c.l.b16 %v201
    %v1465 = vunpack.c.l.b16 %v202
    %v1466 = vunpack.c.l.b16 %v203
    %v1467 = vunpack.c.l.b16 %v204
    %v1468 = vunpack.c.l.b16 %v205
    %v1469 = vunpack.c.l.b16 %v206
    %v1470 = vunpack.c.l.b16 %v207
    %v1471 = vunpack.c.l.b16 %v208
    %v1472 = vunpack.c.l.b16 %v209
    %v1473 = vunpack.c.l.b16 %v210
    %v1474 = vunpack.c.l.b16 %v211
    %v1475 = vunpack.c.l.b16 %v212
    %v1476 = vunpack.c.l.b16 %v213
    %v1477 = vunpack.c.l.b16 %v214
    %v1478 = vunpack.c.l.b16 %v215
    %v1479 = vunpack.c.l.b16 %v216
    %v1480 = vunpack.c.l.b16 %v217
    %v1481 = vunpack.c.l.b16 %v218
    %v1482 = vunpack.c.l.b16 %v219
    %v1483 = vunpack.c.l.b16 %v220
    %v1484 = vunpack.c.l.b16 %v221
    %v1485 = vunpack.c.l.b16 %v222
    %v1486 = vunpack.c.l.b16 %v223
    %v1487 = vunpack.c.l.b16 %v224
    %v1488 = vunpack.c.l.b16 %v225
    %v1489 = vunpack.c.l.b16 %v226
    %v1490 = vunpack.c.l.b16 %v227
    %v1491 = vunpack.c.l.b16 %v228
    %v1492 = vunpack.c.l.b16 %v229
    %v1493 = vunpack.c.l.b16 %v230
    %v1494 = vunpack.c.l.b16 %v231
    %v1495 = vunpack.c.l.b16 %v232
    %v1496 = vunpack.c.l.b16 %v233
    %v1497 = vunpack.c.l.b16 %v234
    %v1498 = vunpack.c.l.b16 %v235
    %v1499 = vunpack.c.l.b16 %v236
    %v1500 = vunpack.c.l.b16 %v237
    %v1501 = vunpack.c.l.b16 %v238
    %v1502 = vunpack.c.l.b16 %v239
    %v1503 = vunpack.c.l.b16 %v240
    %v1504 = vunpack.c.l.b16 %v241
    %v1505 = vunpack.c.l.b16 %v242
    %v1506 = vunpack.c.l.b16 %v243
    %v1507 = vunpack.c.l.b16 %v244
    %v1508 = vunpack.c.l.b16 %v245
    %v1509 = vunpack.c.l.b16 %v246
    %v1510 = vunpack.c.l.b16 %v247
    %v1511 = vunpack.c.l.b16 %v248
    %v1512 = vunpack.c.l.b16 %v249
    %v1513 = vunpack.c.l.b16 %v250
    %v1514 = vunpack.c.l.b16 %v251
    %v1515 = vunpack.c.l.b16 %v252
    %v1516 = vunpack.c.l.b16 %v253
    %v1517 = vunpack.c.l.b16 %v254
    %v1518 = vunpack.c.l.b16 %v255
    %v1519 = vunpack.c.l.b16 %v256
    %v1520 = vunpack.c.l.b16 %v257
    %v1521 = vunpack.c.l.b16 %v258
    %v1522 = vunpack.c.l.b16 %v259
    %v1523 = vunpack.c.l.b16 %v260
    %v1524 = vunpack.c.l.b16 %v261
    %v1525 = vunpack.c.l.b16 %v262
    %v1526 = vunpack.c.l.b16 %v263
    %v1527 = vunpack.c.l.b16 %v264
    %v1528 = vunpack.c.l.b16 %v265
    %v1529 = vunpack.c.l.b16 %v266
    %v1530 = vunpack.c.l.b16 %v267
    %v1531 = vunpack.c.l.b16 %v268
    %v1532 = vunpack.c.l.b16 %v269
    %v1533 = vunpack.c.l.b16 %v270
    %v1534 = vunpack.c.l.b16 %v271
    %v1535 = vunpack.c.l.b16 %v272
    %v1536 = vunpack.c.l.b16 %v273
    %v1537 = vunpack.c.l.b16 %v274
    %v1538 = vunpack.c.l.b16 %v275
    %v1539 = vunpack.c.l.b16 %v276
    %v1540 = vunpack.c.l.b16 %v277
    %v1541 = vunpack.c.l.b16 %v278
    %v1542 = vunpack.c.l.b16 %v279
    %v1543 = vunpack.c.l.b16 %v280
    %v1544 = vunpack.c.l.b16 %v281
    %v1545 = vunpack.c.l.b16 %v282
    %v1546 = vunpack.c.l.b16 %v283
    %v1547 = vunpack.c.l.b16 %v284
    %v1548 = vunpack.c.l.b16 %v285
    %v1549 = vunpack.c.l.b16 %v286
    %v1550 = vunpack.c.l.b16 %v287
    %v1551 = vunpack.c.l.b16 %v288
    %v1552 = vunpack.c.l.b16 %v289
    %v1553 = vunpack.c.l.b16 %v290
    %v1554 = vunpack.c.l.b16 %v291
    %v1555 = vunpack.c.l.b16 %v292
    %v1556 = vunpack.c.l.b16 %v293
    %v1557 = vunpack.c.l.b16 %v294
    %v1558 = vunpack.c.l.b16 %v295
    %v1559 = vunpack.c.l.b16 %v296
    %v1560 = vunpack.c.l.b16 %v297
    %v1561 = vunpack.c.l.b16 %v298
    %v1562 = vunpack.c.l.b16 %v299
    %v1563 = vunpack.c.l.b16 %v300
    %v1564 = vunpack.c.l.b16 %v301
    %v1565 = vunpack.c.l.b16 %v302
    %v1566 = vunpack.c.l.b16 %v303
    %v1567 = vunpack.c.l.b16 %v304
    %v1568 = vunpack.c.l.b16 %v305
    %v1569 = vunpack.c.l.b16 %v306
    %v1570 = vunpack.c.l.b16 %v307
    %v1571 = vunpack.c.l.b16 %v308
    %v1572 = vunpack.c.l.b16 %v309
    %v1573 = vunpack.c.l.b16 %v310
    %v1574 = vunpack.c.l.b16 %v311
    %v1575 = vunpack.c.l.b16 %v312
    %v1576 = vunpack.c.l.b16 %v313
    %v1577 = vunpack.c.l.b16 %v314
    %v1578 = vunpack.c.l.b16 %v315
    %v1579 = vunpack.c.l.b16 %v316
    %v1580 = vunpack.c.l.b16 %v317
    %v1581 = vunpack.c.l.b16 %v318
    %v1582 = vunpack.c.l.b16 %v319
    %v1583 = vunpack.c.l.b16 %v320
    %v1584 = vunpack.c.l.b16 %v321
    %v1585 = vunpack.c.l.b16 %v322
    %v1586 = vunpack.c.l.b16 %v323
    %v1587 = vunpack.c.l.b16 %v324
    %v1588 = vunpack.c.l.b16 %v325
    %v1589 = vunpack.c.l.b16 %v326
    %v1590 = vunpack.c.l.b16 %v327
    %v1591 = vunpack.c.l.b16 %v328
    %v1592 = vunpack.c.l.b16 %v329
    %v1593 = vunpack.c.l.b16 %v330
    %v1594 = vunpack.c.l.b16 %v331
    %v1595 = vunpack.c.l.b16 %v332
    %v1596 = vunpack.c.l.b16 %v333
    %v1597 = vunpack.c.l.b16 %v334
    %v1598 = vunpack.c.l.b16 %v335
    %v1599 = vunpack.c.l.b16 %v336
    %v1600 = vunpack.c.l.b16 %v337
    %v1601 = vunpack.c.l.b16 %v338
    %v1602 = vunpack.c.l.b16 %v339
    %v1603 = vunpack.c.l.b16 %v340
    %v1604 = vunpack.c.l.b16 %v341
    %v1605 = vunpack.c.l.b16 %v342
    %v1606 = vunpack.c.l.b16 %v343
    %v1607 = vunpack.c.l.b16 %v344
    %v1608 = vunpack.c.l.b16 %v345
    %v1609 = vunpack.c.l.b16 %v346
    %v1610 = vunpack.c.l.b16 %v347
    %v1611 = vunpack.c.l.b16 %v348
    %v1612 = vunpack.c.l.b16 %v349
    %v1613 = vunpack.c.l.b16 %v350
    %v1614 = vunpack.c.l.b16 %v351
    %v1615 = vunpack.c.l.b16 %v352
    %v1616 = vunpack.c.l.b16 %v353
    %v1617 = vunpack.c.l.b16 %v354
    %v1618 = vunpack.c.l.b16 %v355
    %v1619 = vunpack.c.l.b16 %v356
    %v1620 = vunpack.c.l.b16 %v357
    %v1621 = vunpack.c.l.b16 %v358
    %v1622 = vunpack.c.l.b16 %v359
    %v1623 = vunpack.c.l.b16 %v360
    %v1624 = vunpack.c.l.b16 %v361
    %v1625 = vunpack.c.l.b16 %v362
    %v1626 = vunpack.c.l.b16 %v363
    %v1627 = vunpack.c.l.b16 %v364
    %v1628 = vunpack.c.l.b16 %v365
    %v1629 = vunpack.c.l.b16 %v366
    %v1630 = vunpack.c.l.b16 %v367
    %v1631 = vunpack.c.l.b16 %v368
    %v1632 = vunpack.c.l.b16 %v369
    %v1633 = vunpack.c.l.b16 %v370
    %v1634 = vunpack.c.l.b16 %v371
    %v1635 = vunpack.c.l.b16 %v372
    %v1636 = vunpack.c.l.b16 %v373
    %v1637 = vunpack.c.l.b16 %v374
    %v1638 = vunpack.c.l.b16 %v375
    %v1639 = vunpack.c.l.b16 %v376
    %v1640 = vunpack.c.l.b16 %v377
    %v1641 = vunpack.c.l.b16 %v378
    %v1642 = vunpack.c.l.b16 %v379
    %v1643 = vunpack.c.l.b16 %v380
    %v1644 = vunpack.c.l.b16 %v381
    %v1645 = vunpack.c.l.b16 %v382
    %v1646 = vunpack.c.l.b16 %v383
    %v1647 = vunpack.c.l.b16 %v384
    %v1648 = vunpack.c.l.b16 %v385
    %v1649 = vunpack.c.l.b16 %v386
    %v1650 = vunpack.c.l.b16 %v387
    %v1651 = vunpack.c.l.b16 %v388
    %v1652 = vunpack.c.l.b16 %v389
    %v1653 = vunpack.c.l.b16 %v390
    %v1654 = vunpack.c.l.b16 %v391
    %v1655 = vunpack.c.l.b16 %v392
    %v1656 = vunpack.c.l.b16 %v393
    %v1657 = vunpack.c.l.b16 %v394
    %v1658 = vunpack.c.l.b16 %v395
    %v1659 = vunpack.c.l.b16 %v396
    %v1660 = vunpack.c.l.b16 %v397
    %v1661 = vunpack.c.l.b16 %v398
    %v1662 = vunpack.c.l.b16 %v399
    %v1663 = vunpack.c.l.b16 %v400
    %v1664 = vunpack.c.l.b16 %v401
    %v1665 = vunpack.c.l.b16 %v402
    %v1666 = vunpack.c.l.b16 %v403
    %v1667 = vunpack.c.l.b16 %v404
    %v1668 = vunpack.c.l.b16 %v405
    %v1669 = vunpack.c.l.b16 %v406
    %v1670 = vunpack.c.l.b16 %v407
    %v1671 = vunpack.c.l.b16 %v408
    %v1672 = vunpack.c.l.b16 %v409
    %v1673 = vunpack.c.l.b16 %v410
    %v1674 = vunpack.c.l.b16 %v411
    %v1675 = vunpack.c.l.b16 %v412
    %v1676 = vunpack.c.l.b16 %v413
    %v1677 = vunpack.c.l.b16 %v414
    %v1678 = vunpack.c.l.b16 %v415
    %v1679 = vunpack.c.l.b16 %v416
    %v1680 = vunpack.c.l.b16 %v417
    %v1681 = vunpack.c.l.b16 %v418
    %v1682 = vunpack.c.l.b16 %v419
    %v1683 = vunpack.c.l.b16 %v420
    %v1684 = vunpack.c.l.b16 %v421
    %v1685 = vunpack.c.l.b16 %v422
    %v1686 = vunpack.c.l.b16 %v423
    %v1687 = vunpack.c.l.b16 %v424
    %v1688 = vunpack.c.l.b16 %v425
    %v1689 = vunpack.c.l.b16 %v426
    %v1690 = vunpack.c.l.b16 %v427
    %v1691 = vunpack.c.l.b16 %v428
    %v1692 = vunpack.c.l.b16 %v429
    %v1693 = vunpack.c.l.b16 %v430
    %v1694 = vunpack.c.l.b16 %v431
    %v1695 = vunpack.c.l.b16 %v432
    %v1696 = vunpack.c.l.b16 %v433
    %v1697 = vunpack.c.l.b16 %v434
    %v1698 = vunpack.c.l.b16 %v435
    %v1699 = vunpack.c.l.b16 %v436
    %v1700 = vunpack.c.l.b16 %v437
    %v1701 = vunpack.c.l.b16 %v438
    %v1702 = vunpack.c.l.b16 %v439
    %v1703 = vunpack.c.l.b16 %v440
    %v1704 = vunpack.c.l.b16 %v441
    %v1705 = vunpack.c.l.b16 %v442
    %v1706 = vunpack.c.l.b16 %v443
    %v1707 = vunpack.c.l.b16 %v444
    %v1708 = vunpack.c.l.b16 %v445
    %v1709 = vunpack.c.l.b16 %v446
    %v1710 = vunpack.c.l.b16 %v447
    %v1711 = vunpack.c.l.b16 %v448
    %v1712 = vunpack.c.l.b16 %v449
    %v1713 = vunpack.c.l.b16 %v450
    %v1714 = vunpack.c.l.b16 %v451
    %v1715 = vunpack.c.l.b16 %v452
    %v1716 = vunpack.c.l.b16 %v453
    %v1717 = vunpack.c.l.b16 %v454
    %v1718 = vunpack.c.l.b16 %v455
    %v1719 = vunpack.c.l.b16 %v456
    %v1720 = vunpack.c.l.b16 %v457
    %v1721 = vunpack.c.l.b16 %v458
    %v1722 = vunpack.c.l.b16 %v459
    %v1723 = vunpack.c.l.b16 %v460
    %v1724 = vunpack.c.l.b16 %v461
    %v1725 = vunpack.c.l.b16 %v462
    %v1726 = vunpack.c.l.b16 %v463
    %v1727 = vunpack.c.l.b16 %v464
    %v1728 = vunpack.c.l.b16 %v465
    %v1729 = vunpack.c.l.b16 %v466
    %v1730 = vunpack.c.l.b16 %v467
    %v1731 = vunpack.c.l.b16 %v468
    %v1732 = vunpack.c.l.b16 %v469
    %v1733 = vunpack.c.l.b16 %v470
    %v1734 = vunpack.c.l.b16 %v471
    %v1735 = vunpack.c.l.b16 %v472
    %v1736 = vunpack.c.l.b16 %v473
    %v1737 = vunpack.c.l.b16 %v474
    %v1738 = vunpack.c.l.b16 %v475
    %v1739 = vunpack.c.l.b16 %v476
    %v1740 = vunpack.c.l.b16 %v477
    %v1741 = vunpack.c.l.b16 %v478
    %v1742 = vunpack.c.l.b16 %v479
    %v1743 = vunpack.c.l.b16 %v480
    %v1744 = vunpack.c.l.b16 %v481
    %v1745 = vunpack.c.l.b16 %v482
    %v1746 = vunpack.c.l.b16 %v483
    %v1747 = vunpack.c.l.b16 %v484
    %v1748 = vunpack.c.l.b16 %v485
    %v1749 = vunpack.c.l.b16 %v486
    %v1750 = vunpack.c.l.b16 %v487
    %v1751 = vunpack.c.l.b16 %v488
    %v1752 = vunpack.c.l.b16 %v489
    %v1753 = vunpack.c.l.b16 %v490
    %v1754 = vunpack.c.l.b16 %v491
    %v1755 = vunpack.c.l.b16 %v492
    %v1756 = vunpack.c.l.b16 %v493
    %v1757 = vunpack.c.l.b16 %v494
    %v1758 = vunpack.c.l.b16 %v495
    %v1759 = vunpack.c.l.b16 %v496
    %v1760 = vunpack.c.l.b16 %v497
    %v1761 = vunpack.c.l.b16 %v498
    %v1762 = vunpack.c.l.b16 %v499
    %v1763 = vunpack.c.l.b16 %v500
    %v1764 = vunpack.c.l.b16 %v501
    %v1765 = vunpack.c.l.b16 %v502
    %v1766 = vunpack.c.l.b16 %v503
    %v1767 = vunpack.c.l.b16 %v504
    %v1768 = vunpack.c.l.b16 %v505
    %v1769 = vunpack.c.l.b16 %v506
    %v1770 = vunpack.c.l.b16 %v507
    %v1771 = vunpack.c.l.b16 %v508
    %v1772 = vunpack.c.l.b16 %v509
    %v1773 = vunpack.c.l.b16 %v510
    %v1774 = vunpack.c.l.b16 %v511
    %v1775 = vunpack.c.l.b16 %v512
    %v1776 = vunpack.c.l.b16 %v513
    %v1777 = vunpack.c.l.b16 %v514
    %v1778 = vunpack.c.l.b16 %v515
    %v1779 = vunpack.c.l.b16 %v516
    %v1780 = vunpack.c.l.b16 %v517
    %v1781 = vunpack.c.l.b16 %v518
    %v1782 = vunpack.c.l.b16 %v519
    %v1783 = vunpack.c.l.b16 %v520
    %v1784 = vunpack.c.l.b16 %v521
    %v1785 = vunpack.c.l.b16 %v522
    %v1786 = vunpack.c.l.b16 %v523
    %v1787 = vunpack.c.l.b16 %v524
    %v1788 = vunpack.c.l.b16 %v525
    %v1789 = vunpack.c.l.b16 %v526
    %v1790 = vunpack.c.l.b16 %v527
    %v1791 = vunpack.c.l.b16 %v528
    %v1792 = vunpack.c.l.b16 %v529
    %v1793 = vunpack.c.l.b16 %v530
    %v1794 = vunpack.c.l.b16 %v531
    %v1795 = vpack.c.b16 %v1284, %v1283
    %v1796 = vpack.c.b16 %v1286, %v1285
    %v1797 = vpack.c.b16 %v1288, %v1287
    %v1798 = vpack.c.b16 %v1290, %v1289
    %v1799 = vpack.c.b16 %v1292, %v1291
    %v1800 = vpack.c.b16 %v1294, %v1293
    %v1801 = vpack.c.b16 %v1296, %v1295
    %v1802 = vpack.c.b16 %v1298, %v1297
    %v1803 = vpack.c.b16 %v1300, %v1299
    %v1804 = vpack.c.b16 %v1302, %v1301
    %v1805 = vpack.c.b16 %v1304, %v1303
    %v1806 = vpack.c.b16 %v1306, %v1305
    %v1807 = vpack.c.b16 %v1308, %v1307
    %v1808 = vpack.c.b16 %v1310, %v1309
    %v1809 = vpack.c.b16 %v1312, %v1311
    %v1810 = vpack.c.b16 %v1314, %v1313
    %v1811 = vpack.c.b16 %v1316, %v1315
    %v1812 = vpack.c.b16 %v1318, %v1317
    %v1813 = vpack.c.b16 %v1320, %v1319
    %v1814 = vpack.c.b16 %v1322, %v1321
    %v1815 = vpack.c.b16 %v1324, %v1323
    %v1816 = vpack.c.b16 %v1326, %v1325
    %v1817 = vpack.c.b16 %v1328, %v1327
    %v1818 = vpack.c.b16 %v1330, %v1329
    %v1819 = vpack.c.b16 %v1332, %v1331
    %v1820 = vpack.c.b16 %v1334, %v1333
    %v1821 = vpack.c.b16 %v1336, %v1335
    %v1822 = vpack.c.b16 %v1338, %v1337
    %v1823 = vpack.c.b16 %v1340, %v1339
    %v1824 = vpack.c.b16 %v1342, %v1341
    %v1825 = vpack.c.b16 %v1344, %v1343
    %v1826 = vpack.c.b16 %v1346, %v1345
    %v1827 = vpack.c.b16 %v1348, %v1347
    %v1828 = vpack.c.b16 %v1350, %v1349
    %v1829 = vpack.c.b16 %v1352, %v1351
    %v1830 = vpack.c.b16 %v1354, %v1353
    %v1831 = vpack.c.b16 %v1356, %v1355
    %v1832 = vpack.c.b16 %v1358, %v1357
    %v1833 = vpack.c.b16 %v1360, %v1359
    %v1834 = vpack.c.b16 %v1362, %v1361
    %v1835 = vpack.c.b16 %v1364, %v1363
    %v1836 = vpack.c.b16 %v1366, %v1365
    %v1837 = vpack.c.b16 %v1368, %v1367
    %v1838 = vpack.c.b16 %v1370, %v1369
    %v1839 = vpack.c.b16 %v1372, %v1371
    %v1840 = vpack.c.b16 %v1374, %v1373
    %v1841 = vpack.c.b16 %v1376, %v1375
    %v1842 = vpack.c.b16 %v1378, %v1377
    %v1843 = vpack.c.b16 %v1380, %v1379
    %v1844 = vpack.c.b16 %v1382, %v1381
    %v1845 = vpack.c.b16 %v1384, %v1383
    %v1846 = vpack.c.b16 %v1386, %v1385
    %v1847 = vpack.c.b16 %v1388, %v1387
    %v1848 = vpack.c.b16 %v1390, %v1389
    %v1849 = vpack.c.b16 %v1392, %v1391
    %v1850 = vpack.c.b16 %v1394, %v1393
    %v1851 = vpack.c.b16 %v1396, %v1395
    %v1852 = vpack.c.b16 %v1398, %v1397
    %v1853 = vpack.c.b16 %v1400, %v1399
    %v1854 = vpack.c.b16 %v1402, %v1401
    %v1855 = vpack.c.b16 %v1404, %v1403
    %v1856 = vpack.c.b16 %v1406, %v1405
    %v1857 = vpack.c.b16 %v1408, %v1407
    %v1858 = vpack.c.b16 %v1410, %v1409
    %v1859 = vpack.c.b16 %v1412, %v1411
    %v1860 = vpack.c.b16 %v1414, %v1413
    %v1861 = vpack.c.b16 %v1416, %v1415
    %v1862 = vpack.c.b16 %v1418, %v1417
    %v1863 = vpack.c.b16 %v1420, %v1419
    %v1864 = vpack.c.b16 %v1422, %v1421
    %v1865 = vpack.c.b16 %v1424, %v1423
    %v1866 = vpack.c.b16 %v1426, %v1425
    %v1867 = vpack.c.b16 %v1428, %v1427
    %v1868 = vpack.c.b16 %v1430, %v1429
    %v1869 = vpack.c.b16 %v1432, %v1431
    %v1870 = vpack.c.b16 %v1434, %v1433
    %v1871 = vpack.c.b16 %v1436, %v1435
    %v1872 = vpack.c.b16 %v1438, %v1437
    %v1873 = vpack.c.b16 %v1440, %v1439
    %v1874 = vpack.c.b16 %v1442, %v1441
    %v1875 = vpack.c.b16 %v1444, %v1443
    %v1876 = vpack.c.b16 %v1446, %v1445
    %v1877 = vpack.c.b16 %v1448, %v1447
    %v1878 = vpack.c.b16 %v1450, %v1449
    %v1879 = vpack.c.b16 %v1452, %v1451
    %v1880 = vpack.c.b16 %v1454, %v1453
    %v1881 = vpack.c.b16 %v1456, %v1455
    %v1882 = vpack.c.b16 %v1458, %v1457
    %v1883 = vpack.c.b16 %v1460, %v1459
    %v1884 = vpack.c.b16 %v1462, %v1461
    %v1885 = vpack.c.b16 %v1464, %v1463
    %v1886 = vpack.c.b16 %v1466, %v1465
    %v1887 = vpack.c.b16 %v1468, %v1467
    %v1888 = vpack.c.b16 %v1470, %v1469
    %v1889 = vpack.c.b16 %v1472, %v1471
    %v1890 = vpack.c.b16 %v1474, %v1473
    %v1891 = vpack.c.b16 %v1476, %v1475
    %v1892 = vpack.c.b16 %v1478, %v1477
    %v1893 = vpack.c.b16 %v1480, %v1479
    %v1894 = vpack.c.b16 %v1482, %v1481
    %v1895 = vpack.c.b16 %v1484, %v1483
    %v1896 = vpack.c.b16 %v1486, %v1485
    %v1897 = vpack.c.b16 %v1488, %v1487
    %v1898 = vpack.c.b16 %v1490, %v1489
    %v1899 = vpack.c.b16 %v1492, %v1491
    %v1900 = vpack.c.b16 %v1494, %v1493
    %v1901 = vpack.c.b16 %v1496, %v1495
    %v1902 = vpack.c.b16 %v1498, %v1497
    %v1903 = vpack.c.b16 %v1500, %v1499
    %v1904 = vpack.c.b16 %v1502, %v1501
    %v1905 = vpack.c.b16 %v1504, %v1503
    %v1906 = vpack.c.b16 %v1506, %v1505
    %v1907 = vpack.c.b16 %v1508, %v1507
    %v1908 = vpack.c.b16 %v1510, %v1509
    %v1909 = vpack.c.b16 %v1512, %v1511
    %v1910 = vpack.c.b16 %v1514, %v1513
    %v1911 = vpack.c.b16 %v1516, %v1515
    %v1912 = vpack.c.b16 %v1518, %v1517
    %v1913 = vpack.c.b16 %v1520, %v1519
    %v1914 = vpack.c.b16 %v1522, %v1521
    %v1915 = vpack.c.b16 %v1524, %v1523
    %v1916 = vpack.c.b16 %v1526, %v1525
    %v1917 = vpack.c.b16 %v1528, %v1527
    %v1918 = vpack.c.b16 %v1530, %v1529
    %v1919 = vpack.c.b16 %v1532, %v1531
    %v1920 = vpack.c.b16 %v1534, %v1533
    %v1921 = vpack.c.b16 %v1536, %v1535
    %v1922 = vpack.c.b16 %v1538, %v1537
    %v1923 = vpack.c.b16 %v1540, %v1539
    %v1924 = vpack.c.b16 %v1542, %v1541
    %v1925 = vpack.c.b16 %v1544, %v1543
    %v1926 = vpack.c.b16 %v1546, %v1545
    %v1927 = vpack.c.b16 %v1548, %v1547
    %v1928 = vpack.c.b16 %v1550, %v1549
    %v1929 = vpack.c.b16 %v1552, %v1551
    %v1930 = vpack.c.b16 %v1554, %v1553
    %v1931 = vpack.c.b16 %v1556, %v1555
    %v1932 = vpack.c.b16 %v1558, %v1557
    %v1933 = vpack.c.b16 %v1560, %v1559
    %v1934 = vpack.c.b16 %v1562, %v1561
    %v1935 = vpack.c.b16 %v1564, %v1563
    %v1936 = vpack.c.b16 %v1566, %v1565
    %v1937 = vpack.c.b16 %v1568, %v1567
    %v1938 = vpack.c.b16 %v1570, %v1569
    %v1939 = vpack.c.b16 %v1572, %v1571
    %v1940 = vpack.c.b16 %v1574, %v1573
    %v1941 = vpack.c.b16 %v1576, %v1575
    %v1942 = vpack.c.b16 %v1578, %v1577
    %v1943 = vpack.c.b16 %v1580, %v1579
    %v1944 = vpack.c.b16 %v1582, %v1581
    %v1945 = vpack.c.b16 %v1584, %v1583
    %v1946 = vpack.c.b16 %v1586, %v1585
    %v1947 = vpack.c.b16 %v1588, %v1587
    %v1948 = vpack.c.b16 %v1590, %v1589
    %v1949 = vpack.c.b16 %v1592, %v1591
    %v1950 = vpack.c.b16 %v1594, %v1593
    %v1951 = vpack.c.b16 %v1596, %v1595
    %v1952 = vpack.c.b16 %v1598, %v1597
    %v1953 = vpack.c.b16 %v1600, %v1599
    %v1954 = vpack.c.b16 %v1602, %v1601
    %v1955 = vpack.c.b16 %v1604, %v1603
    %v1956 = vpack.c.b16 %v1606, %v1605
    %v1957 = vpack.c.b16 %v1608, %v1607
    %v1958 = vpack.c.b16 %v1610, %v1609
    %v1959 = vpack.c.b16 %v1612, %v1611
    %v1960 = vpack.c.b16 %v1614, %v1613
    %v1961 = vpack.c.b16 %v1616, %v1615
    %v1962 = vpack.c.b16 %v1618, %v1617
    %v1963 = vpack.c.b16 %v1620, %v1619
    %v1964 = vpack.c.b16 %v1622, %v1621
    %v1965 = vpack.c.b16 %v1624, %v1623
    %v1966 = vpack.c.b16 %v1626, %v1625
    %v1967 = vpack.c.b16 %v1628, %v1627
    %v1968 = vpack.c.b16 %v1630, %v1629
    %v1969 = vpack.c.b16 %v1632, %v1631
    %v1970 = vpack.c.b16 %v1634, %v1633
    %v1971 = vpack.c.b16 %v1636, %v1635
    %v1972 = vpack.c.b16 %v1638, %v1637
    %v1973 = vpack.c.b16 %v1640, %v1639
    %v1974 = vpack.c.b16 %v1642, %v1641
    %v1975 = vpack.c.b16 %v1644, %v1643
    %v1976 = vpack.c.b16 %v1646, %v1645
    %v1977 = vpack.c.b16 %v1648, %v1647
    %v1978 = vpack.c.b16 %v1650, %v1649
    %v1979 = vpack.c.b16 %v1652, %v1651
    %v1980 = vpack.c.b16 %v1654, %v1653
    %v1981 = vpack.c.b16 %v1656, %v1655
    %v1982 = vpack.c.b16 %v1658, %v1657
    %v1983 = vpack.c.b16 %v1660, %v1659
    %v1984 = vpack.c.b16 %v1662, %v1661
    %v1985 = vpack.c.b16 %v1664, %v1663
    %v1986 = vpack.c.b16 %v1666, %v1665
    %v1987 = vpack.c.b16 %v1668, %v1667
    %v1988 = vpack.c.b16 %v1670, %v1669
    %v1989 = vpack.c.b16 %v1672, %v1671
    %v1990 = vpack.c.b16 %v1674, %v1673
    %v1991 = vpack.c.b16 %v1676, %v1675
    %v1992 = vpack.c.b16 %v1678, %v1677
    %v1993 = vpack.c.b16 %v1680, %v1679
    %v1994 = vpack.c.b16 %v1682, %v1681
    %v1995 = vpack.c.b16 %v1684, %v1683
    %v1996 = vpack.c.b16 %v1686, %v1685
    %v1997 = vpack.c.b16 %v1688, %v1687
    %v1998 = vpack.c.b16 %v1690, %v1689
    %v1999 = vpack.c.b16 %v1692, %v1691
    %v2000 = vpack.c.b16 %v1694, %v1693
    %v2001 = vpack.c.b16 %v1696, %v1695
    %v2002 = vpack.c.b16 %v1698, %v1697
    %v2003 = vpack.c.b16 %v1700, %v1699
    %v2004 = vpack.c.b16 %v1702, %v1701
    %v2005 = vpack.c.b16 %v1704, %v1703
    %v2006 = vpack.c.b16 %v1706, %v1705
    %v2007 = vpack.c.b16 %v1708, %v1707
    %v2008 = vpack.c.b16 %v1710, %v1709
    %v2009 = vpack.c.b16 %v1712, %v1711
    %v2010 = vpack.c.b16 %v1714, %v1713
    %v2011 = vpack.c.b16 %v1716, %v1715
    %v2012 = vpack.c.b16 %v1718, %v1717
    %v2013 = vpack.c.b16 %v1720, %v1719
    %v2014 = vpack.c.b16 %v1722, %v1721
    %v2015 = vpack.c.b16 %v1724, %v1723
    %v2016 = vpack.c.b16 %v1726, %v1725
    %v2017 = vpack.c.b16 %v1728, %v1727
    %v2018 = vpack.c.b16 %v1730, %v1729
    %v2019 = vpack.c.b16 %v1732, %v1731
    %v2020 = vpack.c.b16 %v1734, %v1733
    %v2021 = vpack.c.b16 %v1736, %v1735
    %v2022 = vpack.c.b16 %v1738, %v1737
    %v2023 = vpack.c.b16 %v1740, %v1739
    %v2024 = vpack.c.b16 %v1742, %v1741
    %v2025 = vpack.c.b16 %v1744, %v1743
    %v2026 = vpack.c.b16 %v1746, %v1745
    %v2027 = vpack.c.b16 %v1748, %v1747
    %v2028 = vpack.c.b16 %v1750, %v1749
    %v2029 = vpack.c.b16 %v1752, %v1751
    %v2030 = vpack.c.b16 %v1754, %v1753
    %v2031 = vpack.c.b16 %v1756, %v1755
    %v2032 = vpack.c.b16 %v1758, %v1757
    %v2033 = vpack.c.b16 %v1760, %v1759
    %v2034 = vpack.c.b16 %v1762, %v1761
    %v2035 = vpack.c.b16 %v1764, %v1763
    %v2036 = vpack.c.b16 %v1766, %v1765
    %v2037 = vpack.c.b16 %v1768, %v1767
    %v2038 = vpack.c.b16 %v1770, %v1769
    %v2039 = vpack.c.b16 %v1772, %v1771
    %v2040 = vpack.c.b16 %v1774, %v1773
    %v2041 = vpack.c.b16 %v1776, %v1775
    %v2042 = vpack.c.b16 %v1778, %v1777
    %v2043 = vpack.c.b16 %v1780, %v1779
    %v2044 = vpack.c.b16 %v1782, %v1781
    %v2045 = vpack.c.b16 %v1784, %v1783
    %v2046 = vpack.c.b16 %v1786, %v1785
    %v2047 = vpack.c.b16 %v1788, %v1787
    %v2048 = vpack.c.b16 %v1790, %v1789
    %v2049 = vpack.c.b16 %v1792, %v1791
    %v2050 = vpack.c.b16 %v1794, %v1793
    %2307 = vmatprep.subr.bf16.mxu0 0
    %2308 = vmatpush1.bf16.msra.mxu0 %v1795
    %2309 = vmatprep.subr.bf16.mxu0 0
    %2310 = vmatpush1.bf16.msra.mxu0 %v1796
    %2311 = vmatprep.subr.bf16.mxu0 0
    %2312 = vmatpush1.bf16.msra.mxu0 %v1797
    %2313 = vmatprep.subr.bf16.mxu0 0
    %2314 = vmatpush1.bf16.msra.mxu0 %v1798
    %2315 = vmatprep.subr.bf16.mxu0 0
    %2316 = vmatpush1.bf16.msra.mxu0 %v1799
    %2317 = vmatprep.subr.bf16.mxu0 0
    %2318 = vmatpush1.bf16.msra.mxu0 %v1800
    %2319 = vmatprep.subr.bf16.mxu0 0
    %2320 = vmatpush1.bf16.msra.mxu0 %v1801
    %2321 = vmatprep.subr.bf16.mxu0 0
    %2322 = vmatpush1.bf16.msra.mxu0 %v1802
    %2323 = vmatprep.subr.bf16.mxu0 0
    %2324 = vmatpush1.bf16.msra.mxu0 %v1803
    %2325 = vmatprep.subr.bf16.mxu0 0
    %2326 = vmatpush1.bf16.msra.mxu0 %v1804
    %2327 = vmatprep.subr.bf16.mxu0 0
    %2328 = vmatpush1.bf16.msra.mxu0 %v1805
    %2329 = vmatprep.subr.bf16.mxu0 0
    %2330 = vmatpush1.bf16.msra.mxu0 %v1806
    %2331 = vmatprep.subr.bf16.mxu0 0
    %2332 = vmatpush1.bf16.msra.mxu0 %v1807
    %2333 = vmatprep.subr.bf16.mxu0 0
    %2334 = vmatpush1.bf16.msra.mxu0 %v1808
    %2335 = vmatprep.subr.bf16.mxu0 0
    %2336 = vmatpush1.bf16.msra.mxu0 %v1809
    %2337 = vmatprep.subr.bf16.mxu0 0
    %2338 = vmatpush1.bf16.msra.mxu0 %v1810
    %2339 = vmatprep.mubr.bf16.mxu0 %v580
    %2340 = vmatmul.mubr.bf16.gmra.mrb[0].mxu0 %v566
    %v2341 = vpop.f32.mrb[0].mxu0
    %v2342 = vadd.f32 %v537, %v2341
    %v2343 = vpop.f32.mrb[0].mxu0
    %v2344 = vpop.f32.mrb[0].mxu0
    %v2345 = vpop.f32.mrb[0].mxu0
    %2346 = vdwg.mxu0
    %2347 = vmatprep.subr.bf16.mxu0 0
    %2348 = vmatpush1.bf16.msra.mxu0 %v1811
    %2349 = vmatprep.subr.bf16.mxu0 0
    %2350 = vmatpush1.bf16.msra.mxu0 %v1812
    %2351 = vmatprep.subr.bf16.mxu0 0
    %2352 = vmatpush1.bf16.msra.mxu0 %v1813
    %2353 = vmatprep.subr.bf16.mxu0 0
    %2354 = vmatpush1.bf16.msra.mxu0 %v1814
    %2355 = vmatprep.subr.bf16.mxu0 0
    %2356 = vmatpush1.bf16.msra.mxu0 %v1815
    %2357 = vmatprep.subr.bf16.mxu0 0
    %2358 = vmatpush1.bf16.msra.mxu0 %v1816
    %2359 = vmatprep.subr.bf16.mxu0 0
    %2360 = vmatpush1.bf16.msra.mxu0 %v1817
    %2361 = vmatprep.subr.bf16.mxu0 0
    %2362 = vmatpush1.bf16.msra.mxu0 %v1818
    %2363 = vmatprep.subr.bf16.mxu0 0
    %2364 = vmatpush1.bf16.msra.mxu0 %v1819
    %2365 = vmatprep.subr.bf16.mxu0 0
    %2366 = vmatpush1.bf16.msra.mxu0 %v1820
    %2367 = vmatprep.subr.bf16.mxu0 0
    %2368 = vmatpush1.bf16.msra.mxu0 %v1821
    %2369 = vmatprep.subr.bf16.mxu0 0
    %2370 = vmatpush1.bf16.msra.mxu0 %v1822
    %2371 = vmatprep.subr.bf16.mxu0 0
    %2372 = vmatpush1.bf16.msra.mxu0 %v1823
    %2373 = vmatprep.subr.bf16.mxu0 0
    %2374 = vmatpush1.bf16.msra.mxu0 %v1824
    %2375 = vmatprep.subr.bf16.mxu0 0
    %2376 = vmatpush1.bf16.msra.mxu0 %v1825
    %2377 = vmatprep.subr.bf16.mxu0 0
    %2378 = vmatpush1.bf16.msra.mxu0 %v1826
    %2379 = vmatprep.mubr.bf16.mxu0 %v590
    %2380 = vmatmul.mubr.bf16.gmra.mrb[0].mxu0 %v588
    %v2381 = vpop.f32.mrb[0].mxu0
    %v2382 = vadd.f32 %v2342, %v2381
    %v2383 = vpop.f32.mrb[0].mxu0
    %v2384 = vpop.f32.mrb[0].mxu0
    %v2385 = vpop.f32.mrb[0].mxu0
    %2386 = vdwg.mxu0
    %2387 = vmatprep.subr.bf16.mxu0 0
    %2388 = vmatpush1.bf16.msra.mxu0 %v1827
    %2389 = vmatprep.subr.bf16.mxu0 0
    %2390 = vmatpush1.bf16.msra.mxu0 %v1828
    %2391 = vmatprep.subr.bf16.mxu0 0
    %2392 = vmatpush1.bf16.msra.mxu0 %v1829
    %2393 = vmatprep.subr.bf16.mxu0 0
    %2394 = vmatpush1.bf16.msra.mxu0 %v1830
    %2395 = vmatprep.subr.bf16.mxu0 0
    %2396 = vmatpush1.bf16.msra.mxu0 %v1831
    %2397 = vmatprep.subr.bf16.mxu0 0
    %2398 = vmatpush1.bf16.msra.mxu0 %v1832
    %2399 = vmatprep.subr.bf16.mxu0 0
    %2400 = vmatpush1.bf16.msra.mxu0 %v1833
    %2401 = vmatprep.subr.bf16.mxu0 0
    %2402 = vmatpush1.bf16.msra.mxu0 %v1834
    %2403 = vmatprep.subr.bf16.mxu0 0
    %2404 = vmatpush1.bf16.msra.mxu0 %v1835
    %2405 = vmatprep.subr.bf16.mxu0 0
    %2406 = vmatpush1.bf16.msra.mxu0 %v1836
    %2407 = vmatprep.subr.bf16.mxu0 0
    %2408 = vmatpush1.bf16.msra.mxu0 %v1837
    %2409 = vmatprep.subr.bf16.mxu0 0
    %2410 = vmatpush1.bf16.msra.mxu0 %v1838
    %2411 = vmatprep.subr.bf16.mxu0 0
    %2412 = vmatpush1.bf16.msra.mxu0 %v1839
    %2413 = vmatprep.subr.bf16.mxu0 0
    %2414 = vmatpush1.bf16.msra.mxu0 %v1840
    %2415 = vmatprep.subr.bf16.mxu0 0
    %2416 = vmatpush1.bf16.msra.mxu0 %v1841
    %2417 = vmatprep.subr.bf16.mxu0 0
    %2418 = vmatpush1.bf16.msra.mxu0 %v1842
    %2419 = vmatprep.mubr.bf16.mxu0 %v587
    %2420 = vmatmul.mubr.bf16.gmra.mrb[0].mxu0 %v573
    %v2421 = vpop.f32.mrb[0].mxu0
    %v2422 = vadd.f32 %v2382, %v2421
    %v2423 = vpop.f32.mrb[0].mxu0
    %v2424 = vpop.f32.mrb[0].mxu0
    %v2425 = vpop.f32.mrb[0].mxu0
    %2426 = vdwg.mxu0
    %2427 = vmatprep.subr.bf16.mxu0 0
    %2428 = vmatpush1.bf16.msra.mxu0 %v1843
    %2429 = vmatprep.subr.bf16.mxu0 0
    %2430 = vmatpush1.bf16.msra.mxu0 %v1844
    %2431 = vmatprep.subr.bf16.mxu0 0
    %2432 = vmatpush1.bf16.msra.mxu0 %v1845
    %2433 = vmatprep.subr.bf16.mxu0 0
    %2434 = vmatpush1.bf16.msra.mxu0 %v1846
    %2435 = vmatprep.subr.bf16.mxu0 0
    %2436 = vmatpush1.bf16.msra.mxu0 %v1847
    %2437 = vmatprep.subr.bf16.mxu0 0
    %2438 = vmatpush1.bf16.msra.mxu0 %v1848
    %2439 = vmatprep.subr.bf16.mxu0 0
    %2440 = vmatpush1.bf16.msra.mxu0 %v1849
    %2441 = vmatprep.subr.bf16.mxu0 0
    %2442 = vmatpush1.bf16.msra.mxu0 %v1850
    %2443 = vmatprep.subr.bf16.mxu0 0
    %2444 = vmatpush1.bf16.msra.mxu0 %v1851
    %2445 = vmatprep.subr.bf16.mxu0 0
    %2446 = vmatpush1.bf16.msra.mxu0 %v1852
    %2447 = vmatprep.subr.bf16.mxu0 0
    %2448 = vmatpush1.bf16.msra.mxu0 %v1853
    %2449 = vmatprep.subr.bf16.mxu0 0
    %2450 = vmatpush1.bf16.msra.mxu0 %v1854
    %2451 = vmatprep.subr.bf16.mxu0 0
    %2452 = vmatpush1.bf16.msra.mxu0 %v1855
    %2453 = vmatprep.subr.bf16.mxu0 0
    %2454 = vmatpush1.bf16.msra.mxu0 %v1856
    %2455 = vmatprep.subr.bf16.mxu0 0
    %2456 = vmatpush1.bf16.msra.mxu0 %v1857
    %2457 = vmatprep.subr.bf16.mxu0 0
    %2458 = vmatpush1.bf16.msra.mxu0 %v1858
    %2459 = vmatprep.mubr.bf16.mxu0 %v591
    %2460 = vmatmul.mubr.bf16.gmra.mrb[0].mxu0 %v589
    %v2461 = vpop.f32.mrb[0].mxu0
    %v2462 = vadd.f32 %v2422, %v2461
    %v2463 = vpop.f32.mrb[0].mxu0
    %v2464 = vpop.f32.mrb[0].mxu0
    %v2465 = vpop.f32.mrb[0].mxu0
    %2466 = vdwg.mxu0
    %2467 = vmatprep.subr.bf16.mxu0 0
    %2468 = vmatpush1.bf16.msra.mxu0 %v1859
    %2469 = vmatprep.subr.bf16.mxu0 0
    %2470 = vmatpush1.bf16.msra.mxu0 %v1860
    %2471 = vmatprep.subr.bf16.mxu0 0
    %2472 = vmatpush1.bf16.msra.mxu0 %v1861
    %2473 = vmatprep.subr.bf16.mxu0 0
    %2474 = vmatpush1.bf16.msra.mxu0 %v1862
    %2475 = vmatprep.subr.bf16.mxu0 0
    %2476 = vmatpush1.bf16.msra.mxu0 %v1863
    %2477 = vmatprep.subr.bf16.mxu0 0
    %2478 = vmatpush1.bf16.msra.mxu0 %v1864
    %2479 = vmatprep.subr.bf16.mxu0 0
    %2480 = vmatpush1.bf16.msra.mxu0 %v1865
    %2481 = vmatprep.subr.bf16.mxu0 0
    %2482 = vmatpush1.bf16.msra.mxu0 %v1866
    %2483 = vmatprep.subr.bf16.mxu0 0
    %2484 = vmatpush1.bf16.msra.mxu0 %v1867
    %2485 = vmatprep.subr.bf16.mxu0 0
    %2486 = vmatpush1.bf16.msra.mxu0 %v1868
    %2487 = vmatprep.subr.bf16.mxu0 0
    %2488 = vmatpush1.bf16.msra.mxu0 %v1869
    %2489 = vmatprep.subr.bf16.mxu0 0
    %2490 = vmatpush1.bf16.msra.mxu0 %v1870
    %2491 = vmatprep.subr.bf16.mxu0 0
    %2492 = vmatpush1.bf16.msra.mxu0 %v1871
    %2493 = vmatprep.subr.bf16.mxu0 0
    %2494 = vmatpush1.bf16.msra.mxu0 %v1872
    %2495 = vmatprep.subr.bf16.mxu0 0
    %2496 = vmatpush1.bf16.msra.mxu0 %v1873
    %2497 = vmatprep.subr.bf16.mxu0 0
    %2498 = vmatpush1.bf16.msra.mxu0 %v1874
    %2499 = vmatprep.mubr.bf16.mxu0 %v629
    %2500 = vmatmul.mubr.bf16.gmra.mrb[0].mxu0 %v615
    %v2501 = vpop.f32.mrb[0].mxu0
    %v2502 = vadd.f32 %v2462, %v2501
    %v2503 = vpop.f32.mrb[0].mxu0
    %v2504 = vpop.f32.mrb[0].mxu0
    %v2505 = vpop.f32.mrb[0].mxu0
    %2506 = vdwg.mxu0
    %2507 = vmatprep.subr.bf16.mxu0 0
    %2508 = vmatpush1.bf16.msra.mxu0 %v1875
    %2509 = vmatprep.subr.bf16.mxu0 0
    %2510 = vmatpush1.bf16.msra.mxu0 %v1876
    %2511 = vmatprep.subr.bf16.mxu0 0
    %2512 = vmatpush1.bf16.msra.mxu0 %v1877
    %2513 = vmatprep.subr.bf16.mxu0 0
    %2514 = vmatpush1.bf16.msra.mxu0 %v1878
    %2515 = vmatprep.subr.bf16.mxu0 0
    %2516 = vmatpush1.bf16.msra.mxu0 %v1879
    %2517 = vmatprep.subr.bf16.mxu0 0
    %2518 = vmatpush1.bf16.msra.mxu0 %v1880
    %2519 = vmatprep.subr.bf16.mxu0 0
    %2520 = vmatpush1.bf16.msra.mxu0 %v1881
    %2521 = vmatprep.subr.bf16.mxu0 0
    %2522 = vmatpush1.bf16.msra.mxu0 %v1882
    %2523 = vmatprep.subr.bf16.mxu0 0
    %2524 = vmatpush1.bf16.msra.mxu0 %v1883
    %2525 = vmatprep.subr.bf16.mxu0 0
    %2526 = vmatpush1.bf16.msra.mxu0 %v1884
    %2527 = vmatprep.subr.bf16.mxu0 0
    %2528 = vmatpush1.bf16.msra.mxu0 %v1885
    %2529 = vmatprep.subr.bf16.mxu0 0
    %2530 = vmatpush1.bf16.msra.mxu0 %v1886
    %2531 = vmatprep.subr.bf16.mxu0 0
    %2532 = vmatpush1.bf16.msra.mxu0 %v1887
    %2533 = vmatprep.subr.bf16.mxu0 0
    %2534 = vmatpush1.bf16.msra.mxu0 %v1888
    %2535 = vmatprep.subr.bf16.mxu0 0
    %2536 = vmatpush1.bf16.msra.mxu0 %v1889
    %2537 = vmatprep.subr.bf16.mxu0 0
    %2538 = vmatpush1.bf16.msra.mxu0 %v1890
    %2539 = vmatprep.mubr.bf16.mxu0 %v639
    %2540 = vmatmul.mubr.bf16.gmra.mrb[0].mxu0 %v637
    %v2541 = vpop.f32.mrb[0].mxu0
    %v2542 = vadd.f32 %v2502, %v2541
    %v2543 = vpop.f32.mrb[0].mxu0
    %v2544 = vpop.f32.mrb[0].mxu0
    %v2545 = vpop.f32.mrb[0].mxu0
    %2546 = vdwg.mxu0
    %2547 = vmatprep.subr.bf16.mxu0 0
    %2548 = vmatpush1.bf16.msra.mxu0 %v1891
    %2549 = vmatprep.subr.bf16.mxu0 0
    %2550 = vmatpush1.bf16.msra.mxu0 %v1892
    %2551 = vmatprep.subr.bf16.mxu0 0
    %2552 = vmatpush1.bf16.msra.mxu0 %v1893
    %2553 = vmatprep.subr.bf16.mxu0 0
    %2554 = vmatpush1.bf16.msra.mxu0 %v1894
    %2555 = vmatprep.subr.bf16.mxu0 0
    %2556 = vmatpush1.bf16.msra.mxu0 %v1895
    %2557 = vmatprep.subr.bf16.mxu0 0
    %2558 = vmatpush1.bf16.msra.mxu0 %v1896
    %2559 = vmatprep.subr.bf16.mxu0 0
    %2560 = vmatpush1.bf16.msra.mxu0 %v1897
    %2561 = vmatprep.subr.bf16.mxu0 0
    %2562 = vmatpush1.bf16.msra.mxu0 %v1898
    %2563 = vmatprep.subr.bf16.mxu0 0
    %2564 = vmatpush1.bf16.msra.mxu0 %v1899
    %2565 = vmatprep.subr.bf16.mxu0 0
    %2566 = vmatpush1.bf16.msra.mxu0 %v1900
    %2567 = vmatprep.subr.bf16.mxu0 0
    %2568 = vmatpush1.bf16.msra.mxu0 %v1901
    %2569 = vmatprep.subr.bf16.mxu0 0
    %2570 = vmatpush1.bf16.msra.mxu0 %v1902
    %2571 = vmatprep.subr.bf16.mxu0 0
    %2572 = vmatpush1.bf16.msra.mxu0 %v1903
    %2573 = vmatprep.subr.bf16.mxu0 0
    %2574 = vmatpush1.bf16.msra.mxu0 %v1904
    %2575 = vmatprep.subr.bf16.mxu0 0
    %2576 = vmatpush1.bf16.msra.mxu0 %v1905
    %2577 = vmatprep.subr.bf16.mxu0 0
    %2578 = vmatpush1.bf16.msra.mxu0 %v1906
    %2579 = vmatprep.mubr.bf16.mxu0 %v636
    %2580 = vmatmul.mubr.bf16.gmra.mrb[0].mxu0 %v622
    %v2581 = vpop.f32.mrb[0].mxu0
    %v2582 = vadd.f32 %v2542, %v2581
    %v2583 = vpop.f32.mrb[0].mxu0
    %v2584 = vpop.f32.mrb[0].mxu0
    %v2585 = vpop.f32.mrb[0].mxu0
    %2586 = vdwg.mxu0
    %2587 = vmatprep.subr.bf16.mxu0 0
    %2588 = vmatpush1.bf16.msra.mxu0 %v1907
    %2589 = vmatprep.subr.bf16.mxu0 0
    %2590 = vmatpush1.bf16.msra.mxu0 %v1908
    %2591 = vmatprep.subr.bf16.mxu0 0
    %2592 = vmatpush1.bf16.msra.mxu0 %v1909
    %2593 = vmatprep.subr.bf16.mxu0 0
    %2594 = vmatpush1.bf16.msra.mxu0 %v1910
    %2595 = vmatprep.subr.bf16.mxu0 0
    %2596 = vmatpush1.bf16.msra.mxu0 %v1911
    %2597 = vmatprep.subr.bf16.mxu0 0
    %2598 = vmatpush1.bf16.msra.mxu0 %v1912
    %2599 = vmatprep.subr.bf16.mxu0 0
    %2600 = vmatpush1.bf16.msra.mxu0 %v1913
    %2601 = vmatprep.subr.bf16.mxu0 0
    %2602 = vmatpush1.bf16.msra.mxu0 %v1914
    %2603 = vmatprep.subr.bf16.mxu0 0
    %2604 = vmatpush1.bf16.msra.mxu0 %v1915
    %2605 = vmatprep.subr.bf16.mxu0 0
    %2606 = vmatpush1.bf16.msra.mxu0 %v1916
    %2607 = vmatprep.subr.bf16.mxu0 0
    %2608 = vmatpush1.bf16.msra.mxu0 %v1917
    %2609 = vmatprep.subr.bf16.mxu0 0
    %2610 = vmatpush1.bf16.msra.mxu0 %v1918
    %2611 = vmatprep.subr.bf16.mxu0 0
    %2612 = vmatpush1.bf16.msra.mxu0 %v1919
    %2613 = vmatprep.subr.bf16.mxu0 0
    %2614 = vmatpush1.bf16.msra.mxu0 %v1920
    %2615 = vmatprep.subr.bf16.mxu0 0
    %2616 = vmatpush1.bf16.msra.mxu0 %v1921
    %2617 = vmatprep.subr.bf16.mxu0 0
    %2618 = vmatpush1.bf16.msra.mxu0 %v1922
    %2619 = vmatprep.mubr.bf16.mxu0 %v640
    %2620 = vmatmul.mubr.bf16.gmra.mrb[0].mxu0 %v638
    %v2621 = vpop.f32.mrb[0].mxu0
    %v2622 = vadd.f32 %v2582, %v2621
    %v2623 = vpop.f32.mrb[0].mxu0
    %v2624 = vpop.f32.mrb[0].mxu0
    %v2625 = vpop.f32.mrb[0].mxu0
    %2626 = vdwg.mxu0
    %2627 = vmatprep.subr.bf16.mxu0 0
    %2628 = vmatpush1.bf16.msra.mxu0 %v1923
    %2629 = vmatprep.subr.bf16.mxu0 0
    %2630 = vmatpush1.bf16.msra.mxu0 %v1924
    %2631 = vmatprep.subr.bf16.mxu0 0
    %2632 = vmatpush1.bf16.msra.mxu0 %v1925
    %2633 = vmatprep.subr.bf16.mxu0 0
    %2634 = vmatpush1.bf16.msra.mxu0 %v1926
    %2635 = vmatprep.subr.bf16.mxu0 0
    %2636 = vmatpush1.bf16.msra.mxu0 %v1927
    %2637 = vmatprep.subr.bf16.mxu0 0
    %2638 = vmatpush1.bf16.msra.mxu0 %v1928
    %2639 = vmatprep.subr.bf16.mxu0 0
    %2640 = vmatpush1.bf16.msra.mxu0 %v1929
    %2641 = vmatprep.subr.bf16.mxu0 0
    %2642 = vmatpush1.bf16.msra.mxu0 %v1930
    %2643 = vmatprep.subr.bf16.mxu0 0
    %2644 = vmatpush1.bf16.msra.mxu0 %v1931
    %2645 = vmatprep.subr.bf16.mxu0 0
    %2646 = vmatpush1.bf16.msra.mxu0 %v1932
    %2647 = vmatprep.subr.bf16.mxu0 0
    %2648 = vmatpush1.bf16.msra.mxu0 %v1933
    %2649 = vmatprep.subr.bf16.mxu0 0
    %2650 = vmatpush1.bf16.msra.mxu0 %v1934
    %2651 = vmatprep.subr.bf16.mxu0 0
    %2652 = vmatpush1.bf16.msra.mxu0 %v1935
    %2653 = vmatprep.subr.bf16.mxu0 0
    %2654 = vmatpush1.bf16.msra.mxu0 %v1936
    %2655 = vmatprep.subr.bf16.mxu0 0
    %2656 = vmatpush1.bf16.msra.mxu0 %v1937
    %2657 = vmatprep.subr.bf16.mxu0 0
    %2658 = vmatpush1.bf16.msra.mxu0 %v1938
    %2659 = vmatprep.mubr.bf16.mxu0 %v678
    %2660 = vmatmul.mubr.bf16.gmra.mrb[0].mxu0 %v664
    %v2661 = vpop.f32.mrb[0].mxu0
    %v2662 = vadd.f32 %v2622, %v2661
    %v2663 = vpop.f32.mrb[0].mxu0
    %v2664 = vpop.f32.mrb[0].mxu0
    %v2665 = vpop.f32.mrb[0].mxu0
    %2666 = vdwg.mxu0
    %2667 = vmatprep.subr.bf16.mxu0 0
    %2668 = vmatpush1.bf16.msra.mxu0 %v1939
    %2669 = vmatprep.subr.bf16.mxu0 0
    %2670 = vmatpush1.bf16.msra.mxu0 %v1940
    %2671 = vmatprep.subr.bf16.mxu0 0
    %2672 = vmatpush1.bf16.msra.mxu0 %v1941
    %2673 = vmatprep.subr.bf16.mxu0 0
    %2674 = vmatpush1.bf16.msra.mxu0 %v1942
    %2675 = vmatprep.subr.bf16.mxu0 0
    %2676 = vmatpush1.bf16.msra.mxu0 %v1943
    %2677 = vmatprep.subr.bf16.mxu0 0
    %2678 = vmatpush1.bf16.msra.mxu0 %v1944
    %2679 = vmatprep.subr.bf16.mxu0 0
    %2680 = vmatpush1.bf16.msra.mxu0 %v1945
    %2681 = vmatprep.subr.bf16.mxu0 0
    %2682 = vmatpush1.bf16.msra.mxu0 %v1946
    %2683 = vmatprep.subr.bf16.mxu0 0
    %2684 = vmatpush1.bf16.msra.mxu0 %v1947
    %2685 = vmatprep.subr.bf16.mxu0 0
    %2686 = vmatpush1.bf16.msra.mxu0 %v1948
    %2687 = vmatprep.subr.bf16.mxu0 0
    %2688 = vmatpush1.bf16.msra.mxu0 %v1949
    %2689 = vmatprep.subr.bf16.mxu0 0
    %2690 = vmatpush1.bf16.msra.mxu0 %v1950
    %2691 = vmatprep.subr.bf16.mxu0 0
    %2692 = vmatpush1.bf16.msra.mxu0 %v1951
    %2693 = vmatprep.subr.bf16.mxu0 0
    %2694 = vmatpush1.bf16.msra.mxu0 %v1952
    %2695 = vmatprep.subr.bf16.mxu0 0
    %2696 = vmatpush1.bf16.msra.mxu0 %v1953
    %2697 = vmatprep.subr.bf16.mxu0 0
    %2698 = vmatpush1.bf16.msra.mxu0 %v1954
    %2699 = vmatprep.mubr.bf16.mxu0 %v688
    %2700 = vmatmul.mubr.bf16.gmra.mrb[0].mxu0 %v686
    %v2701 = vpop.f32.mrb[0].mxu0
    %v2702 = vadd.f32 %v2662, %v2701
    %v2703 = vpop.f32.mrb[0].mxu0
    %v2704 = vpop.f32.mrb[0].mxu0
    %v2705 = vpop.f32.mrb[0].mxu0
    %2706 = vdwg.mxu0
    %2707 = vmatprep.subr.bf16.mxu0 0
    %2708 = vmatpush1.bf16.msra.mxu0 %v1955
    %2709 = vmatprep.subr.bf16.mxu0 0
    %2710 = vmatpush1.bf16.msra.mxu0 %v1956
    %2711 = vmatprep.subr.bf16.mxu0 0
    %2712 = vmatpush1.bf16.msra.mxu0 %v1957
    %2713 = vmatprep.subr.bf16.mxu0 0
    %2714 = vmatpush1.bf16.msra.mxu0 %v1958
    %2715 = vmatprep.subr.bf16.mxu0 0
    %2716 = vmatpush1.bf16.msra.mxu0 %v1959
    %2717 = vmatprep.subr.bf16.mxu0 0
    %2718 = vmatpush1.bf16.msra.mxu0 %v1960
    %2719 = vmatprep.subr.bf16.mxu0 0
    %2720 = vmatpush1.bf16.msra.mxu0 %v1961
    %2721 = vmatprep.subr.bf16.mxu0 0
    %2722 = vmatpush1.bf16.msra.mxu0 %v1962
    %2723 = vmatprep.subr.bf16.mxu0 0
    %2724 = vmatpush1.bf16.msra.mxu0 %v1963
    %2725 = vmatprep.subr.bf16.mxu0 0
    %2726 = vmatpush1.bf16.msra.mxu0 %v1964
    %2727 = vmatprep.subr.bf16.mxu0 0
    %2728 = vmatpush1.bf16.msra.mxu0 %v1965
    %2729 = vmatprep.subr.bf16.mxu0 0
    %2730 = vmatpush1.bf16.msra.mxu0 %v1966
    %2731 = vmatprep.subr.bf16.mxu0 0
    %2732 = vmatpush1.bf16.msra.mxu0 %v1967
    %2733 = vmatprep.subr.bf16.mxu0 0
    %2734 = vmatpush1.bf16.msra.mxu0 %v1968
    %2735 = vmatprep.subr.bf16.mxu0 0
    %2736 = vmatpush1.bf16.msra.mxu0 %v1969
    %2737 = vmatprep.subr.bf16.mxu0 0
    %2738 = vmatpush1.bf16.msra.mxu0 %v1970
    %2739 = vmatprep.mubr.bf16.mxu0 %v685
    %2740 = vmatmul.mubr.bf16.gmra.mrb[0].mxu0 %v671
    %v2741 = vpop.f32.mrb[0].mxu0
    %v2742 = vadd.f32 %v2702, %v2741
    %v2743 = vpop.f32.mrb[0].mxu0
    %v2744 = vpop.f32.mrb[0].mxu0
    %v2745 = vpop.f32.mrb[0].mxu0
    %2746 = vdwg.mxu0
    %2747 = vmatprep.subr.bf16.mxu0 0
    %2748 = vmatpush1.bf16.msra.mxu0 %v1971
    %2749 = vmatprep.subr.bf16.mxu0 0
    %2750 = vmatpush1.bf16.msra.mxu0 %v1972
    %2751 = vmatprep.subr.bf16.mxu0 0
    %2752 = vmatpush1.bf16.msra.mxu0 %v1973
    %2753 = vmatprep.subr.bf16.mxu0 0
    %2754 = vmatpush1.bf16.msra.mxu0 %v1974
    %2755 = vmatprep.subr.bf16.mxu0 0
    %2756 = vmatpush1.bf16.msra.mxu0 %v1975
    %2757 = vmatprep.subr.bf16.mxu0 0
    %2758 = vmatpush1.bf16.msra.mxu0 %v1976
    %2759 = vmatprep.subr.bf16.mxu0 0
    %2760 = vmatpush1.bf16.msra.mxu0 %v1977
    %2761 = vmatprep.subr.bf16.mxu0 0
    %2762 = vmatpush1.bf16.msra.mxu0 %v1978
    %2763 = vmatprep.subr.bf16.mxu0 0
    %2764 = vmatpush1.bf16.msra.mxu0 %v1979
    %2765 = vmatprep.subr.bf16.mxu0 0
    %2766 = vmatpush1.bf16.msra.mxu0 %v1980
    %2767 = vmatprep.subr.bf16.mxu0 0
    %2768 = vmatpush1.bf16.msra.mxu0 %v1981
    %2769 = vmatprep.subr.bf16.mxu0 0
    %2770 = vmatpush1.bf16.msra.mxu0 %v1982
    %2771 = vmatprep.subr.bf16.mxu0 0
    %2772 = vmatpush1.bf16.msra.mxu0 %v1983
    %2773 = vmatprep.subr.bf16.mxu0 0
    %2774 = vmatpush1.bf16.msra.mxu0 %v1984
    %2775 = vmatprep.subr.bf16.mxu0 0
    %2776 = vmatpush1.bf16.msra.mxu0 %v1985
    %2777 = vmatprep.subr.bf16.mxu0 0
    %2778 = vmatpush1.bf16.msra.mxu0 %v1986
    %2779 = vmatprep.mubr.bf16.mxu0 %v689
    %2780 = vmatmul.mubr.bf16.gmra.mrb[0].mxu0 %v687
    %v2781 = vpop.f32.mrb[0].mxu0
    %v2782 = vadd.f32 %v2742, %v2781
    %v2783 = vpop.f32.mrb[0].mxu0
    %v2784 = vpop.f32.mrb[0].mxu0
    %v2785 = vpop.f32.mrb[0].mxu0
    %2786 = vdwg.mxu0
    %2787 = vmatprep.subr.bf16.mxu0 0
    %2788 = vmatpush1.bf16.msra.mxu0 %v1987
    %2789 = vmatprep.subr.bf16.mxu0 0
    %2790 = vmatpush1.bf16.msra.mxu0 %v1988
    %2791 = vmatprep.subr.bf16.mxu0 0
    %2792 = vmatpush1.bf16.msra.mxu0 %v1989
    %2793 = vmatprep.subr.bf16.mxu0 0
    %2794 = vmatpush1.bf16.msra.mxu0 %v1990
    %2795 = vmatprep.subr.bf16.mxu0 0
    %2796 = vmatpush1.bf16.msra.mxu0 %v1991
    %2797 = vmatprep.subr.bf16.mxu0 0
    %2798 = vmatpush1.bf16.msra.mxu0 %v1992
    %2799 = vmatprep.subr.bf16.mxu0 0
    %2800 = vmatpush1.bf16.msra.mxu0 %v1993
    %2801 = vmatprep.subr.bf16.mxu0 0
    %2802 = vmatpush1.bf16.msra.mxu0 %v1994
    %2803 = vmatprep.subr.bf16.mxu0 0
    %2804 = vmatpush1.bf16.msra.mxu0 %v1995
    %2805 = vmatprep.subr.bf16.mxu0 0
    %2806 = vmatpush1.bf16.msra.mxu0 %v1996
    %2807 = vmatprep.subr.bf16.mxu0 0
    %2808 = vmatpush1.bf16.msra.mxu0 %v1997
    %2809 = vmatprep.subr.bf16.mxu0 0
    %2810 = vmatpush1.bf16.msra.mxu0 %v1998
    %2811 = vmatprep.subr.bf16.mxu0 0
    %2812 = vmatpush1.bf16.msra.mxu0 %v1999
    %2813 = vmatprep.subr.bf16.mxu0 0
    %2814 = vmatpush1.bf16.msra.mxu0 %v2000
    %2815 = vmatprep.subr.bf16.mxu0 0
    %2816 = vmatpush1.bf16.msra.mxu0 %v2001
    %2817 = vmatprep.subr.bf16.mxu0 0
    %2818 = vmatpush1.bf16.msra.mxu0 %v2002
    %2819 = vmatprep.mubr.bf16.mxu0 %v727
    %2820 = vmatmul.mubr.bf16.gmra.mrb[0].mxu0 %v713
    %v2821 = vpop.f32.mrb[0].mxu0
    %v2822 = vadd.f32 %v2782, %v2821
    %v2823 = vpop.f32.mrb[0].mxu0
    %v2824 = vpop.f32.mrb[0].mxu0
    %v2825 = vpop.f32.mrb[0].mxu0
    %2826 = vdwg.mxu0
    %2827 = vmatprep.subr.bf16.mxu0 0
    %2828 = vmatpush1.bf16.msra.mxu0 %v2003
    %2829 = vmatprep.subr.bf16.mxu0 0
    %2830 = vmatpush1.bf16.msra.mxu0 %v2004
    %2831 = vmatprep.subr.bf16.mxu0 0
    %2832 = vmatpush1.bf16.msra.mxu0 %v2005
    %2833 = vmatprep.subr.bf16.mxu0 0
    %2834 = vmatpush1.bf16.msra.mxu0 %v2006
    %2835 = vmatprep.subr.bf16.mxu0 0
    %2836 = vmatpush1.bf16.msra.mxu0 %v2007
    %2837 = vmatprep.subr.bf16.mxu0 0
    %2838 = vmatpush1.bf16.msra.mxu0 %v2008
    %2839 = vmatprep.subr.bf16.mxu0 0
    %2840 = vmatpush1.bf16.msra.mxu0 %v2009
    %2841 = vmatprep.subr.bf16.mxu0 0
    %2842 = vmatpush1.bf16.msra.mxu0 %v2010
    %2843 = vmatprep.subr.bf16.mxu0 0
    %2844 = vmatpush1.bf16.msra.mxu0 %v2011
    %2845 = vmatprep.subr.bf16.mxu0 0
    %2846 = vmatpush1.bf16.msra.mxu0 %v2012
    %2847 = vmatprep.subr.bf16.mxu0 0
    %2848 = vmatpush1.bf16.msra.mxu0 %v2013
    %2849 = vmatprep.subr.bf16.mxu0 0
    %2850 = vmatpush1.bf16.msra.mxu0 %v2014
    %2851 = vmatprep.subr.bf16.mxu0 0
    %2852 = vmatpush1.bf16.msra.mxu0 %v2015
    %2853 = vmatprep.subr.bf16.mxu0 0
    %2854 = vmatpush1.bf16.msra.mxu0 %v2016
    %2855 = vmatprep.subr.bf16.mxu0 0
    %2856 = vmatpush1.bf16.msra.mxu0 %v2017
    %2857 = vmatprep.subr.bf16.mxu0 0
    %2858 = vmatpush1.bf16.msra.mxu0 %v2018
    %2859 = vmatprep.mubr.bf16.mxu0 %v737
    %2860 = vmatmul.mubr.bf16.gmra.mrb[0].mxu0 %v735
    %v2861 = vpop.f32.mrb[0].mxu0
    %v2862 = vadd.f32 %v2822, %v2861
    %v2863 = vpop.f32.mrb[0].mxu0
    %v2864 = vpop.f32.mrb[0].mxu0
    %v2865 = vpop.f32.mrb[0].mxu0
    %2866 = vdwg.mxu0
    %2867 = vmatprep.subr.bf16.mxu0 0
    %2868 = vmatpush1.bf16.msra.mxu0 %v2019
    %2869 = vmatprep.subr.bf16.mxu0 0
    %2870 = vmatpush1.bf16.msra.mxu0 %v2020
    %2871 = vmatprep.subr.bf16.mxu0 0
    %2872 = vmatpush1.bf16.msra.mxu0 %v2021
    %2873 = vmatprep.subr.bf16.mxu0 0
    %2874 = vmatpush1.bf16.msra.mxu0 %v2022
    %2875 = vmatprep.subr.bf16.mxu0 0
    %2876 = vmatpush1.bf16.msra.mxu0 %v2023
    %2877 = vmatprep.subr.bf16.mxu0 0
    %2878 = vmatpush1.bf16.msra.mxu0 %v2024
    %2879 = vmatprep.subr.bf16.mxu0 0
    %2880 = vmatpush1.bf16.msra.mxu0 %v2025
    %2881 = vmatprep.subr.bf16.mxu0 0
    %2882 = vmatpush1.bf16.msra.mxu0 %v2026
    %2883 = vmatprep.subr.bf16.mxu0 0
    %2884 = vmatpush1.bf16.msra.mxu0 %v2027
    %2885 = vmatprep.subr.bf16.mxu0 0
    %2886 = vmatpush1.bf16.msra.mxu0 %v2028
    %2887 = vmatprep.subr.bf16.mxu0 0
    %2888 = vmatpush1.bf16.msra.mxu0 %v2029
    %2889 = vmatprep.subr.bf16.mxu0 0
    %2890 = vmatpush1.bf16.msra.mxu0 %v2030
    %2891 = vmatprep.subr.bf16.mxu0 0
    %2892 = vmatpush1.bf16.msra.mxu0 %v2031
    %2893 = vmatprep.subr.bf16.mxu0 0
    %2894 = vmatpush1.bf16.msra.mxu0 %v2032
    %2895 = vmatprep.subr.bf16.mxu0 0
    %2896 = vmatpush1.bf16.msra.mxu0 %v2033
    %2897 = vmatprep.subr.bf16.mxu0 0
    %2898 = vmatpush1.bf16.msra.mxu0 %v2034
    %2899 = vmatprep.mubr.bf16.mxu0 %v734
    %2900 = vmatmul.mubr.bf16.gmra.mrb[0].mxu0 %v720
    %v2901 = vpop.f32.mrb[0].mxu0
    %v2902 = vadd.f32 %v2862, %v2901
    %v2903 = vpop.f32.mrb[0].mxu0
    %v2904 = vpop.f32.mrb[0].mxu0
    %v2905 = vpop.f32.mrb[0].mxu0
    %2906 = vdwg.mxu0
    %2907 = vmatprep.subr.bf16.mxu0 0
    %2908 = vmatpush1.bf16.msra.mxu0 %v2035
    %2909 = vmatprep.subr.bf16.mxu0 0
    %2910 = vmatpush1.bf16.msra.mxu0 %v2036
    %2911 = vmatprep.subr.bf16.mxu0 0
    %2912 = vmatpush1.bf16.msra.mxu0 %v2037
    %2913 = vmatprep.subr.bf16.mxu0 0
    %2914 = vmatpush1.bf16.msra.mxu0 %v2038
    %2915 = vmatprep.subr.bf16.mxu0 0
    %2916 = vmatpush1.bf16.msra.mxu0 %v2039
    %2917 = vmatprep.subr.bf16.mxu0 0
    %2918 = vmatpush1.bf16.msra.mxu0 %v2040
    %2919 = vmatprep.subr.bf16.mxu0 0
    %2920 = vmatpush1.bf16.msra.mxu0 %v2041
    %2921 = vmatprep.subr.bf16.mxu0 0
    %2922 = vmatpush1.bf16.msra.mxu0 %v2042
    %2923 = vmatprep.subr.bf16.mxu0 0
    %2924 = vmatpush1.bf16.msra.mxu0 %v2043
    %2925 = vmatprep.subr.bf16.mxu0 0
    %2926 = vmatpush1.bf16.msra.mxu0 %v2044
    %2927 = vmatprep.subr.bf16.mxu0 0
    %2928 = vmatpush1.bf16.msra.mxu0 %v2045
    %2929 = vmatprep.subr.bf16.mxu0 0
    %2930 = vmatpush1.bf16.msra.mxu0 %v2046
    %2931 = vmatprep.subr.bf16.mxu0 0
    %2932 = vmatpush1.bf16.msra.mxu0 %v2047
    %2933 = vmatprep.subr.bf16.mxu0 0
    %2934 = vmatpush1.bf16.msra.mxu0 %v2048
    %2935 = vmatprep.subr.bf16.mxu0 0
    %2936 = vmatpush1.bf16.msra.mxu0 %v2049
    %2937 = vmatprep.subr.bf16.mxu0 0
    %2938 = vmatpush1.bf16.msra.mxu0 %v2050
    %2939 = vmatprep.mubr.bf16.mxu0 %v738
    %2940 = vmatmul.mubr.bf16.gmra.mrb[0].mxu0 %v736
    %v2941 = vpop.f32.mrb[0].mxu0
    %v2942 = vadd.f32 %v2902, %v2941
    %v2943 = vpop.f32.mrb[0].mxu0
    %v2944 = vpop.f32.mrb[0].mxu0
    %v2945 = vpop.f32.mrb[0].mxu0
    %2946 = vdwg.mxu0
    %vm2947 = vcmask 1041408
    %v2948 = vsel %vm2947, %v2942, -inf
    %2949 = vmax.xlane.f32.xlu0 %v2948
    %v2950 = vpop.xlane.xlu0 %2949
    %v2951 = vsub.f32 %v2942, %v2950
    %v2952 = vmul.f32 %v2951, 1.442695
    %v2953 = vpow.pop %v2952
    %v2954 = vsel %vm2947, %v2953, 0.0
    %2955 = vadd.xlane.f32.xlu0 %v2954
    %v2956 = vpop.xlane.xlu0 %2955
    %v2957 = vrcp.pop %v2956
    %v2958 = vmul.f32 %v2953, %v2957
    %2959 = vst [vmem:[#allocation2] sm:$0x3] %v2958
    // Predicated region
    $region14: #{cnn_forward.5} parent=1 // pred_check
      _
    $region15: #{cnn_forward.5} parent=1 // pred_check_branch
      %2961 = sbr.rel (0) target = $region17
    $region16: #{cnn_forward.5} parent=1 // pred_region
      %s2963 = ssub.s32 32, 32
      %2964 = vsyncadd [#allocation3], %s2963
      %s2966 = sshll.u32 [#allocation2], 4
      %s2967 = int_to_ptr.vmem [resolvable:$true] %s2966
      %2969 = dma.vmem_to_hbm [thread:$0]  %s2967, 32, %s3, [#allocation3]
    $region17: #{cnn_forward.5} parent=1 // pred_fallthru
      _
    // Predicated region
    $region18: #{cnn_forward.5} parent=1 // pred_check
      _
    $region19: #{cnn_forward.5} parent=1 // pred_check_branch
      %2971 = sbr.rel (0) target = $region21
    $region20: #{cnn_forward.5} parent=1 // pred_region
      %2972 = dma.done [#allocation3], 32
    $region21: #{cnn_forward.5} parent=1 // pred_fallthru
      _
    %2973 = vsyncpa [#allocation3], 1

</llo_original>
